<compile_context>
chip_gen: v5e
topology: v5e:2x2
jax: 0.10.0
libtpu: 0.0.40
codegen_flags: <defaults>
</compile_context>

<pallas_src>
import functools
import numpy as np

import jax
import jax.numpy as jnp
from jax import lax
from jax.experimental import pallas as pl
from jax.experimental.pallas import tpu as pltpu


# ------------------------------ fused kernel ---------------------------------

def _bilstm_fused_kernel(x_ref, wih0_ref, wihr_ref, whh_ref, b_ref, fcw_ref,
                         fcb_ref, len_ref, out_ref,
                         gi_ref, seq_ref, mask_ref,
                         *, num_layers, hidden_size, seq_len, batch_pad):
    H, T, Bp = hidden_size, seq_len, batch_pad
    H2, G = 2 * H, 8 * H                         # packed state / packed gates

    # ---- one-time precompute shared by all layers ----------------------------
    lens = len_ref[...]                                        # (Bp, 1) int32

    # Packed validity masks (T, Bp, 2H): fwd half keyed on t, bwd half keyed on
    # the reverse-time index T-1-t processed at loop step t.
    t_row = lax.broadcasted_iota(jnp.int32, (T, H2), 0)
    lane2 = lax.broadcasted_iota(jnp.int32, (T, H2), 1)
    t_eff = jnp.where(lane2 < H, t_row, (T - 1) - t_row)       # (T, 2H)
    mask_ref[...] = (lens[None, :, :] > t_eff[:, None, :]).astype(jnp.float32)

    # Column selector: inside each 2H-wide gate block, lanes [0,H) carry the
    # forward direction, [H,2H) the backward direction.
    lane_g = lax.broadcasted_iota(jnp.int32, (Bp, G), 1)
    col_is_fwd = (lane_g % H2) < H

    for layer in range(num_layers):                            # static unroll
        # ---- hoisted input projection: ONE matmul covers both directions ----
        if layer == 0:
            inp = x_ref[...].reshape(T * Bp, x_ref.shape[-1])  # (T*Bp, Dp)
            wih = wih0_ref[...]                                # (Dp, 8H) bf16
        else:
            inp = seq_ref[...].reshape(T * Bp, H2)             # (T*Bp, 2H)
            wih = wihr_ref[layer - 1]                          # (2H, 8H) bf16
        gi = jnp.dot(inp.astype(jnp.bfloat16), wih,
                     preferred_element_type=jnp.float32)
        gi = gi + b_ref[layer]                                 # folded b_ih + b_hh
        gi_ref[...] = gi.reshape(T, Bp, G)

        whh = whh_ref[layer]                                   # (2H, 8H) bf16

        # ---- time recurrence: fwd step t and bwd step T-1-t interleaved -----
        def step(t, carry):
            h, c = carry                                       # (Bp, 2H) f32
            tb = (T - 1) - t

            # Forward gate columns come from gi[t], backward ones from gi[tb].
            gsel = jnp.where(col_is_fwd, gi_ref[t], gi_ref[tb])
            gates = gsel + jnp.dot(h.astype(jnp.bfloat16), whh,
                                   preferred_element_type=jnp.float32)

            s = jax.nn.sigmoid(gates[:, :6 * H])               # [i | f | o] x dirs
            g = jnp.tanh(gates[:, 6 * H:])                     # [g] x dirs
            i_g = s[:, 0:H2]
            f_g = s[:, H2:2 * H2]
            o_g = s[:, 2 * H2:3 * H2]
            c_new = f_g * c + i_g * g
            h_new = o_g * jnp.tanh(c_new)

            m = mask_ref[t]                                    # (Bp, 2H) 0/1
            h = h + m * (h_new - h)                            # freeze if invalid
            c = c + m * (c_new - c)
            emit = m * h_new                                   # zero if invalid
            seq_ref[t, :, pl.ds(0, H)] = emit[:, :H]           # fwd half @ t
            seq_ref[tb, :, pl.ds(H, H)] = emit[:, H:]          # bwd half @ tb
            return h, c

        z = jnp.zeros((Bp, H2), jnp.float32)                   # h0 = c0 = 0
        lax.fori_loop(0, T, step, (z, z), unroll=min(T, 8))
        # TODO(synk): nn.LSTM inter-layer dropout(0.5) is training-only; identity in eval.
        # TODO(synk): on v7x the fwd/bwd chains could be split across the two
        # TensorCores (core_map / parallel grid axis) for ~2x on the recurrence.

    # ---- FC + sigmoid head on output[:, max(lengths)-1, :] -------------------
    y = seq_ref[T - 1]                                         # (Bp, 2H) [fwd|bwd]
    out_ref[...] = jax.nn.sigmoid(
        jnp.dot(y.astype(jnp.bfloat16), fcw_ref[...],
                preferred_element_type=jnp.float32) + fcb_ref[...])


# ------------------------------ host-side packing -----------------------------

def init_params(key, input_size, hidden_size, num_layers, output_size):
    params = {}
    k = 1.0 / np.sqrt(hidden_size)
    for l in range(num_layers):
        d_in = input_size if l == 0 else 2 * hidden_size
        for d in range(2):                                 # 0 = fwd, 1 = reverse
            key, k1, k2, k3, k4 = jax.random.split(key, 5)
            params[f"wih_{l}_{d}"] = jax.random.uniform(
                k1, (4 * hidden_size, d_in), jnp.float32, -k, k)
            params[f"whh_{l}_{d}"] = jax.random.uniform(
                k2, (4 * hidden_size, hidden_size), jnp.float32, -k, k)
            params[f"bih_{l}_{d}"] = jax.random.uniform(
                k3, (4 * hidden_size,), jnp.float32, -k, k)
            params[f"bhh_{l}_{d}"] = jax.random.uniform(
                k4, (4 * hidden_size,), jnp.float32, -k, k)
    key, k1, k2 = jax.random.split(key, 3)
    params["fc_w"] = jax.random.uniform(k1, (output_size, 2 * hidden_size),
                                        jnp.float32, -k, k)
    params["fc_b"] = jax.random.uniform(k2, (output_size,), jnp.float32, -k, k)
    return params


def pack_bilstm_params(params, input_size, hidden_size, num_layers, output_size):
    """One-time host-side repack into the kernel's bf16 packed-gate layout.

    Packed gate columns (width 8H): [i_f, i_b, f_f, f_b, o_f, o_b, g_f, g_b]
    so sigmoid covers the contiguous first 6H lanes and tanh the last 2H.
    """
    H, L, O, D = hidden_size, num_layers, output_size, input_size
    Dp = ((D + 7) // 8) * 8
    G = 8 * H
    gate_src = (0, 1, 3, 2)            # PyTorch rows [i, f, g, o] -> packed [i, f, o, g]

    wih0 = np.zeros((Dp, G), np.float32)
    wihr = np.zeros((max(L - 1, 1), 2 * H, G), np.float32)
    whh = np.zeros((L, 2 * H, G), np.float32)
    bias = np.zeros((L, 1, G), np.float32)

    for l in range(L):
        for d in range(2):
            w_ih = np.asarray(params[f"wih_{l}_{d}"])          # (4H, K_in)
            w_hh = np.asarray(params[f"whh_{l}_{d}"])          # (4H, H)
            b = (np.asarray(params[f"bih_{l}_{d}"])
                 + np.asarray(params[f"bhh_{l}_{d}"]))         # (4H,)
            for gpos, src in enumerate(gate_src):
                col = gpos * 2 * H + d * H
                rows = slice(src * H, (src + 1) * H)
                if l == 0:
                    wih0[:D, col:col + H] = w_ih[rows, :].T
                else:
                    wihr[l - 1, :, col:col + H] = w_ih[rows, :].T
                # block-diagonal by direction: h_f rows feed fwd cols, h_b rows bwd cols
                whh[l, d * H:(d + 1) * H, col:col + H] = w_hh[rows, :].T
                bias[l, 0, col:col + H] = b[rows]

    fcw = np.asarray(params["fc_w"]).T                         # (2H, O)
    fcb = np.asarray(params["fc_b"]).reshape(1, O)

    return dict(
        wih0=jnp.asarray(wih0, jnp.bfloat16),
        wihr=jnp.asarray(wihr, jnp.bfloat16),
        whh=jnp.asarray(whh, jnp.bfloat16),
        bias=jnp.asarray(bias, jnp.float32),
        fcw=jnp.asarray(fcw, jnp.bfloat16),
        fcb=jnp.asarray(fcb, jnp.float32),
    )


# ------------------------------ model wrapper ---------------------------------

def bilstm_forward(packed, x_bdt, lengths, hidden_size, num_layers, output_size):
    """Equivalent of BiLSTM.forward(x, lengths) in eval mode."""
    B, D, _ = x_bdt.shape
    H, L, O = hidden_size, num_layers, output_size

    # TODO(synk): lengths are consumed on the host (static max length), so this
    # wrapper is not jittable over `lengths`; a new max length retraces the kernel.
    lengths_np = np.asarray(lengths, np.int32)
    T = int(lengths_np.max())
    Bp = max(8, ((B + 7) // 8) * 8)                        # pad batch to sublanes
    Dp = packed["wih0"].shape[0]

    # time-major, batch-padded input slab: (T, Bp, Dp) -- features only padded to 8
    x = jnp.transpose(x_bdt[:, :, :T].astype(jnp.float32), (2, 0, 1))   # (T,B,D)
    x_pad = jnp.zeros((T, Bp, Dp), jnp.float32).at[:, :B, :D].set(x)

    lens_pad = np.zeros((Bp, 1), np.int32)
    lens_pad[:B, 0] = lengths_np                           # padded rows -> len 0

    kernel = functools.partial(_bilstm_fused_kernel, num_layers=L,
                               hidden_size=H, seq_len=T, batch_pad=Bp)

    # TODO(synk): for very long sequences, chunk the gi/seq scratch over time
    # blocks (scratch grows ~10 KiB/step) instead of materializing all T steps.
    out = pl.pallas_call(
        kernel,
        out_shape=jax.ShapeDtypeStruct((Bp, O), jnp.float32),
        scratch_shapes=[
            pltpu.VMEM((T, Bp, 8 * H), jnp.float32),       # packed gi, both dirs
            pltpu.VMEM((T, Bp, 2 * H), jnp.float32),       # layer output [fwd|bwd]
            pltpu.VMEM((T, Bp, 2 * H), jnp.float32),       # packed validity masks
        ],
        compiler_params=pltpu.CompilerParams(
            vmem_limit_bytes=32 * 1024 * 1024),
    )(x_pad, packed["wih0"], packed["wihr"], packed["whh"], packed["bias"],
      packed["fcw"], packed["fcb"], jnp.asarray(lens_pad))
    return out[:B]


# ------------------------------ pure-JAX reference ----------------------------

def bilstm_forward_ref(params, x_bdt, lengths, hidden_size, num_layers):
    B, D, _ = x_bdt.shape
    H = hidden_size
    lengths = np.asarray(lengths)
    T = int(lengths.max())
    seq = jnp.transpose(x_bdt[:, :, :T].astype(jnp.float32), (0, 2, 1))  # (B,T,D)
    for l in range(num_layers):
        outs_dirs = []
        for d in range(2):
            wih, whh = params[f"wih_{l}_{d}"], params[f"whh_{l}_{d}"]
            bih, bhh = params[f"bih_{l}_{d}"], params[f"bhh_{l}_{d}"]
            h = jnp.zeros((B, H), jnp.float32)
            c = jnp.zeros((B, H), jnp.float32)
            outs = [None] * T
            order = range(T) if d == 0 else range(T - 1, -1, -1)
            for t in order:
                g = seq[:, t, :] @ wih.T + bih + h @ whh.T + bhh
                i = jax.nn.sigmoid(g[:, :H])
                f = jax.nn.sigmoid(g[:, H:2 * H])
                gg = jnp.tanh(g[:, 2 * H:3 * H])
                o = jax.nn.sigmoid(g[:, 3 * H:])
                c_new = f * c + i * gg
                h_new = o * jnp.tanh(c_new)
                valid = jnp.asarray(lengths)[:, None] > t
                h = jnp.where(valid, h_new, h)
                c = jnp.where(valid, c_new, c)
                outs[t] = jnp.where(valid, h_new, 0.0)
            outs_dirs.append(jnp.stack(outs, axis=1))
        seq = jnp.concatenate(outs_dirs, axis=-1)          # (B, T, 2H)
    y_last = seq[:, T - 1, :]
    return jax.nn.sigmoid(y_last @ params["fc_w"].T + params["fc_b"])


# ----------------------------------- main --------------------------------------

if __name__ == "__main__":
    input_size, hidden_size, num_layers, output_size = 4, 32, 2, 3
    batch, seq_len = 2, 8

    key = jax.random.PRNGKey(0)
    key, pkey, xkey = jax.random.split(key, 3)
    params = init_params(pkey, input_size, hidden_size, num_layers, output_size)

    # pack weights ONCE (hoisted out of the per-call path)
    packed = pack_bilstm_params(params, input_size, hidden_size, num_layers,
                                output_size)

    # x matches the PyTorch call convention: (batch, input_size, seq_len)
    x = jax.random.normal(xkey, (batch, input_size, seq_len), jnp.float32)
    lengths = [8, 5]                                       # enforce_sorted=False OK

    out = bilstm_forward(packed, x, lengths, hidden_size, num_layers, output_size)
    out = jax.block_until_ready(out)

    ref = bilstm_forward_ref(params, x, lengths, hidden_size, num_layers)
    # Tolerance loosened vs a pure-f32 kernel: matmul operands are bf16
    # (MXU-native rate); accumulation and all gate/elementwise math stay f32.
    np.testing.assert_allclose(np.asarray(out), np.asarray(ref),
                               rtol=2e-2, atol=2e-2)

    assert out.shape == (batch, output_size)
    print("KERNEL_OK")
</pallas_src>

<mosaic_0001>
module attributes {stable_mosaic.version = 11 : i64} {
  func.func @_bilstm_fused_kernel(%arg0: memref<8x8x8xf32, #tpu.memory_space<vmem>>, %arg1: memref<8x256xbf16, #tpu.memory_space<vmem>>, %arg2: memref<1x64x256xbf16, #tpu.memory_space<vmem>>, %arg3: memref<2x64x256xbf16, #tpu.memory_space<vmem>>, %arg4: memref<2x1x256xf32, #tpu.memory_space<vmem>>, %arg5: memref<64x3xbf16, #tpu.memory_space<vmem>>, %arg6: memref<1x3xf32, #tpu.memory_space<vmem>>, %arg7: memref<8x1xi32, #tpu.memory_space<vmem>>, %arg8: memref<8x3xf32, #tpu.memory_space<vmem>>, %arg9: memref<8x8x256xf32, #tpu.memory_space<vmem>>, %arg10: memref<8x8x64xf32, #tpu.memory_space<vmem>>, %arg11: memref<8x8x64xf32, #tpu.memory_space<vmem>>) attributes {dimension_semantics = [], scalar_prefetch = 0 : i64, scratch_operands = 3 : i64, tpu.core_type = #tpu.core_type<tc>} {
    %c0 = arith.constant 0 : index
    %c0_0 = arith.constant 0 : index
    %0 = vector.load %arg7[%c0, %c0_0] : memref<8x1xi32, #tpu.memory_space<vmem>>, vector<8x1xi32>
    %1 = tpu.iota {dimensions = array<i32: 0>} : vector<8x64xi32>
    %2 = tpu.iota {dimensions = array<i32: 1>} : vector<8x64xi32>
    %c32_i32 = arith.constant 32 : i32
    %3 = vector.broadcast %c32_i32 : i32 to vector<8x64xi32>
    %4 = arith.cmpi slt, %2, %3 : vector<8x64xi32>
    %c7_i32 = arith.constant 7 : i32
    %5 = vector.broadcast %c7_i32 : i32 to vector<8x64xi32>
    %6 = arith.subi %5, %1 : vector<8x64xi32>
    %7 = arith.select %4, %1, %6 : vector<8x64xi1>, vector<8x64xi32>
    %8 = vector.shape_cast %0 : vector<8x1xi32> to vector<1x8x1xi32>
    %9 = vector.shape_cast %7 : vector<8x64xi32> to vector<8x1x64xi32>
    %10 = vector.broadcast %8 : vector<1x8x1xi32> to vector<8x8x64xi32>
    %11 = vector.broadcast %9 : vector<8x1x64xi32> to vector<8x8x64xi32>
    %12 = arith.cmpi sgt, %10, %11 : vector<8x8x64xi32>
    %13 = arith.extui %12 : vector<8x8x64xi1> to vector<8x8x64xi32>
    %14 = arith.sitofp %13 : vector<8x8x64xi32> to vector<8x8x64xf32>
    %c0_1 = arith.constant 0 : index
    %c0_2 = arith.constant 0 : index
    %c0_3 = arith.constant 0 : index
    %15 = vector.load %arg11[%c0_1, %c0_2, %c0_3] : memref<8x8x64xf32, #tpu.memory_space<vmem>>, vector<8x8x64xf32>
    tpu.vector_store %arg11[%c0_1, %c0_2, %c0_3], %14 {strides = array<i32>} : memref<8x8x64xf32, #tpu.memory_space<vmem>>, vector<8x8x64xf32>,
    %16 = tpu.iota {dimensions = array<i32: 1>} : vector<8x256xi32>
    %c64_i32 = arith.constant 64 : i32
    %c0_i32 = arith.constant 0 : i32
    %17 = arith.cmpi eq, %c64_i32, %c0_i32 : i32
    %c1_i32 = arith.constant 1 : i32
    %18 = arith.select %17, %c1_i32, %c64_i32 : i32
    %19 = vector.broadcast %18 : i32 to vector<8x256xi32>
    %20 = arith.remsi %16, %19 : vector<8x256xi32>
    %c0_i32_4 = arith.constant 0 : i32
    %21 = vector.broadcast %c0_i32_4 : i32 to vector<8x256xi32>
    %22 = arith.cmpi ne, %20, %21 : vector<8x256xi32>
    %c0_i32_5 = arith.constant 0 : i32
    %23 = vector.broadcast %c0_i32_5 : i32 to vector<8x256xi32>
    %24 = arith.cmpi slt, %20, %23 : vector<8x256xi32>
    %c0_i32_6 = arith.constant 0 : i32
    %25 = arith.cmpi slt, %18, %c0_i32_6 : i32
    %26 = vector.broadcast %25 : i1 to vector<8x256xi1>
    %27 = vector.broadcast %26 : vector<8x256xi1> to vector<8x256xi1>
    %28 = arith.xori %24, %27 : vector<8x256xi1>
    %29 = arith.andi %28, %22 : vector<8x256xi1>
    %30 = vector.broadcast %18 : i32 to vector<8x256xi32>
    %31 = arith.addi %20, %30 : vector<8x256xi32>
    %32 = arith.select %29, %31, %20 : vector<8x256xi1>, vector<8x256xi32>
    %c32_i32_7 = arith.constant 32 : i32
    %33 = vector.broadcast %c32_i32_7 : i32 to vector<8x256xi32>
    %34 = arith.cmpi slt, %32, %33 : vector<8x256xi32>
    %c0_8 = arith.constant 0 : index
    %c0_9 = arith.constant 0 : index
    %c0_10 = arith.constant 0 : index
    %35 = vector.load %arg0[%c0_8, %c0_9, %c0_10] : memref<8x8x8xf32, #tpu.memory_space<vmem>>, vector<8x8x8xf32>
    %36 = vector.shape_cast %35 : vector<8x8x8xf32> to vector<64x8xf32>
    %c0_11 = arith.constant 0 : index
    %c0_12 = arith.constant 0 : index
    %37 = vector.load %arg1[%c0_11, %c0_12] : memref<8x256xbf16, #tpu.memory_space<vmem>>, vector<8x256xbf16>
    %38 = arith.truncf %36 : vector<64x8xf32> to vector<64x8xbf16>
    %cst = arith.constant dense<0.000000e+00> : vector<64x256xf32>
    %39 = tpu.matmul %38, %37, %cst {dimension_numbers = #tpu.dot_dimension_numbers<[1], [0], [0], [1], [0, 0, 1, 1], [], []>} : vector<64x8xbf16>, vector<8x256xbf16>, vector<64x256xf32> -> vector<64x256xf32>
    %c0_13 = arith.constant 0 : index
    %c0_14 = arith.constant 0 : index
    %c0_15 = arith.constant 0 : index
    %40 = vector.load %arg4[%c0_13, %c0_14, %c0_15] : memref<2x1x256xf32, #tpu.memory_space<vmem>>, vector<1x1x256xf32>
    %41 = vector.shape_cast %40 : vector<1x1x256xf32> to vector<1x256xf32>
    %42 = vector.broadcast %41 : vector<1x256xf32> to vector<64x256xf32>
    %43 = arith.addf %39, %42 : vector<64x256xf32>
    %44 = vector.shape_cast %43 : vector<64x256xf32> to vector<8x8x256xf32>
    %c0_16 = arith.constant 0 : index
    %c0_17 = arith.constant 0 : index
    %c0_18 = arith.constant 0 : index
    %45 = vector.load %arg9[%c0_16, %c0_17, %c0_18] : memref<8x8x256xf32, #tpu.memory_space<vmem>>, vector<8x8x256xf32>
    tpu.vector_store %arg9[%c0_16, %c0_17, %c0_18], %44 {strides = array<i32>} : memref<8x8x256xf32, #tpu.memory_space<vmem>>, vector<8x8x256xf32>,
    %c0_19 = arith.constant 0 : index
    %c0_20 = arith.constant 0 : index
    %c0_21 = arith.constant 0 : index
    %46 = vector.load %arg3[%c0_19, %c0_20, %c0_21] : memref<2x64x256xbf16, #tpu.memory_space<vmem>>, vector<1x64x256xbf16>
    %47 = vector.shape_cast %46 : vector<1x64x256xbf16> to vector<64x256xbf16>
    %cst_22 = arith.constant 0.000000e+00 : f32
    %48 = vector.broadcast %cst_22 : f32 to vector<8x64xf32>
    %c0_i32_23 = arith.constant 0 : i32
    %c7_i32_24 = arith.constant 7 : i32
    %49 = arith.subi %c7_i32_24, %c0_i32_23 : i32
    %50 = arith.index_cast %c0_i32_23 : i32 to index
    %c0_25 = arith.constant 0 : index
    %c0_26 = arith.constant 0 : index
    %51 = vector.load %arg9[%50, %c0_25, %c0_26] : memref<8x8x256xf32, #tpu.memory_space<vmem>>, vector<1x8x256xf32>
    %52 = vector.shape_cast %51 : vector<1x8x256xf32> to vector<8x256xf32>
    %53 = arith.index_cast %49 : i32 to index
    %c0_27 = arith.constant 0 : index
    %c0_28 = arith.constant 0 : index
    %54 = vector.load %arg9[%53, %c0_27, %c0_28] : memref<8x8x256xf32, #tpu.memory_space<vmem>>, vector<1x8x256xf32>
    %55 = vector.shape_cast %54 : vector<1x8x256xf32> to vector<8x256xf32>
    %56 = arith.select %34, %52, %55 : vector<8x256xi1>, vector<8x256xf32>
    %57 = arith.truncf %48 : vector<8x64xf32> to vector<8x64xbf16>
    %cst_29 = arith.constant dense<0.000000e+00> : vector<8x256xf32>
    %58 = tpu.matmul %57, %47, %cst_29 {dimension_numbers = #tpu.dot_dimension_numbers<[1], [0], [0], [1], [0, 0, 1, 1], [], []>} : vector<8x64xbf16>, vector<64x256xbf16>, vector<8x256xf32> -> vector<8x256xf32>
    %59 = arith.addf %56, %58 : vector<8x256xf32>
    %60 = vector.extract_strided_slice %59 {offsets = [0, 0], sizes = [8, 192], strides = [1, 1]} : vector<8x256xf32> to vector<8x192xf32>
    %61 = arith.negf %60 : vector<8x192xf32>
    %62 = math.exp %61 : vector<8x192xf32>
    %cst_30 = arith.constant 1.000000e+00 : f32
    %63 = vector.broadcast %cst_30 : f32 to vector<8x192xf32>
    %64 = arith.addf %63, %62 : vector<8x192xf32>
    %65 = arith.divf %63, %64 : vector<8x192xf32>
    %66 = vector.extract_strided_slice %59 {offsets = [0, 192], sizes = [8, 64], strides = [1, 1]} : vector<8x256xf32> to vector<8x64xf32>
    %67 = math.tanh %66 : vector<8x64xf32>
    %68 = vector.extract_strided_slice %65 {offsets = [0, 0], sizes = [8, 64], strides = [1, 1]} : vector<8x192xf32> to vector<8x64xf32>
    %69 = vector.extract_strided_slice %65 {offsets = [0, 64], sizes = [8, 64], strides = [1, 1]} : vector<8x192xf32> to vector<8x64xf32>
    %70 = vector.extract_strided_slice %65 {offsets = [0, 128], sizes = [8, 64], strides = [1, 1]} : vector<8x192xf32> to vector<8x64xf32>
    %71 = arith.mulf %69, %48 : vector<8x64xf32>
    %72 = arith.mulf %68, %67 : vector<8x64xf32>
    %73 = arith.addf %71, %72 : vector<8x64xf32>
    %74 = math.tanh %73 : vector<8x64xf32>
    %75 = arith.mulf %70, %74 : vector<8x64xf32>
    %76 = arith.index_cast %c0_i32_23 : i32 to index
    %c0_31 = arith.constant 0 : index
    %c0_32 = arith.constant 0 : index
    %77 = vector.load %arg11[%76, %c0_31, %c0_32] : memref<8x8x64xf32, #tpu.memory_space<vmem>>, vector<1x8x64xf32>
    %78 = vector.shape_cast %77 : vector<1x8x64xf32> to vector<8x64xf32>
    %79 = arith.subf %75, %48 : vector<8x64xf32>
    %80 = arith.mulf %78, %79 : vector<8x64xf32>
    %81 = arith.addf %48, %80 : vector<8x64xf32>
    %82 = arith.subf %73, %48 : vector<8x64xf32>
    %83 = arith.mulf %78, %82 : vector<8x64xf32>
    %84 = arith.addf %48, %83 : vector<8x64xf32>
    %85 = arith.mulf %78, %75 : vector<8x64xf32>
    %86 = vector.extract_strided_slice %85 {offsets = [0, 0], sizes = [8, 32], strides = [1, 1]} : vector<8x64xf32> to vector<8x32xf32>
    %87 = arith.index_cast %c0_i32_23 : i32 to index
    %c0_33 = arith.constant 0 : index
    %c0_34 = arith.constant 0 : index
    %88 = vector.load %arg10[%87, %c0_33, %c0_34] : memref<8x8x64xf32, #tpu.memory_space<vmem>>, vector<1x8x32xf32>
    %89 = vector.shape_cast %88 : vector<1x8x32xf32> to vector<8x32xf32>
    %90 = vector.shape_cast %86 : vector<8x32xf32> to vector<1x8x32xf32>
    tpu.vector_store %arg10[%87, %c0_33, %c0_34], %90 {strides = array<i32>} : memref<8x8x64xf32, #tpu.memory_space<vmem>>, vector<1x8x32xf32>,
    %91 = vector.extract_strided_slice %85 {offsets = [0, 32], sizes = [8, 32], strides = [1, 1]} : vector<8x64xf32> to vector<8x32xf32>
    %92 = arith.index_cast %49 : i32 to index
    %c0_35 = arith.constant 0 : index
    %c32 = arith.constant 32 : index
    %93 = vector.load %arg10[%92, %c0_35, %c32] : memref<8x8x64xf32, #tpu.memory_space<vmem>>, vector<1x8x32xf32>
    %94 = vector.shape_cast %93 : vector<1x8x32xf32> to vector<8x32xf32>
    %95 = vector.shape_cast %91 : vector<8x32xf32> to vector<1x8x32xf32>
    tpu.vector_store %arg10[%92, %c0_35, %c32], %95 {strides = array<i32>} : memref<8x8x64xf32, #tpu.memory_space<vmem>>, vector<1x8x32xf32>,
    %c1_i32_36 = arith.constant 1 : i32
    %c7_i32_37 = arith.constant 7 : i32
    %96 = arith.subi %c7_i32_37, %c1_i32_36 : i32
    %97 = arith.index_cast %c1_i32_36 : i32 to index
    %c0_38 = arith.constant 0 : index
    %c0_39 = arith.constant 0 : index
    %98 = vector.load %arg9[%97, %c0_38, %c0_39] : memref<8x8x256xf32, #tpu.memory_space<vmem>>, vector<1x8x256xf32>
    %99 = vector.shape_cast %98 : vector<1x8x256xf32> to vector<8x256xf32>
    %100 = arith.index_cast %96 : i32 to index
    %c0_40 = arith.constant 0 : index
    %c0_41 = arith.constant 0 : index
    %101 = vector.load %arg9[%100, %c0_40, %c0_41] : memref<8x8x256xf32, #tpu.memory_space<vmem>>, vector<1x8x256xf32>
    %102 = vector.shape_cast %101 : vector<1x8x256xf32> to vector<8x256xf32>
    %103 = arith.select %34, %99, %102 : vector<8x256xi1>, vector<8x256xf32>
    %104 = arith.truncf %81 : vector<8x64xf32> to vector<8x64xbf16>
    %cst_42 = arith.constant dense<0.000000e+00> : vector<8x256xf32>
    %105 = tpu.matmul %104, %47, %cst_42 {dimension_numbers = #tpu.dot_dimension_numbers<[1], [0], [0], [1], [0, 0, 1, 1], [], []>} : vector<8x64xbf16>, vector<64x256xbf16>, vector<8x256xf32> -> vector<8x256xf32>
    %106 = arith.addf %103, %105 : vector<8x256xf32>
    %107 = vector.extract_strided_slice %106 {offsets = [0, 0], sizes = [8, 192], strides = [1, 1]} : vector<8x256xf32> to vector<8x192xf32>
    %108 = arith.negf %107 : vector<8x192xf32>
    %109 = math.exp %108 : vector<8x192xf32>
    %cst_43 = arith.constant 1.000000e+00 : f32
    %110 = vector.broadcast %cst_43 : f32 to vector<8x192xf32>
    %111 = arith.addf %110, %109 : vector<8x192xf32>
    %112 = arith.divf %110, %111 : vector<8x192xf32>
    %113 = vector.extract_strided_slice %106 {offsets = [0, 192], sizes = [8, 64], strides = [1, 1]} : vector<8x256xf32> to vector<8x64xf32>
    %114 = math.tanh %113 : vector<8x64xf32>
    %115 = vector.extract_strided_slice %112 {offsets = [0, 0], sizes = [8, 64], strides = [1, 1]} : vector<8x192xf32> to vector<8x64xf32>
    %116 = vector.extract_strided_slice %112 {offsets = [0, 64], sizes = [8, 64], strides = [1, 1]} : vector<8x192xf32> to vector<8x64xf32>
    %117 = vector.extract_strided_slice %112 {offsets = [0, 128], sizes = [8, 64], strides = [1, 1]} : vector<8x192xf32> to vector<8x64xf32>
    %118 = arith.mulf %116, %84 : vector<8x64xf32>
    %119 = arith.mulf %115, %114 : vector<8x64xf32>
    %120 = arith.addf %118, %119 : vector<8x64xf32>
    %121 = math.tanh %120 : vector<8x64xf32>
    %122 = arith.mulf %117, %121 : vector<8x64xf32>
    %123 = arith.index_cast %c1_i32_36 : i32 to index
    %c0_44 = arith.constant 0 : index
    %c0_45 = arith.constant 0 : index
    %124 = vector.load %arg11[%123, %c0_44, %c0_45] : memref<8x8x64xf32, #tpu.memory_space<vmem>>, vector<1x8x64xf32>
    %125 = vector.shape_cast %124 : vector<1x8x64xf32> to vector<8x64xf32>
    %126 = arith.subf %122, %81 : vector<8x64xf32>
    %127 = arith.mulf %125, %126 : vector<8x64xf32>
    %128 = arith.addf %81, %127 : vector<8x64xf32>
    %129 = arith.subf %120, %84 : vector<8x64xf32>
    %130 = arith.mulf %125, %129 : vector<8x64xf32>
    %131 = arith.addf %84, %130 : vector<8x64xf32>
    %132 = arith.mulf %125, %122 : vector<8x64xf32>
    %133 = vector.extract_strided_slice %132 {offsets = [0, 0], sizes = [8, 32], strides = [1, 1]} : vector<8x64xf32> to vector<8x32xf32>
    %134 = arith.index_cast %c1_i32_36 : i32 to index
    %c0_46 = arith.constant 0 : index
    %c0_47 = arith.constant 0 : index
    %135 = vector.load %arg10[%134, %c0_46, %c0_47] : memref<8x8x64xf32, #tpu.memory_space<vmem>>, vector<1x8x32xf32>
    %136 = vector.shape_cast %135 : vector<1x8x32xf32> to vector<8x32xf32>
    %137 = vector.shape_cast %133 : vector<8x32xf32> to vector<1x8x32xf32>
    tpu.vector_store %arg10[%134, %c0_46, %c0_47], %137 {strides = array<i32>} : memref<8x8x64xf32, #tpu.memory_space<vmem>>, vector<1x8x32xf32>,
    %138 = vector.extract_strided_slice %132 {offsets = [0, 32], sizes = [8, 32], strides = [1, 1]} : vector<8x64xf32> to vector<8x32xf32>
    %139 = arith.index_cast %96 : i32 to index
    %c0_48 = arith.constant 0 : index
    %c32_49 = arith.constant 32 : index
    %140 = vector.load %arg10[%139, %c0_48, %c32_49] : memref<8x8x64xf32, #tpu.memory_space<vmem>>, vector<1x8x32xf32>
    %141 = vector.shape_cast %140 : vector<1x8x32xf32> to vector<8x32xf32>
    %142 = vector.shape_cast %138 : vector<8x32xf32> to vector<1x8x32xf32>
    tpu.vector_store %arg10[%139, %c0_48, %c32_49], %142 {strides = array<i32>} : memref<8x8x64xf32, #tpu.memory_space<vmem>>, vector<1x8x32xf32>,
    %c2_i32 = arith.constant 2 : i32
    %c7_i32_50 = arith.constant 7 : i32
    %143 = arith.subi %c7_i32_50, %c2_i32 : i32
    %144 = arith.index_cast %c2_i32 : i32 to index
    %c0_51 = arith.constant 0 : index
    %c0_52 = arith.constant 0 : index
    %145 = vector.load %arg9[%144, %c0_51, %c0_52] : memref<8x8x256xf32, #tpu.memory_space<vmem>>, vector<1x8x256xf32>
    %146 = vector.shape_cast %145 : vector<1x8x256xf32> to vector<8x256xf32>
    %147 = arith.index_cast %143 : i32 to index
    %c0_53 = arith.constant 0 : index
    %c0_54 = arith.constant 0 : index
    %148 = vector.load %arg9[%147, %c0_53, %c0_54] : memref<8x8x256xf32, #tpu.memory_space<vmem>>, vector<1x8x256xf32>
    %149 = vector.shape_cast %148 : vector<1x8x256xf32> to vector<8x256xf32>
    %150 = arith.select %34, %146, %149 : vector<8x256xi1>, vector<8x256xf32>
    %151 = arith.truncf %128 : vector<8x64xf32> to vector<8x64xbf16>
    %cst_55 = arith.constant dense<0.000000e+00> : vector<8x256xf32>
    %152 = tpu.matmul %151, %47, %cst_55 {dimension_numbers = #tpu.dot_dimension_numbers<[1], [0], [0], [1], [0, 0, 1, 1], [], []>} : vector<8x64xbf16>, vector<64x256xbf16>, vector<8x256xf32> -> vector<8x256xf32>
    %153 = arith.addf %150, %152 : vector<8x256xf32>
    %154 = vector.extract_strided_slice %153 {offsets = [0, 0], sizes = [8, 192], strides = [1, 1]} : vector<8x256xf32> to vector<8x192xf32>
    %155 = arith.negf %154 : vector<8x192xf32>
    %156 = math.exp %155 : vector<8x192xf32>
    %cst_56 = arith.constant 1.000000e+00 : f32
    %157 = vector.broadcast %cst_56 : f32 to vector<8x192xf32>
    %158 = arith.addf %157, %156 : vector<8x192xf32>
    %159 = arith.divf %157, %158 : vector<8x192xf32>
    %160 = vector.extract_strided_slice %153 {offsets = [0, 192], sizes = [8, 64], strides = [1, 1]} : vector<8x256xf32> to vector<8x64xf32>
    %161 = math.tanh %160 : vector<8x64xf32>
    %162 = vector.extract_strided_slice %159 {offsets = [0, 0], sizes = [8, 64], strides = [1, 1]} : vector<8x192xf32> to vector<8x64xf32>
    %163 = vector.extract_strided_slice %159 {offsets = [0, 64], sizes = [8, 64], strides = [1, 1]} : vector<8x192xf32> to vector<8x64xf32>
    %164 = vector.extract_strided_slice %159 {offsets = [0, 128], sizes = [8, 64], strides = [1, 1]} : vector<8x192xf32> to vector<8x64xf32>
    %165 = arith.mulf %163, %131 : vector<8x64xf32>
    %166 = arith.mulf %162, %161 : vector<8x64xf32>
    %167 = arith.addf %165, %166 : vector<8x64xf32>
    %168 = math.tanh %167 : vector<8x64xf32>
    %169 = arith.mulf %164, %168 : vector<8x64xf32>
    %170 = arith.index_cast %c2_i32 : i32 to index
    %c0_57 = arith.constant 0 : index
    %c0_58 = arith.constant 0 : index
    %171 = vector.load %arg11[%170, %c0_57, %c0_58] : memref<8x8x64xf32, #tpu.memory_space<vmem>>, vector<1x8x64xf32>
    %172 = vector.shape_cast %171 : vector<1x8x64xf32> to vector<8x64xf32>
    %173 = arith.subf %169, %128 : vector<8x64xf32>
    %174 = arith.mulf %172, %173 : vector<8x64xf32>
    %175 = arith.addf %128, %174 : vector<8x64xf32>
    %176 = arith.subf %167, %131 : vector<8x64xf32>
    %177 = arith.mulf %172, %176 : vector<8x64xf32>
    %178 = arith.addf %131, %177 : vector<8x64xf32>
    %179 = arith.mulf %172, %169 : vector<8x64xf32>
    %180 = vector.extract_strided_slice %179 {offsets = [0, 0], sizes = [8, 32], strides = [1, 1]} : vector<8x64xf32> to vector<8x32xf32>
    %181 = arith.index_cast %c2_i32 : i32 to index
    %c0_59 = arith.constant 0 : index
    %c0_60 = arith.constant 0 : index
    %182 = vector.load %arg10[%181, %c0_59, %c0_60] : memref<8x8x64xf32, #tpu.memory_space<vmem>>, vector<1x8x32xf32>
    %183 = vector.shape_cast %182 : vector<1x8x32xf32> to vector<8x32xf32>
    %184 = vector.shape_cast %180 : vector<8x32xf32> to vector<1x8x32xf32>
    tpu.vector_store %arg10[%181, %c0_59, %c0_60], %184 {strides = array<i32>} : memref<8x8x64xf32, #tpu.memory_space<vmem>>, vector<1x8x32xf32>,
    %185 = vector.extract_strided_slice %179 {offsets = [0, 32], sizes = [8, 32], strides = [1, 1]} : vector<8x64xf32> to vector<8x32xf32>
    %186 = arith.index_cast %143 : i32 to index
    %c0_61 = arith.constant 0 : index
    %c32_62 = arith.constant 32 : index
    %187 = vector.load %arg10[%186, %c0_61, %c32_62] : memref<8x8x64xf32, #tpu.memory_space<vmem>>, vector<1x8x32xf32>
    %188 = vector.shape_cast %187 : vector<1x8x32xf32> to vector<8x32xf32>
    %189 = vector.shape_cast %185 : vector<8x32xf32> to vector<1x8x32xf32>
    tpu.vector_store %arg10[%186, %c0_61, %c32_62], %189 {strides = array<i32>} : memref<8x8x64xf32, #tpu.memory_space<vmem>>, vector<1x8x32xf32>,
    %c3_i32 = arith.constant 3 : i32
    %c7_i32_63 = arith.constant 7 : i32
    %190 = arith.subi %c7_i32_63, %c3_i32 : i32
    %191 = arith.index_cast %c3_i32 : i32 to index
    %c0_64 = arith.constant 0 : index
    %c0_65 = arith.constant 0 : index
    %192 = vector.load %arg9[%191, %c0_64, %c0_65] : memref<8x8x256xf32, #tpu.memory_space<vmem>>, vector<1x8x256xf32>
    %193 = vector.shape_cast %192 : vector<1x8x256xf32> to vector<8x256xf32>
    %194 = arith.index_cast %190 : i32 to index
    %c0_66 = arith.constant 0 : index
    %c0_67 = arith.constant 0 : index
    %195 = vector.load %arg9[%194, %c0_66, %c0_67] : memref<8x8x256xf32, #tpu.memory_space<vmem>>, vector<1x8x256xf32>
    %196 = vector.shape_cast %195 : vector<1x8x256xf32> to vector<8x256xf32>
    %197 = arith.select %34, %193, %196 : vector<8x256xi1>, vector<8x256xf32>
    %198 = arith.truncf %175 : vector<8x64xf32> to vector<8x64xbf16>
    %cst_68 = arith.constant dense<0.000000e+00> : vector<8x256xf32>
    %199 = tpu.matmul %198, %47, %cst_68 {dimension_numbers = #tpu.dot_dimension_numbers<[1], [0], [0], [1], [0, 0, 1, 1], [], []>} : vector<8x64xbf16>, vector<64x256xbf16>, vector<8x256xf32> -> vector<8x256xf32>
    %200 = arith.addf %197, %199 : vector<8x256xf32>
    %201 = vector.extract_strided_slice %200 {offsets = [0, 0], sizes = [8, 192], strides = [1, 1]} : vector<8x256xf32> to vector<8x192xf32>
    %202 = arith.negf %201 : vector<8x192xf32>
    %203 = math.exp %202 : vector<8x192xf32>
    %cst_69 = arith.constant 1.000000e+00 : f32
    %204 = vector.broadcast %cst_69 : f32 to vector<8x192xf32>
    %205 = arith.addf %204, %203 : vector<8x192xf32>
    %206 = arith.divf %204, %205 : vector<8x192xf32>
    %207 = vector.extract_strided_slice %200 {offsets = [0, 192], sizes = [8, 64], strides = [1, 1]} : vector<8x256xf32> to vector<8x64xf32>
    %208 = math.tanh %207 : vector<8x64xf32>
    %209 = vector.extract_strided_slice %206 {offsets = [0, 0], sizes = [8, 64], strides = [1, 1]} : vector<8x192xf32> to vector<8x64xf32>
    %210 = vector.extract_strided_slice %206 {offsets = [0, 64], sizes = [8, 64], strides = [1, 1]} : vector<8x192xf32> to vector<8x64xf32>
    %211 = vector.extract_strided_slice %206 {offsets = [0, 128], sizes = [8, 64], strides = [1, 1]} : vector<8x192xf32> to vector<8x64xf32>
    %212 = arith.mulf %210, %178 : vector<8x64xf32>
    %213 = arith.mulf %209, %208 : vector<8x64xf32>
    %214 = arith.addf %212, %213 : vector<8x64xf32>
    %215 = math.tanh %214 : vector<8x64xf32>
    %216 = arith.mulf %211, %215 : vector<8x64xf32>
    %217 = arith.index_cast %c3_i32 : i32 to index
    %c0_70 = arith.constant 0 : index
    %c0_71 = arith.constant 0 : index
    %218 = vector.load %arg11[%217, %c0_70, %c0_71] : memref<8x8x64xf32, #tpu.memory_space<vmem>>, vector<1x8x64xf32>
    %219 = vector.shape_cast %218 : vector<1x8x64xf32> to vector<8x64xf32>
    %220 = arith.subf %216, %175 : vector<8x64xf32>
    %221 = arith.mulf %219, %220 : vector<8x64xf32>
    %222 = arith.addf %175, %221 : vector<8x64xf32>
    %223 = arith.subf %214, %178 : vector<8x64xf32>
    %224 = arith.mulf %219, %223 : vector<8x64xf32>
    %225 = arith.addf %178, %224 : vector<8x64xf32>
    %226 = arith.mulf %219, %216 : vector<8x64xf32>
    %227 = vector.extract_strided_slice %226 {offsets = [0, 0], sizes = [8, 32], strides = [1, 1]} : vector<8x64xf32> to vector<8x32xf32>
    %228 = arith.index_cast %c3_i32 : i32 to index
    %c0_72 = arith.constant 0 : index
    %c0_73 = arith.constant 0 : index
    %229 = vector.load %arg10[%228, %c0_72, %c0_73] : memref<8x8x64xf32, #tpu.memory_space<vmem>>, vector<1x8x32xf32>
    %230 = vector.shape_cast %229 : vector<1x8x32xf32> to vector<8x32xf32>
    %231 = vector.shape_cast %227 : vector<8x32xf32> to vector<1x8x32xf32>
    tpu.vector_store %arg10[%228, %c0_72, %c0_73], %231 {strides = array<i32>} : memref<8x8x64xf32, #tpu.memory_space<vmem>>, vector<1x8x32xf32>,
    %232 = vector.extract_strided_slice %226 {offsets = [0, 32], sizes = [8, 32], strides = [1, 1]} : vector<8x64xf32> to vector<8x32xf32>
    %233 = arith.index_cast %190 : i32 to index
    %c0_74 = arith.constant 0 : index
    %c32_75 = arith.constant 32 : index
    %234 = vector.load %arg10[%233, %c0_74, %c32_75] : memref<8x8x64xf32, #tpu.memory_space<vmem>>, vector<1x8x32xf32>
    %235 = vector.shape_cast %234 : vector<1x8x32xf32> to vector<8x32xf32>
    %236 = vector.shape_cast %232 : vector<8x32xf32> to vector<1x8x32xf32>
    tpu.vector_store %arg10[%233, %c0_74, %c32_75], %236 {strides = array<i32>} : memref<8x8x64xf32, #tpu.memory_space<vmem>>, vector<1x8x32xf32>,
    %c4_i32 = arith.constant 4 : i32
    %c7_i32_76 = arith.constant 7 : i32
    %237 = arith.subi %c7_i32_76, %c4_i32 : i32
    %238 = arith.index_cast %c4_i32 : i32 to index
    %c0_77 = arith.constant 0 : index
    %c0_78 = arith.constant 0 : index
    %239 = vector.load %arg9[%238, %c0_77, %c0_78] : memref<8x8x256xf32, #tpu.memory_space<vmem>>, vector<1x8x256xf32>
    %240 = vector.shape_cast %239 : vector<1x8x256xf32> to vector<8x256xf32>
    %241 = arith.index_cast %237 : i32 to index
    %c0_79 = arith.constant 0 : index
    %c0_80 = arith.constant 0 : index
    %242 = vector.load %arg9[%241, %c0_79, %c0_80] : memref<8x8x256xf32, #tpu.memory_space<vmem>>, vector<1x8x256xf32>
    %243 = vector.shape_cast %242 : vector<1x8x256xf32> to vector<8x256xf32>
    %244 = arith.select %34, %240, %243 : vector<8x256xi1>, vector<8x256xf32>
    %245 = arith.truncf %222 : vector<8x64xf32> to vector<8x64xbf16>
    %cst_81 = arith.constant dense<0.000000e+00> : vector<8x256xf32>
    %246 = tpu.matmul %245, %47, %cst_81 {dimension_numbers = #tpu.dot_dimension_numbers<[1], [0], [0], [1], [0, 0, 1, 1], [], []>} : vector<8x64xbf16>, vector<64x256xbf16>, vector<8x256xf32> -> vector<8x256xf32>
    %247 = arith.addf %244, %246 : vector<8x256xf32>
    %248 = vector.extract_strided_slice %247 {offsets = [0, 0], sizes = [8, 192], strides = [1, 1]} : vector<8x256xf32> to vector<8x192xf32>
    %249 = arith.negf %248 : vector<8x192xf32>
    %250 = math.exp %249 : vector<8x192xf32>
    %cst_82 = arith.constant 1.000000e+00 : f32
    %251 = vector.broadcast %cst_82 : f32 to vector<8x192xf32>
    %252 = arith.addf %251, %250 : vector<8x192xf32>
    %253 = arith.divf %251, %252 : vector<8x192xf32>
    %254 = vector.extract_strided_slice %247 {offsets = [0, 192], sizes = [8, 64], strides = [1, 1]} : vector<8x256xf32> to vector<8x64xf32>
    %255 = math.tanh %254 : vector<8x64xf32>
    %256 = vector.extract_strided_slice %253 {offsets = [0, 0], sizes = [8, 64], strides = [1, 1]} : vector<8x192xf32> to vector<8x64xf32>
    %257 = vector.extract_strided_slice %253 {offsets = [0, 64], sizes = [8, 64], strides = [1, 1]} : vector<8x192xf32> to vector<8x64xf32>
    %258 = vector.extract_strided_slice %253 {offsets = [0, 128], sizes = [8, 64], strides = [1, 1]} : vector<8x192xf32> to vector<8x64xf32>
    %259 = arith.mulf %257, %225 : vector<8x64xf32>
    %260 = arith.mulf %256, %255 : vector<8x64xf32>
    %261 = arith.addf %259, %260 : vector<8x64xf32>
    %262 = math.tanh %261 : vector<8x64xf32>
    %263 = arith.mulf %258, %262 : vector<8x64xf32>
    %264 = arith.index_cast %c4_i32 : i32 to index
    %c0_83 = arith.constant 0 : index
    %c0_84 = arith.constant 0 : index
    %265 = vector.load %arg11[%264, %c0_83, %c0_84] : memref<8x8x64xf32, #tpu.memory_space<vmem>>, vector<1x8x64xf32>
    %266 = vector.shape_cast %265 : vector<1x8x64xf32> to vector<8x64xf32>
    %267 = arith.subf %263, %222 : vector<8x64xf32>
    %268 = arith.mulf %266, %267 : vector<8x64xf32>
    %269 = arith.addf %222, %268 : vector<8x64xf32>
    %270 = arith.subf %261, %225 : vector<8x64xf32>
    %271 = arith.mulf %266, %270 : vector<8x64xf32>
    %272 = arith.addf %225, %271 : vector<8x64xf32>
    %273 = arith.mulf %266, %263 : vector<8x64xf32>
    %274 = vector.extract_strided_slice %273 {offsets = [0, 0], sizes = [8, 32], strides = [1, 1]} : vector<8x64xf32> to vector<8x32xf32>
    %275 = arith.index_cast %c4_i32 : i32 to index
    %c0_85 = arith.constant 0 : index
    %c0_86 = arith.constant 0 : index
    %276 = vector.load %arg10[%275, %c0_85, %c0_86] : memref<8x8x64xf32, #tpu.memory_space<vmem>>, vector<1x8x32xf32>
    %277 = vector.shape_cast %276 : vector<1x8x32xf32> to vector<8x32xf32>
    %278 = vector.shape_cast %274 : vector<8x32xf32> to vector<1x8x32xf32>
    tpu.vector_store %arg10[%275, %c0_85, %c0_86], %278 {strides = array<i32>} : memref<8x8x64xf32, #tpu.memory_space<vmem>>, vector<1x8x32xf32>,
    %279 = vector.extract_strided_slice %273 {offsets = [0, 32], sizes = [8, 32], strides = [1, 1]} : vector<8x64xf32> to vector<8x32xf32>
    %280 = arith.index_cast %237 : i32 to index
    %c0_87 = arith.constant 0 : index
    %c32_88 = arith.constant 32 : index
    %281 = vector.load %arg10[%280, %c0_87, %c32_88] : memref<8x8x64xf32, #tpu.memory_space<vmem>>, vector<1x8x32xf32>
    %282 = vector.shape_cast %281 : vector<1x8x32xf32> to vector<8x32xf32>
    %283 = vector.shape_cast %279 : vector<8x32xf32> to vector<1x8x32xf32>
    tpu.vector_store %arg10[%280, %c0_87, %c32_88], %283 {strides = array<i32>} : memref<8x8x64xf32, #tpu.memory_space<vmem>>, vector<1x8x32xf32>,
    %c5_i32 = arith.constant 5 : i32
    %c7_i32_89 = arith.constant 7 : i32
    %284 = arith.subi %c7_i32_89, %c5_i32 : i32
    %285 = arith.index_cast %c5_i32 : i32 to index
    %c0_90 = arith.constant 0 : index
    %c0_91 = arith.constant 0 : index
    %286 = vector.load %arg9[%285, %c0_90, %c0_91] : memref<8x8x256xf32, #tpu.memory_space<vmem>>, vector<1x8x256xf32>
    %287 = vector.shape_cast %286 : vector<1x8x256xf32> to vector<8x256xf32>
    %288 = arith.index_cast %284 : i32 to index
    %c0_92 = arith.constant 0 : index
    %c0_93 = arith.constant 0 : index
    %289 = vector.load %arg9[%288, %c0_92, %c0_93] : memref<8x8x256xf32, #tpu.memory_space<vmem>>, vector<1x8x256xf32>
    %290 = vector.shape_cast %289 : vector<1x8x256xf32> to vector<8x256xf32>
    %291 = arith.select %34, %287, %290 : vector<8x256xi1>, vector<8x256xf32>
    %292 = arith.truncf %269 : vector<8x64xf32> to vector<8x64xbf16>
    %cst_94 = arith.constant dense<0.000000e+00> : vector<8x256xf32>
    %293 = tpu.matmul %292, %47, %cst_94 {dimension_numbers = #tpu.dot_dimension_numbers<[1], [0], [0], [1], [0, 0, 1, 1], [], []>} : vector<8x64xbf16>, vector<64x256xbf16>, vector<8x256xf32> -> vector<8x256xf32>
    %294 = arith.addf %291, %293 : vector<8x256xf32>
    %295 = vector.extract_strided_slice %294 {offsets = [0, 0], sizes = [8, 192], strides = [1, 1]} : vector<8x256xf32> to vector<8x192xf32>
    %296 = arith.negf %295 : vector<8x192xf32>
    %297 = math.exp %296 : vector<8x192xf32>
    %cst_95 = arith.constant 1.000000e+00 : f32
    %298 = vector.broadcast %cst_95 : f32 to vector<8x192xf32>
    %299 = arith.addf %298, %297 : vector<8x192xf32>
    %300 = arith.divf %298, %299 : vector<8x192xf32>
    %301 = vector.extract_strided_slice %294 {offsets = [0, 192], sizes = [8, 64], strides = [1, 1]} : vector<8x256xf32> to vector<8x64xf32>
    %302 = math.tanh %301 : vector<8x64xf32>
    %303 = vector.extract_strided_slice %300 {offsets = [0, 0], sizes = [8, 64], strides = [1, 1]} : vector<8x192xf32> to vector<8x64xf32>
    %304 = vector.extract_strided_slice %300 {offsets = [0, 64], sizes = [8, 64], strides = [1, 1]} : vector<8x192xf32> to vector<8x64xf32>
    %305 = vector.extract_strided_slice %300 {offsets = [0, 128], sizes = [8, 64], strides = [1, 1]} : vector<8x192xf32> to vector<8x64xf32>
    %306 = arith.mulf %304, %272 : vector<8x64xf32>
    %307 = arith.mulf %303, %302 : vector<8x64xf32>
    %308 = arith.addf %306, %307 : vector<8x64xf32>
    %309 = math.tanh %308 : vector<8x64xf32>
    %310 = arith.mulf %305, %309 : vector<8x64xf32>
    %311 = arith.index_cast %c5_i32 : i32 to index
    %c0_96 = arith.constant 0 : index
    %c0_97 = arith.constant 0 : index
    %312 = vector.load %arg11[%311, %c0_96, %c0_97] : memref<8x8x64xf32, #tpu.memory_space<vmem>>, vector<1x8x64xf32>
    %313 = vector.shape_cast %312 : vector<1x8x64xf32> to vector<8x64xf32>
    %314 = arith.subf %310, %269 : vector<8x64xf32>
    %315 = arith.mulf %313, %314 : vector<8x64xf32>
    %316 = arith.addf %269, %315 : vector<8x64xf32>
    %317 = arith.subf %308, %272 : vector<8x64xf32>
    %318 = arith.mulf %313, %317 : vector<8x64xf32>
    %319 = arith.addf %272, %318 : vector<8x64xf32>
    %320 = arith.mulf %313, %310 : vector<8x64xf32>
    %321 = vector.extract_strided_slice %320 {offsets = [0, 0], sizes = [8, 32], strides = [1, 1]} : vector<8x64xf32> to vector<8x32xf32>
    %322 = arith.index_cast %c5_i32 : i32 to index
    %c0_98 = arith.constant 0 : index
    %c0_99 = arith.constant 0 : index
    %323 = vector.load %arg10[%322, %c0_98, %c0_99] : memref<8x8x64xf32, #tpu.memory_space<vmem>>, vector<1x8x32xf32>
    %324 = vector.shape_cast %323 : vector<1x8x32xf32> to vector<8x32xf32>
    %325 = vector.shape_cast %321 : vector<8x32xf32> to vector<1x8x32xf32>
    tpu.vector_store %arg10[%322, %c0_98, %c0_99], %325 {strides = array<i32>} : memref<8x8x64xf32, #tpu.memory_space<vmem>>, vector<1x8x32xf32>,
    %326 = vector.extract_strided_slice %320 {offsets = [0, 32], sizes = [8, 32], strides = [1, 1]} : vector<8x64xf32> to vector<8x32xf32>
    %327 = arith.index_cast %284 : i32 to index
    %c0_100 = arith.constant 0 : index
    %c32_101 = arith.constant 32 : index
    %328 = vector.load %arg10[%327, %c0_100, %c32_101] : memref<8x8x64xf32, #tpu.memory_space<vmem>>, vector<1x8x32xf32>
    %329 = vector.shape_cast %328 : vector<1x8x32xf32> to vector<8x32xf32>
    %330 = vector.shape_cast %326 : vector<8x32xf32> to vector<1x8x32xf32>
    tpu.vector_store %arg10[%327, %c0_100, %c32_101], %330 {strides = array<i32>} : memref<8x8x64xf32, #tpu.memory_space<vmem>>, vector<1x8x32xf32>,
    %c6_i32 = arith.constant 6 : i32
    %c7_i32_102 = arith.constant 7 : i32
    %331 = arith.subi %c7_i32_102, %c6_i32 : i32
    %332 = arith.index_cast %c6_i32 : i32 to index
    %c0_103 = arith.constant 0 : index
    %c0_104 = arith.constant 0 : index
    %333 = vector.load %arg9[%332, %c0_103, %c0_104] : memref<8x8x256xf32, #tpu.memory_space<vmem>>, vector<1x8x256xf32>
    %334 = vector.shape_cast %333 : vector<1x8x256xf32> to vector<8x256xf32>
    %335 = arith.index_cast %331 : i32 to index
    %c0_105 = arith.constant 0 : index
    %c0_106 = arith.constant 0 : index
    %336 = vector.load %arg9[%335, %c0_105, %c0_106] : memref<8x8x256xf32, #tpu.memory_space<vmem>>, vector<1x8x256xf32>
    %337 = vector.shape_cast %336 : vector<1x8x256xf32> to vector<8x256xf32>
    %338 = arith.select %34, %334, %337 : vector<8x256xi1>, vector<8x256xf32>
    %339 = arith.truncf %316 : vector<8x64xf32> to vector<8x64xbf16>
    %cst_107 = arith.constant dense<0.000000e+00> : vector<8x256xf32>
    %340 = tpu.matmul %339, %47, %cst_107 {dimension_numbers = #tpu.dot_dimension_numbers<[1], [0], [0], [1], [0, 0, 1, 1], [], []>} : vector<8x64xbf16>, vector<64x256xbf16>, vector<8x256xf32> -> vector<8x256xf32>
    %341 = arith.addf %338, %340 : vector<8x256xf32>
    %342 = vector.extract_strided_slice %341 {offsets = [0, 0], sizes = [8, 192], strides = [1, 1]} : vector<8x256xf32> to vector<8x192xf32>
    %343 = arith.negf %342 : vector<8x192xf32>
    %344 = math.exp %343 : vector<8x192xf32>
    %cst_108 = arith.constant 1.000000e+00 : f32
    %345 = vector.broadcast %cst_108 : f32 to vector<8x192xf32>
    %346 = arith.addf %345, %344 : vector<8x192xf32>
    %347 = arith.divf %345, %346 : vector<8x192xf32>
    %348 = vector.extract_strided_slice %341 {offsets = [0, 192], sizes = [8, 64], strides = [1, 1]} : vector<8x256xf32> to vector<8x64xf32>
    %349 = math.tanh %348 : vector<8x64xf32>
    %350 = vector.extract_strided_slice %347 {offsets = [0, 0], sizes = [8, 64], strides = [1, 1]} : vector<8x192xf32> to vector<8x64xf32>
    %351 = vector.extract_strided_slice %347 {offsets = [0, 64], sizes = [8, 64], strides = [1, 1]} : vector<8x192xf32> to vector<8x64xf32>
    %352 = vector.extract_strided_slice %347 {offsets = [0, 128], sizes = [8, 64], strides = [1, 1]} : vector<8x192xf32> to vector<8x64xf32>
    %353 = arith.mulf %351, %319 : vector<8x64xf32>
    %354 = arith.mulf %350, %349 : vector<8x64xf32>
    %355 = arith.addf %353, %354 : vector<8x64xf32>
    %356 = math.tanh %355 : vector<8x64xf32>
    %357 = arith.mulf %352, %356 : vector<8x64xf32>
    %358 = arith.index_cast %c6_i32 : i32 to index
    %c0_109 = arith.constant 0 : index
    %c0_110 = arith.constant 0 : index
    %359 = vector.load %arg11[%358, %c0_109, %c0_110] : memref<8x8x64xf32, #tpu.memory_space<vmem>>, vector<1x8x64xf32>
    %360 = vector.shape_cast %359 : vector<1x8x64xf32> to vector<8x64xf32>
    %361 = arith.subf %357, %316 : vector<8x64xf32>
    %362 = arith.mulf %360, %361 : vector<8x64xf32>
    %363 = arith.addf %316, %362 : vector<8x64xf32>
    %364 = arith.subf %355, %319 : vector<8x64xf32>
    %365 = arith.mulf %360, %364 : vector<8x64xf32>
    %366 = arith.addf %319, %365 : vector<8x64xf32>
    %367 = arith.mulf %360, %357 : vector<8x64xf32>
    %368 = vector.extract_strided_slice %367 {offsets = [0, 0], sizes = [8, 32], strides = [1, 1]} : vector<8x64xf32> to vector<8x32xf32>
    %369 = arith.index_cast %c6_i32 : i32 to index
    %c0_111 = arith.constant 0 : index
    %c0_112 = arith.constant 0 : index
    %370 = vector.load %arg10[%369, %c0_111, %c0_112] : memref<8x8x64xf32, #tpu.memory_space<vmem>>, vector<1x8x32xf32>
    %371 = vector.shape_cast %370 : vector<1x8x32xf32> to vector<8x32xf32>
    %372 = vector.shape_cast %368 : vector<8x32xf32> to vector<1x8x32xf32>
    tpu.vector_store %arg10[%369, %c0_111, %c0_112], %372 {strides = array<i32>} : memref<8x8x64xf32, #tpu.memory_space<vmem>>, vector<1x8x32xf32>,
    %373 = vector.extract_strided_slice %367 {offsets = [0, 32], sizes = [8, 32], strides = [1, 1]} : vector<8x64xf32> to vector<8x32xf32>
    %374 = arith.index_cast %331 : i32 to index
    %c0_113 = arith.constant 0 : index
    %c32_114 = arith.constant 32 : index
    %375 = vector.load %arg10[%374, %c0_113, %c32_114] : memref<8x8x64xf32, #tpu.memory_space<vmem>>, vector<1x8x32xf32>
    %376 = vector.shape_cast %375 : vector<1x8x32xf32> to vector<8x32xf32>
    %377 = vector.shape_cast %373 : vector<8x32xf32> to vector<1x8x32xf32>
    tpu.vector_store %arg10[%374, %c0_113, %c32_114], %377 {strides = array<i32>} : memref<8x8x64xf32, #tpu.memory_space<vmem>>, vector<1x8x32xf32>,
    %c7_i32_115 = arith.constant 7 : i32
    %c7_i32_116 = arith.constant 7 : i32
    %378 = arith.subi %c7_i32_116, %c7_i32_115 : i32
    %379 = arith.index_cast %c7_i32_115 : i32 to index
    %c0_117 = arith.constant 0 : index
    %c0_118 = arith.constant 0 : index
    %380 = vector.load %arg9[%379, %c0_117, %c0_118] : memref<8x8x256xf32, #tpu.memory_space<vmem>>, vector<1x8x256xf32>
    %381 = vector.shape_cast %380 : vector<1x8x256xf32> to vector<8x256xf32>
    %382 = arith.index_cast %378 : i32 to index
    %c0_119 = arith.constant 0 : index
    %c0_120 = arith.constant 0 : index
    %383 = vector.load %arg9[%382, %c0_119, %c0_120] : memref<8x8x256xf32, #tpu.memory_space<vmem>>, vector<1x8x256xf32>
    %384 = vector.shape_cast %383 : vector<1x8x256xf32> to vector<8x256xf32>
    %385 = arith.select %34, %381, %384 : vector<8x256xi1>, vector<8x256xf32>
    %386 = arith.truncf %363 : vector<8x64xf32> to vector<8x64xbf16>
    %cst_121 = arith.constant dense<0.000000e+00> : vector<8x256xf32>
    %387 = tpu.matmul %386, %47, %cst_121 {dimension_numbers = #tpu.dot_dimension_numbers<[1], [0], [0], [1], [0, 0, 1, 1], [], []>} : vector<8x64xbf16>, vector<64x256xbf16>, vector<8x256xf32> -> vector<8x256xf32>
    %388 = arith.addf %385, %387 : vector<8x256xf32>
    %389 = vector.extract_strided_slice %388 {offsets = [0, 0], sizes = [8, 192], strides = [1, 1]} : vector<8x256xf32> to vector<8x192xf32>
    %390 = arith.negf %389 : vector<8x192xf32>
    %391 = math.exp %390 : vector<8x192xf32>
    %cst_122 = arith.constant 1.000000e+00 : f32
    %392 = vector.broadcast %cst_122 : f32 to vector<8x192xf32>
    %393 = arith.addf %392, %391 : vector<8x192xf32>
    %394 = arith.divf %392, %393 : vector<8x192xf32>
    %395 = vector.extract_strided_slice %388 {offsets = [0, 192], sizes = [8, 64], strides = [1, 1]} : vector<8x256xf32> to vector<8x64xf32>
    %396 = math.tanh %395 : vector<8x64xf32>
    %397 = vector.extract_strided_slice %394 {offsets = [0, 0], sizes = [8, 64], strides = [1, 1]} : vector<8x192xf32> to vector<8x64xf32>
    %398 = vector.extract_strided_slice %394 {offsets = [0, 64], sizes = [8, 64], strides = [1, 1]} : vector<8x192xf32> to vector<8x64xf32>
    %399 = vector.extract_strided_slice %394 {offsets = [0, 128], sizes = [8, 64], strides = [1, 1]} : vector<8x192xf32> to vector<8x64xf32>
    %400 = arith.mulf %398, %366 : vector<8x64xf32>
    %401 = arith.mulf %397, %396 : vector<8x64xf32>
    %402 = arith.addf %400, %401 : vector<8x64xf32>
    %403 = math.tanh %402 : vector<8x64xf32>
    %404 = arith.mulf %399, %403 : vector<8x64xf32>
    %405 = arith.index_cast %c7_i32_115 : i32 to index
    %c0_123 = arith.constant 0 : index
    %c0_124 = arith.constant 0 : index
    %406 = vector.load %arg11[%405, %c0_123, %c0_124] : memref<8x8x64xf32, #tpu.memory_space<vmem>>, vector<1x8x64xf32>
    %407 = vector.shape_cast %406 : vector<1x8x64xf32> to vector<8x64xf32>
    %408 = arith.subf %404, %363 : vector<8x64xf32>
    %409 = arith.mulf %407, %408 : vector<8x64xf32>
    %410 = arith.addf %363, %409 : vector<8x64xf32>
    %411 = arith.subf %402, %366 : vector<8x64xf32>
    %412 = arith.mulf %407, %411 : vector<8x64xf32>
    %413 = arith.addf %366, %412 : vector<8x64xf32>
    %414 = arith.mulf %407, %404 : vector<8x64xf32>
    %415 = vector.extract_strided_slice %414 {offsets = [0, 0], sizes = [8, 32], strides = [1, 1]} : vector<8x64xf32> to vector<8x32xf32>
    %416 = arith.index_cast %c7_i32_115 : i32 to index
    %c0_125 = arith.constant 0 : index
    %c0_126 = arith.constant 0 : index
    %417 = vector.load %arg10[%416, %c0_125, %c0_126] : memref<8x8x64xf32, #tpu.memory_space<vmem>>, vector<1x8x32xf32>
    %418 = vector.shape_cast %417 : vector<1x8x32xf32> to vector<8x32xf32>
    %419 = vector.shape_cast %415 : vector<8x32xf32> to vector<1x8x32xf32>
    tpu.vector_store %arg10[%416, %c0_125, %c0_126], %419 {strides = array<i32>} : memref<8x8x64xf32, #tpu.memory_space<vmem>>, vector<1x8x32xf32>,
    %420 = vector.extract_strided_slice %414 {offsets = [0, 32], sizes = [8, 32], strides = [1, 1]} : vector<8x64xf32> to vector<8x32xf32>
    %421 = arith.index_cast %378 : i32 to index
    %c0_127 = arith.constant 0 : index
    %c32_128 = arith.constant 32 : index
    %422 = vector.load %arg10[%421, %c0_127, %c32_128] : memref<8x8x64xf32, #tpu.memory_space<vmem>>, vector<1x8x32xf32>
    %423 = vector.shape_cast %422 : vector<1x8x32xf32> to vector<8x32xf32>
    %424 = vector.shape_cast %420 : vector<8x32xf32> to vector<1x8x32xf32>
    tpu.vector_store %arg10[%421, %c0_127, %c32_128], %424 {strides = array<i32>} : memref<8x8x64xf32, #tpu.memory_space<vmem>>, vector<1x8x32xf32>,
    %c8_i32 = arith.constant 8 : i32
    %c0_129 = arith.constant 0 : index
    %c0_130 = arith.constant 0 : index
    %c0_131 = arith.constant 0 : index
    %425 = vector.load %arg10[%c0_129, %c0_130, %c0_131] : memref<8x8x64xf32, #tpu.memory_space<vmem>>, vector<8x8x64xf32>
    %426 = vector.shape_cast %425 : vector<8x8x64xf32> to vector<64x64xf32>
    %c0_132 = arith.constant 0 : index
    %c0_133 = arith.constant 0 : index
    %c0_134 = arith.constant 0 : index
    %427 = vector.load %arg2[%c0_132, %c0_133, %c0_134] : memref<1x64x256xbf16, #tpu.memory_space<vmem>>, vector<1x64x256xbf16>
    %428 = vector.shape_cast %427 : vector<1x64x256xbf16> to vector<64x256xbf16>
    %429 = arith.truncf %426 : vector<64x64xf32> to vector<64x64xbf16>
    %cst_135 = arith.constant dense<0.000000e+00> : vector<64x256xf32>
    %430 = tpu.matmul %429, %428, %cst_135 {dimension_numbers = #tpu.dot_dimension_numbers<[1], [0], [0], [1], [0, 0, 1, 1], [], []>} : vector<64x64xbf16>, vector<64x256xbf16>, vector<64x256xf32> -> vector<64x256xf32>
    %c1 = arith.constant 1 : index
    %c0_136 = arith.constant 0 : index
    %c0_137 = arith.constant 0 : index
    %431 = vector.load %arg4[%c1, %c0_136, %c0_137] : memref<2x1x256xf32, #tpu.memory_space<vmem>>, vector<1x1x256xf32>
    %432 = vector.shape_cast %431 : vector<1x1x256xf32> to vector<1x256xf32>
    %433 = vector.broadcast %432 : vector<1x256xf32> to vector<64x256xf32>
    %434 = arith.addf %430, %433 : vector<64x256xf32>
    %435 = vector.shape_cast %434 : vector<64x256xf32> to vector<8x8x256xf32>
    %c0_138 = arith.constant 0 : index
    %c0_139 = arith.constant 0 : index
    %c0_140 = arith.constant 0 : index
    %436 = vector.load %arg9[%c0_138, %c0_139, %c0_140] : memref<8x8x256xf32, #tpu.memory_space<vmem>>, vector<8x8x256xf32>
    tpu.vector_store %arg9[%c0_138, %c0_139, %c0_140], %435 {strides = array<i32>} : memref<8x8x256xf32, #tpu.memory_space<vmem>>, vector<8x8x256xf32>,
    %c1_141 = arith.constant 1 : index
    %c0_142 = arith.constant 0 : index
    %c0_143 = arith.constant 0 : index
    %437 = vector.load %arg3[%c1_141, %c0_142, %c0_143] : memref<2x64x256xbf16, #tpu.memory_space<vmem>>, vector<1x64x256xbf16>
    %438 = vector.shape_cast %437 : vector<1x64x256xbf16> to vector<64x256xbf16>
    %cst_144 = arith.constant 0.000000e+00 : f32
    %439 = vector.broadcast %cst_144 : f32 to vector<8x64xf32>
    %c0_i32_145 = arith.constant 0 : i32
    %c7_i32_146 = arith.constant 7 : i32
    %440 = arith.subi %c7_i32_146, %c0_i32_145 : i32
    %441 = arith.index_cast %c0_i32_145 : i32 to index
    %c0_147 = arith.constant 0 : index
    %c0_148 = arith.constant 0 : index
    %442 = vector.load %arg9[%441, %c0_147, %c0_148] : memref<8x8x256xf32, #tpu.memory_space<vmem>>, vector<1x8x256xf32>
    %443 = vector.shape_cast %442 : vector<1x8x256xf32> to vector<8x256xf32>
    %444 = arith.index_cast %440 : i32 to index
    %c0_149 = arith.constant 0 : index
    %c0_150 = arith.constant 0 : index
    %445 = vector.load %arg9[%444, %c0_149, %c0_150] : memref<8x8x256xf32, #tpu.memory_space<vmem>>, vector<1x8x256xf32>
    %446 = vector.shape_cast %445 : vector<1x8x256xf32> to vector<8x256xf32>
    %447 = arith.select %34, %443, %446 : vector<8x256xi1>, vector<8x256xf32>
    %448 = arith.truncf %439 : vector<8x64xf32> to vector<8x64xbf16>
    %cst_151 = arith.constant dense<0.000000e+00> : vector<8x256xf32>
    %449 = tpu.matmul %448, %438, %cst_151 {dimension_numbers = #tpu.dot_dimension_numbers<[1], [0], [0], [1], [0, 0, 1, 1], [], []>} : vector<8x64xbf16>, vector<64x256xbf16>, vector<8x256xf32> -> vector<8x256xf32>
    %450 = arith.addf %447, %449 : vector<8x256xf32>
    %451 = vector.extract_strided_slice %450 {offsets = [0, 0], sizes = [8, 192], strides = [1, 1]} : vector<8x256xf32> to vector<8x192xf32>
    %452 = arith.negf %451 : vector<8x192xf32>
    %453 = math.exp %452 : vector<8x192xf32>
    %cst_152 = arith.constant 1.000000e+00 : f32
    %454 = vector.broadcast %cst_152 : f32 to vector<8x192xf32>
    %455 = arith.addf %454, %453 : vector<8x192xf32>
    %456 = arith.divf %454, %455 : vector<8x192xf32>
    %457 = vector.extract_strided_slice %450 {offsets = [0, 192], sizes = [8, 64], strides = [1, 1]} : vector<8x256xf32> to vector<8x64xf32>
    %458 = math.tanh %457 : vector<8x64xf32>
    %459 = vector.extract_strided_slice %456 {offsets = [0, 0], sizes = [8, 64], strides = [1, 1]} : vector<8x192xf32> to vector<8x64xf32>
    %460 = vector.extract_strided_slice %456 {offsets = [0, 64], sizes = [8, 64], strides = [1, 1]} : vector<8x192xf32> to vector<8x64xf32>
    %461 = vector.extract_strided_slice %456 {offsets = [0, 128], sizes = [8, 64], strides = [1, 1]} : vector<8x192xf32> to vector<8x64xf32>
    %462 = arith.mulf %460, %439 : vector<8x64xf32>
    %463 = arith.mulf %459, %458 : vector<8x64xf32>
    %464 = arith.addf %462, %463 : vector<8x64xf32>
    %465 = math.tanh %464 : vector<8x64xf32>
    %466 = arith.mulf %461, %465 : vector<8x64xf32>
    %467 = arith.index_cast %c0_i32_145 : i32 to index
    %c0_153 = arith.constant 0 : index
    %c0_154 = arith.constant 0 : index
    %468 = vector.load %arg11[%467, %c0_153, %c0_154] : memref<8x8x64xf32, #tpu.memory_space<vmem>>, vector<1x8x64xf32>
    %469 = vector.shape_cast %468 : vector<1x8x64xf32> to vector<8x64xf32>
    %470 = arith.subf %466, %439 : vector<8x64xf32>
    %471 = arith.mulf %469, %470 : vector<8x64xf32>
    %472 = arith.addf %439, %471 : vector<8x64xf32>
    %473 = arith.subf %464, %439 : vector<8x64xf32>
    %474 = arith.mulf %469, %473 : vector<8x64xf32>
    %475 = arith.addf %439, %474 : vector<8x64xf32>
    %476 = arith.mulf %469, %466 : vector<8x64xf32>
    %477 = vector.extract_strided_slice %476 {offsets = [0, 0], sizes = [8, 32], strides = [1, 1]} : vector<8x64xf32> to vector<8x32xf32>
    %478 = arith.index_cast %c0_i32_145 : i32 to index
    %c0_155 = arith.constant 0 : index
    %c0_156 = arith.constant 0 : index
    %479 = vector.load %arg10[%478, %c0_155, %c0_156] : memref<8x8x64xf32, #tpu.memory_space<vmem>>, vector<1x8x32xf32>
    %480 = vector.shape_cast %479 : vector<1x8x32xf32> to vector<8x32xf32>
    %481 = vector.shape_cast %477 : vector<8x32xf32> to vector<1x8x32xf32>
    tpu.vector_store %arg10[%478, %c0_155, %c0_156], %481 {strides = array<i32>} : memref<8x8x64xf32, #tpu.memory_space<vmem>>, vector<1x8x32xf32>,
    %482 = vector.extract_strided_slice %476 {offsets = [0, 32], sizes = [8, 32], strides = [1, 1]} : vector<8x64xf32> to vector<8x32xf32>
    %483 = arith.index_cast %440 : i32 to index
    %c0_157 = arith.constant 0 : index
    %c32_158 = arith.constant 32 : index
    %484 = vector.load %arg10[%483, %c0_157, %c32_158] : memref<8x8x64xf32, #tpu.memory_space<vmem>>, vector<1x8x32xf32>
    %485 = vector.shape_cast %484 : vector<1x8x32xf32> to vector<8x32xf32>
    %486 = vector.shape_cast %482 : vector<8x32xf32> to vector<1x8x32xf32>
    tpu.vector_store %arg10[%483, %c0_157, %c32_158], %486 {strides = array<i32>} : memref<8x8x64xf32, #tpu.memory_space<vmem>>, vector<1x8x32xf32>,
    %c1_i32_159 = arith.constant 1 : i32
    %c7_i32_160 = arith.constant 7 : i32
    %487 = arith.subi %c7_i32_160, %c1_i32_159 : i32
    %488 = arith.index_cast %c1_i32_159 : i32 to index
    %c0_161 = arith.constant 0 : index
    %c0_162 = arith.constant 0 : index
    %489 = vector.load %arg9[%488, %c0_161, %c0_162] : memref<8x8x256xf32, #tpu.memory_space<vmem>>, vector<1x8x256xf32>
    %490 = vector.shape_cast %489 : vector<1x8x256xf32> to vector<8x256xf32>
    %491 = arith.index_cast %487 : i32 to index
    %c0_163 = arith.constant 0 : index
    %c0_164 = arith.constant 0 : index
    %492 = vector.load %arg9[%491, %c0_163, %c0_164] : memref<8x8x256xf32, #tpu.memory_space<vmem>>, vector<1x8x256xf32>
    %493 = vector.shape_cast %492 : vector<1x8x256xf32> to vector<8x256xf32>
    %494 = arith.select %34, %490, %493 : vector<8x256xi1>, vector<8x256xf32>
    %495 = arith.truncf %472 : vector<8x64xf32> to vector<8x64xbf16>
    %cst_165 = arith.constant dense<0.000000e+00> : vector<8x256xf32>
    %496 = tpu.matmul %495, %438, %cst_165 {dimension_numbers = #tpu.dot_dimension_numbers<[1], [0], [0], [1], [0, 0, 1, 1], [], []>} : vector<8x64xbf16>, vector<64x256xbf16>, vector<8x256xf32> -> vector<8x256xf32>
    %497 = arith.addf %494, %496 : vector<8x256xf32>
    %498 = vector.extract_strided_slice %497 {offsets = [0, 0], sizes = [8, 192], strides = [1, 1]} : vector<8x256xf32> to vector<8x192xf32>
    %499 = arith.negf %498 : vector<8x192xf32>
    %500 = math.exp %499 : vector<8x192xf32>
    %cst_166 = arith.constant 1.000000e+00 : f32
    %501 = vector.broadcast %cst_166 : f32 to vector<8x192xf32>
    %502 = arith.addf %501, %500 : vector<8x192xf32>
    %503 = arith.divf %501, %502 : vector<8x192xf32>
    %504 = vector.extract_strided_slice %497 {offsets = [0, 192], sizes = [8, 64], strides = [1, 1]} : vector<8x256xf32> to vector<8x64xf32>
    %505 = math.tanh %504 : vector<8x64xf32>
    %506 = vector.extract_strided_slice %503 {offsets = [0, 0], sizes = [8, 64], strides = [1, 1]} : vector<8x192xf32> to vector<8x64xf32>
    %507 = vector.extract_strided_slice %503 {offsets = [0, 64], sizes = [8, 64], strides = [1, 1]} : vector<8x192xf32> to vector<8x64xf32>
    %508 = vector.extract_strided_slice %503 {offsets = [0, 128], sizes = [8, 64], strides = [1, 1]} : vector<8x192xf32> to vector<8x64xf32>
    %509 = arith.mulf %507, %475 : vector<8x64xf32>
    %510 = arith.mulf %506, %505 : vector<8x64xf32>
    %511 = arith.addf %509, %510 : vector<8x64xf32>
    %512 = math.tanh %511 : vector<8x64xf32>
    %513 = arith.mulf %508, %512 : vector<8x64xf32>
    %514 = arith.index_cast %c1_i32_159 : i32 to index
    %c0_167 = arith.constant 0 : index
    %c0_168 = arith.constant 0 : index
    %515 = vector.load %arg11[%514, %c0_167, %c0_168] : memref<8x8x64xf32, #tpu.memory_space<vmem>>, vector<1x8x64xf32>
    %516 = vector.shape_cast %515 : vector<1x8x64xf32> to vector<8x64xf32>
    %517 = arith.subf %513, %472 : vector<8x64xf32>
    %518 = arith.mulf %516, %517 : vector<8x64xf32>
    %519 = arith.addf %472, %518 : vector<8x64xf32>
    %520 = arith.subf %511, %475 : vector<8x64xf32>
    %521 = arith.mulf %516, %520 : vector<8x64xf32>
    %522 = arith.addf %475, %521 : vector<8x64xf32>
    %523 = arith.mulf %516, %513 : vector<8x64xf32>
    %524 = vector.extract_strided_slice %523 {offsets = [0, 0], sizes = [8, 32], strides = [1, 1]} : vector<8x64xf32> to vector<8x32xf32>
    %525 = arith.index_cast %c1_i32_159 : i32 to index
    %c0_169 = arith.constant 0 : index
    %c0_170 = arith.constant 0 : index
    %526 = vector.load %arg10[%525, %c0_169, %c0_170] : memref<8x8x64xf32, #tpu.memory_space<vmem>>, vector<1x8x32xf32>
    %527 = vector.shape_cast %526 : vector<1x8x32xf32> to vector<8x32xf32>
    %528 = vector.shape_cast %524 : vector<8x32xf32> to vector<1x8x32xf32>
    tpu.vector_store %arg10[%525, %c0_169, %c0_170], %528 {strides = array<i32>} : memref<8x8x64xf32, #tpu.memory_space<vmem>>, vector<1x8x32xf32>,
    %529 = vector.extract_strided_slice %523 {offsets = [0, 32], sizes = [8, 32], strides = [1, 1]} : vector<8x64xf32> to vector<8x32xf32>
    %530 = arith.index_cast %487 : i32 to index
    %c0_171 = arith.constant 0 : index
    %c32_172 = arith.constant 32 : index
    %531 = vector.load %arg10[%530, %c0_171, %c32_172] : memref<8x8x64xf32, #tpu.memory_space<vmem>>, vector<1x8x32xf32>
    %532 = vector.shape_cast %531 : vector<1x8x32xf32> to vector<8x32xf32>
    %533 = vector.shape_cast %529 : vector<8x32xf32> to vector<1x8x32xf32>
    tpu.vector_store %arg10[%530, %c0_171, %c32_172], %533 {strides = array<i32>} : memref<8x8x64xf32, #tpu.memory_space<vmem>>, vector<1x8x32xf32>,
    %c2_i32_173 = arith.constant 2 : i32
    %c7_i32_174 = arith.constant 7 : i32
    %534 = arith.subi %c7_i32_174, %c2_i32_173 : i32
    %535 = arith.index_cast %c2_i32_173 : i32 to index
    %c0_175 = arith.constant 0 : index
    %c0_176 = arith.constant 0 : index
    %536 = vector.load %arg9[%535, %c0_175, %c0_176] : memref<8x8x256xf32, #tpu.memory_space<vmem>>, vector<1x8x256xf32>
    %537 = vector.shape_cast %536 : vector<1x8x256xf32> to vector<8x256xf32>
    %538 = arith.index_cast %534 : i32 to index
    %c0_177 = arith.constant 0 : index
    %c0_178 = arith.constant 0 : index
    %539 = vector.load %arg9[%538, %c0_177, %c0_178] : memref<8x8x256xf32, #tpu.memory_space<vmem>>, vector<1x8x256xf32>
    %540 = vector.shape_cast %539 : vector<1x8x256xf32> to vector<8x256xf32>
    %541 = arith.select %34, %537, %540 : vector<8x256xi1>, vector<8x256xf32>
    %542 = arith.truncf %519 : vector<8x64xf32> to vector<8x64xbf16>
    %cst_179 = arith.constant dense<0.000000e+00> : vector<8x256xf32>
    %543 = tpu.matmul %542, %438, %cst_179 {dimension_numbers = #tpu.dot_dimension_numbers<[1], [0], [0], [1], [0, 0, 1, 1], [], []>} : vector<8x64xbf16>, vector<64x256xbf16>, vector<8x256xf32> -> vector<8x256xf32>
    %544 = arith.addf %541, %543 : vector<8x256xf32>
    %545 = vector.extract_strided_slice %544 {offsets = [0, 0], sizes = [8, 192], strides = [1, 1]} : vector<8x256xf32> to vector<8x192xf32>
    %546 = arith.negf %545 : vector<8x192xf32>
    %547 = math.exp %546 : vector<8x192xf32>
    %cst_180 = arith.constant 1.000000e+00 : f32
    %548 = vector.broadcast %cst_180 : f32 to vector<8x192xf32>
    %549 = arith.addf %548, %547 : vector<8x192xf32>
    %550 = arith.divf %548, %549 : vector<8x192xf32>
    %551 = vector.extract_strided_slice %544 {offsets = [0, 192], sizes = [8, 64], strides = [1, 1]} : vector<8x256xf32> to vector<8x64xf32>
    %552 = math.tanh %551 : vector<8x64xf32>
    %553 = vector.extract_strided_slice %550 {offsets = [0, 0], sizes = [8, 64], strides = [1, 1]} : vector<8x192xf32> to vector<8x64xf32>
    %554 = vector.extract_strided_slice %550 {offsets = [0, 64], sizes = [8, 64], strides = [1, 1]} : vector<8x192xf32> to vector<8x64xf32>
    %555 = vector.extract_strided_slice %550 {offsets = [0, 128], sizes = [8, 64], strides = [1, 1]} : vector<8x192xf32> to vector<8x64xf32>
    %556 = arith.mulf %554, %522 : vector<8x64xf32>
    %557 = arith.mulf %553, %552 : vector<8x64xf32>
    %558 = arith.addf %556, %557 : vector<8x64xf32>
    %559 = math.tanh %558 : vector<8x64xf32>
    %560 = arith.mulf %555, %559 : vector<8x64xf32>
    %561 = arith.index_cast %c2_i32_173 : i32 to index
    %c0_181 = arith.constant 0 : index
    %c0_182 = arith.constant 0 : index
    %562 = vector.load %arg11[%561, %c0_181, %c0_182] : memref<8x8x64xf32, #tpu.memory_space<vmem>>, vector<1x8x64xf32>
    %563 = vector.shape_cast %562 : vector<1x8x64xf32> to vector<8x64xf32>
    %564 = arith.subf %560, %519 : vector<8x64xf32>
    %565 = arith.mulf %563, %564 : vector<8x64xf32>
    %566 = arith.addf %519, %565 : vector<8x64xf32>
    %567 = arith.subf %558, %522 : vector<8x64xf32>
    %568 = arith.mulf %563, %567 : vector<8x64xf32>
    %569 = arith.addf %522, %568 : vector<8x64xf32>
    %570 = arith.mulf %563, %560 : vector<8x64xf32>
    %571 = vector.extract_strided_slice %570 {offsets = [0, 0], sizes = [8, 32], strides = [1, 1]} : vector<8x64xf32> to vector<8x32xf32>
    %572 = arith.index_cast %c2_i32_173 : i32 to index
    %c0_183 = arith.constant 0 : index
    %c0_184 = arith.constant 0 : index
    %573 = vector.load %arg10[%572, %c0_183, %c0_184] : memref<8x8x64xf32, #tpu.memory_space<vmem>>, vector<1x8x32xf32>
    %574 = vector.shape_cast %573 : vector<1x8x32xf32> to vector<8x32xf32>
    %575 = vector.shape_cast %571 : vector<8x32xf32> to vector<1x8x32xf32>
    tpu.vector_store %arg10[%572, %c0_183, %c0_184], %575 {strides = array<i32>} : memref<8x8x64xf32, #tpu.memory_space<vmem>>, vector<1x8x32xf32>,
    %576 = vector.extract_strided_slice %570 {offsets = [0, 32], sizes = [8, 32], strides = [1, 1]} : vector<8x64xf32> to vector<8x32xf32>
    %577 = arith.index_cast %534 : i32 to index
    %c0_185 = arith.constant 0 : index
    %c32_186 = arith.constant 32 : index
    %578 = vector.load %arg10[%577, %c0_185, %c32_186] : memref<8x8x64xf32, #tpu.memory_space<vmem>>, vector<1x8x32xf32>
    %579 = vector.shape_cast %578 : vector<1x8x32xf32> to vector<8x32xf32>
    %580 = vector.shape_cast %576 : vector<8x32xf32> to vector<1x8x32xf32>
    tpu.vector_store %arg10[%577, %c0_185, %c32_186], %580 {strides = array<i32>} : memref<8x8x64xf32, #tpu.memory_space<vmem>>, vector<1x8x32xf32>,
    %c3_i32_187 = arith.constant 3 : i32
    %c7_i32_188 = arith.constant 7 : i32
    %581 = arith.subi %c7_i32_188, %c3_i32_187 : i32
    %582 = arith.index_cast %c3_i32_187 : i32 to index
    %c0_189 = arith.constant 0 : index
    %c0_190 = arith.constant 0 : index
    %583 = vector.load %arg9[%582, %c0_189, %c0_190] : memref<8x8x256xf32, #tpu.memory_space<vmem>>, vector<1x8x256xf32>
    %584 = vector.shape_cast %583 : vector<1x8x256xf32> to vector<8x256xf32>
    %585 = arith.index_cast %581 : i32 to index
    %c0_191 = arith.constant 0 : index
    %c0_192 = arith.constant 0 : index
    %586 = vector.load %arg9[%585, %c0_191, %c0_192] : memref<8x8x256xf32, #tpu.memory_space<vmem>>, vector<1x8x256xf32>
    %587 = vector.shape_cast %586 : vector<1x8x256xf32> to vector<8x256xf32>
    %588 = arith.select %34, %584, %587 : vector<8x256xi1>, vector<8x256xf32>
    %589 = arith.truncf %566 : vector<8x64xf32> to vector<8x64xbf16>
    %cst_193 = arith.constant dense<0.000000e+00> : vector<8x256xf32>
    %590 = tpu.matmul %589, %438, %cst_193 {dimension_numbers = #tpu.dot_dimension_numbers<[1], [0], [0], [1], [0, 0, 1, 1], [], []>} : vector<8x64xbf16>, vector<64x256xbf16>, vector<8x256xf32> -> vector<8x256xf32>
    %591 = arith.addf %588, %590 : vector<8x256xf32>
    %592 = vector.extract_strided_slice %591 {offsets = [0, 0], sizes = [8, 192], strides = [1, 1]} : vector<8x256xf32> to vector<8x192xf32>
    %593 = arith.negf %592 : vector<8x192xf32>
    %594 = math.exp %593 : vector<8x192xf32>
    %cst_194 = arith.constant 1.000000e+00 : f32
    %595 = vector.broadcast %cst_194 : f32 to vector<8x192xf32>
    %596 = arith.addf %595, %594 : vector<8x192xf32>
    %597 = arith.divf %595, %596 : vector<8x192xf32>
    %598 = vector.extract_strided_slice %591 {offsets = [0, 192], sizes = [8, 64], strides = [1, 1]} : vector<8x256xf32> to vector<8x64xf32>
    %599 = math.tanh %598 : vector<8x64xf32>
    %600 = vector.extract_strided_slice %597 {offsets = [0, 0], sizes = [8, 64], strides = [1, 1]} : vector<8x192xf32> to vector<8x64xf32>
    %601 = vector.extract_strided_slice %597 {offsets = [0, 64], sizes = [8, 64], strides = [1, 1]} : vector<8x192xf32> to vector<8x64xf32>
    %602 = vector.extract_strided_slice %597 {offsets = [0, 128], sizes = [8, 64], strides = [1, 1]} : vector<8x192xf32> to vector<8x64xf32>
    %603 = arith.mulf %601, %569 : vector<8x64xf32>
    %604 = arith.mulf %600, %599 : vector<8x64xf32>
    %605 = arith.addf %603, %604 : vector<8x64xf32>
    %606 = math.tanh %605 : vector<8x64xf32>
    %607 = arith.mulf %602, %606 : vector<8x64xf32>
    %608 = arith.index_cast %c3_i32_187 : i32 to index
    %c0_195 = arith.constant 0 : index
    %c0_196 = arith.constant 0 : index
    %609 = vector.load %arg11[%608, %c0_195, %c0_196] : memref<8x8x64xf32, #tpu.memory_space<vmem>>, vector<1x8x64xf32>
    %610 = vector.shape_cast %609 : vector<1x8x64xf32> to vector<8x64xf32>
    %611 = arith.subf %607, %566 : vector<8x64xf32>
    %612 = arith.mulf %610, %611 : vector<8x64xf32>
    %613 = arith.addf %566, %612 : vector<8x64xf32>
    %614 = arith.subf %605, %569 : vector<8x64xf32>
    %615 = arith.mulf %610, %614 : vector<8x64xf32>
    %616 = arith.addf %569, %615 : vector<8x64xf32>
    %617 = arith.mulf %610, %607 : vector<8x64xf32>
    %618 = vector.extract_strided_slice %617 {offsets = [0, 0], sizes = [8, 32], strides = [1, 1]} : vector<8x64xf32> to vector<8x32xf32>
    %619 = arith.index_cast %c3_i32_187 : i32 to index
    %c0_197 = arith.constant 0 : index
    %c0_198 = arith.constant 0 : index
    %620 = vector.load %arg10[%619, %c0_197, %c0_198] : memref<8x8x64xf32, #tpu.memory_space<vmem>>, vector<1x8x32xf32>
    %621 = vector.shape_cast %620 : vector<1x8x32xf32> to vector<8x32xf32>
    %622 = vector.shape_cast %618 : vector<8x32xf32> to vector<1x8x32xf32>
    tpu.vector_store %arg10[%619, %c0_197, %c0_198], %622 {strides = array<i32>} : memref<8x8x64xf32, #tpu.memory_space<vmem>>, vector<1x8x32xf32>,
    %623 = vector.extract_strided_slice %617 {offsets = [0, 32], sizes = [8, 32], strides = [1, 1]} : vector<8x64xf32> to vector<8x32xf32>
    %624 = arith.index_cast %581 : i32 to index
    %c0_199 = arith.constant 0 : index
    %c32_200 = arith.constant 32 : index
    %625 = vector.load %arg10[%624, %c0_199, %c32_200] : memref<8x8x64xf32, #tpu.memory_space<vmem>>, vector<1x8x32xf32>
    %626 = vector.shape_cast %625 : vector<1x8x32xf32> to vector<8x32xf32>
    %627 = vector.shape_cast %623 : vector<8x32xf32> to vector<1x8x32xf32>
    tpu.vector_store %arg10[%624, %c0_199, %c32_200], %627 {strides = array<i32>} : memref<8x8x64xf32, #tpu.memory_space<vmem>>, vector<1x8x32xf32>,
    %c4_i32_201 = arith.constant 4 : i32
    %c7_i32_202 = arith.constant 7 : i32
    %628 = arith.subi %c7_i32_202, %c4_i32_201 : i32
    %629 = arith.index_cast %c4_i32_201 : i32 to index
    %c0_203 = arith.constant 0 : index
    %c0_204 = arith.constant 0 : index
    %630 = vector.load %arg9[%629, %c0_203, %c0_204] : memref<8x8x256xf32, #tpu.memory_space<vmem>>, vector<1x8x256xf32>
    %631 = vector.shape_cast %630 : vector<1x8x256xf32> to vector<8x256xf32>
    %632 = arith.index_cast %628 : i32 to index
    %c0_205 = arith.constant 0 : index
    %c0_206 = arith.constant 0 : index
    %633 = vector.load %arg9[%632, %c0_205, %c0_206] : memref<8x8x256xf32, #tpu.memory_space<vmem>>, vector<1x8x256xf32>
    %634 = vector.shape_cast %633 : vector<1x8x256xf32> to vector<8x256xf32>
    %635 = arith.select %34, %631, %634 : vector<8x256xi1>, vector<8x256xf32>
    %636 = arith.truncf %613 : vector<8x64xf32> to vector<8x64xbf16>
    %cst_207 = arith.constant dense<0.000000e+00> : vector<8x256xf32>
    %637 = tpu.matmul %636, %438, %cst_207 {dimension_numbers = #tpu.dot_dimension_numbers<[1], [0], [0], [1], [0, 0, 1, 1], [], []>} : vector<8x64xbf16>, vector<64x256xbf16>, vector<8x256xf32> -> vector<8x256xf32>
    %638 = arith.addf %635, %637 : vector<8x256xf32>
    %639 = vector.extract_strided_slice %638 {offsets = [0, 0], sizes = [8, 192], strides = [1, 1]} : vector<8x256xf32> to vector<8x192xf32>
    %640 = arith.negf %639 : vector<8x192xf32>
    %641 = math.exp %640 : vector<8x192xf32>
    %cst_208 = arith.constant 1.000000e+00 : f32
    %642 = vector.broadcast %cst_208 : f32 to vector<8x192xf32>
    %643 = arith.addf %642, %641 : vector<8x192xf32>
    %644 = arith.divf %642, %643 : vector<8x192xf32>
    %645 = vector.extract_strided_slice %638 {offsets = [0, 192], sizes = [8, 64], strides = [1, 1]} : vector<8x256xf32> to vector<8x64xf32>
    %646 = math.tanh %645 : vector<8x64xf32>
    %647 = vector.extract_strided_slice %644 {offsets = [0, 0], sizes = [8, 64], strides = [1, 1]} : vector<8x192xf32> to vector<8x64xf32>
    %648 = vector.extract_strided_slice %644 {offsets = [0, 64], sizes = [8, 64], strides = [1, 1]} : vector<8x192xf32> to vector<8x64xf32>
    %649 = vector.extract_strided_slice %644 {offsets = [0, 128], sizes = [8, 64], strides = [1, 1]} : vector<8x192xf32> to vector<8x64xf32>
    %650 = arith.mulf %648, %616 : vector<8x64xf32>
    %651 = arith.mulf %647, %646 : vector<8x64xf32>
    %652 = arith.addf %650, %651 : vector<8x64xf32>
    %653 = math.tanh %652 : vector<8x64xf32>
    %654 = arith.mulf %649, %653 : vector<8x64xf32>
    %655 = arith.index_cast %c4_i32_201 : i32 to index
    %c0_209 = arith.constant 0 : index
    %c0_210 = arith.constant 0 : index
    %656 = vector.load %arg11[%655, %c0_209, %c0_210] : memref<8x8x64xf32, #tpu.memory_space<vmem>>, vector<1x8x64xf32>
    %657 = vector.shape_cast %656 : vector<1x8x64xf32> to vector<8x64xf32>
    %658 = arith.subf %654, %613 : vector<8x64xf32>
    %659 = arith.mulf %657, %658 : vector<8x64xf32>
    %660 = arith.addf %613, %659 : vector<8x64xf32>
    %661 = arith.subf %652, %616 : vector<8x64xf32>
    %662 = arith.mulf %657, %661 : vector<8x64xf32>
    %663 = arith.addf %616, %662 : vector<8x64xf32>
    %664 = arith.mulf %657, %654 : vector<8x64xf32>
    %665 = vector.extract_strided_slice %664 {offsets = [0, 0], sizes = [8, 32], strides = [1, 1]} : vector<8x64xf32> to vector<8x32xf32>
    %666 = arith.index_cast %c4_i32_201 : i32 to index
    %c0_211 = arith.constant 0 : index
    %c0_212 = arith.constant 0 : index
    %667 = vector.load %arg10[%666, %c0_211, %c0_212] : memref<8x8x64xf32, #tpu.memory_space<vmem>>, vector<1x8x32xf32>
    %668 = vector.shape_cast %667 : vector<1x8x32xf32> to vector<8x32xf32>
    %669 = vector.shape_cast %665 : vector<8x32xf32> to vector<1x8x32xf32>
    tpu.vector_store %arg10[%666, %c0_211, %c0_212], %669 {strides = array<i32>} : memref<8x8x64xf32, #tpu.memory_space<vmem>>, vector<1x8x32xf32>,
    %670 = vector.extract_strided_slice %664 {offsets = [0, 32], sizes = [8, 32], strides = [1, 1]} : vector<8x64xf32> to vector<8x32xf32>
    %671 = arith.index_cast %628 : i32 to index
    %c0_213 = arith.constant 0 : index
    %c32_214 = arith.constant 32 : index
    %672 = vector.load %arg10[%671, %c0_213, %c32_214] : memref<8x8x64xf32, #tpu.memory_space<vmem>>, vector<1x8x32xf32>
    %673 = vector.shape_cast %672 : vector<1x8x32xf32> to vector<8x32xf32>
    %674 = vector.shape_cast %670 : vector<8x32xf32> to vector<1x8x32xf32>
    tpu.vector_store %arg10[%671, %c0_213, %c32_214], %674 {strides = array<i32>} : memref<8x8x64xf32, #tpu.memory_space<vmem>>, vector<1x8x32xf32>,
    %c5_i32_215 = arith.constant 5 : i32
    %c7_i32_216 = arith.constant 7 : i32
    %675 = arith.subi %c7_i32_216, %c5_i32_215 : i32
    %676 = arith.index_cast %c5_i32_215 : i32 to index
    %c0_217 = arith.constant 0 : index
    %c0_218 = arith.constant 0 : index
    %677 = vector.load %arg9[%676, %c0_217, %c0_218] : memref<8x8x256xf32, #tpu.memory_space<vmem>>, vector<1x8x256xf32>
    %678 = vector.shape_cast %677 : vector<1x8x256xf32> to vector<8x256xf32>
    %679 = arith.index_cast %675 : i32 to index
    %c0_219 = arith.constant 0 : index
    %c0_220 = arith.constant 0 : index
    %680 = vector.load %arg9[%679, %c0_219, %c0_220] : memref<8x8x256xf32, #tpu.memory_space<vmem>>, vector<1x8x256xf32>
    %681 = vector.shape_cast %680 : vector<1x8x256xf32> to vector<8x256xf32>
    %682 = arith.select %34, %678, %681 : vector<8x256xi1>, vector<8x256xf32>
    %683 = arith.truncf %660 : vector<8x64xf32> to vector<8x64xbf16>
    %cst_221 = arith.constant dense<0.000000e+00> : vector<8x256xf32>
    %684 = tpu.matmul %683, %438, %cst_221 {dimension_numbers = #tpu.dot_dimension_numbers<[1], [0], [0], [1], [0, 0, 1, 1], [], []>} : vector<8x64xbf16>, vector<64x256xbf16>, vector<8x256xf32> -> vector<8x256xf32>
    %685 = arith.addf %682, %684 : vector<8x256xf32>
    %686 = vector.extract_strided_slice %685 {offsets = [0, 0], sizes = [8, 192], strides = [1, 1]} : vector<8x256xf32> to vector<8x192xf32>
    %687 = arith.negf %686 : vector<8x192xf32>
    %688 = math.exp %687 : vector<8x192xf32>
    %cst_222 = arith.constant 1.000000e+00 : f32
    %689 = vector.broadcast %cst_222 : f32 to vector<8x192xf32>
    %690 = arith.addf %689, %688 : vector<8x192xf32>
    %691 = arith.divf %689, %690 : vector<8x192xf32>
    %692 = vector.extract_strided_slice %685 {offsets = [0, 192], sizes = [8, 64], strides = [1, 1]} : vector<8x256xf32> to vector<8x64xf32>
    %693 = math.tanh %692 : vector<8x64xf32>
    %694 = vector.extract_strided_slice %691 {offsets = [0, 0], sizes = [8, 64], strides = [1, 1]} : vector<8x192xf32> to vector<8x64xf32>
    %695 = vector.extract_strided_slice %691 {offsets = [0, 64], sizes = [8, 64], strides = [1, 1]} : vector<8x192xf32> to vector<8x64xf32>
    %696 = vector.extract_strided_slice %691 {offsets = [0, 128], sizes = [8, 64], strides = [1, 1]} : vector<8x192xf32> to vector<8x64xf32>
    %697 = arith.mulf %695, %663 : vector<8x64xf32>
    %698 = arith.mulf %694, %693 : vector<8x64xf32>
    %699 = arith.addf %697, %698 : vector<8x64xf32>
    %700 = math.tanh %699 : vector<8x64xf32>
    %701 = arith.mulf %696, %700 : vector<8x64xf32>
    %702 = arith.index_cast %c5_i32_215 : i32 to index
    %c0_223 = arith.constant 0 : index
    %c0_224 = arith.constant 0 : index
    %703 = vector.load %arg11[%702, %c0_223, %c0_224] : memref<8x8x64xf32, #tpu.memory_space<vmem>>, vector<1x8x64xf32>
    %704 = vector.shape_cast %703 : vector<1x8x64xf32> to vector<8x64xf32>
    %705 = arith.subf %701, %660 : vector<8x64xf32>
    %706 = arith.mulf %704, %705 : vector<8x64xf32>
    %707 = arith.addf %660, %706 : vector<8x64xf32>
    %708 = arith.subf %699, %663 : vector<8x64xf32>
    %709 = arith.mulf %704, %708 : vector<8x64xf32>
    %710 = arith.addf %663, %709 : vector<8x64xf32>
    %711 = arith.mulf %704, %701 : vector<8x64xf32>
    %712 = vector.extract_strided_slice %711 {offsets = [0, 0], sizes = [8, 32], strides = [1, 1]} : vector<8x64xf32> to vector<8x32xf32>
    %713 = arith.index_cast %c5_i32_215 : i32 to index
    %c0_225 = arith.constant 0 : index
    %c0_226 = arith.constant 0 : index
    %714 = vector.load %arg10[%713, %c0_225, %c0_226] : memref<8x8x64xf32, #tpu.memory_space<vmem>>, vector<1x8x32xf32>
    %715 = vector.shape_cast %714 : vector<1x8x32xf32> to vector<8x32xf32>
    %716 = vector.shape_cast %712 : vector<8x32xf32> to vector<1x8x32xf32>
    tpu.vector_store %arg10[%713, %c0_225, %c0_226], %716 {strides = array<i32>} : memref<8x8x64xf32, #tpu.memory_space<vmem>>, vector<1x8x32xf32>,
    %717 = vector.extract_strided_slice %711 {offsets = [0, 32], sizes = [8, 32], strides = [1, 1]} : vector<8x64xf32> to vector<8x32xf32>
    %718 = arith.index_cast %675 : i32 to index
    %c0_227 = arith.constant 0 : index
    %c32_228 = arith.constant 32 : index
    %719 = vector.load %arg10[%718, %c0_227, %c32_228] : memref<8x8x64xf32, #tpu.memory_space<vmem>>, vector<1x8x32xf32>
    %720 = vector.shape_cast %719 : vector<1x8x32xf32> to vector<8x32xf32>
    %721 = vector.shape_cast %717 : vector<8x32xf32> to vector<1x8x32xf32>
    tpu.vector_store %arg10[%718, %c0_227, %c32_228], %721 {strides = array<i32>} : memref<8x8x64xf32, #tpu.memory_space<vmem>>, vector<1x8x32xf32>,
    %c6_i32_229 = arith.constant 6 : i32
    %c7_i32_230 = arith.constant 7 : i32
    %722 = arith.subi %c7_i32_230, %c6_i32_229 : i32
    %723 = arith.index_cast %c6_i32_229 : i32 to index
    %c0_231 = arith.constant 0 : index
    %c0_232 = arith.constant 0 : index
    %724 = vector.load %arg9[%723, %c0_231, %c0_232] : memref<8x8x256xf32, #tpu.memory_space<vmem>>, vector<1x8x256xf32>
    %725 = vector.shape_cast %724 : vector<1x8x256xf32> to vector<8x256xf32>
    %726 = arith.index_cast %722 : i32 to index
    %c0_233 = arith.constant 0 : index
    %c0_234 = arith.constant 0 : index
    %727 = vector.load %arg9[%726, %c0_233, %c0_234] : memref<8x8x256xf32, #tpu.memory_space<vmem>>, vector<1x8x256xf32>
    %728 = vector.shape_cast %727 : vector<1x8x256xf32> to vector<8x256xf32>
    %729 = arith.select %34, %725, %728 : vector<8x256xi1>, vector<8x256xf32>
    %730 = arith.truncf %707 : vector<8x64xf32> to vector<8x64xbf16>
    %cst_235 = arith.constant dense<0.000000e+00> : vector<8x256xf32>
    %731 = tpu.matmul %730, %438, %cst_235 {dimension_numbers = #tpu.dot_dimension_numbers<[1], [0], [0], [1], [0, 0, 1, 1], [], []>} : vector<8x64xbf16>, vector<64x256xbf16>, vector<8x256xf32> -> vector<8x256xf32>
    %732 = arith.addf %729, %731 : vector<8x256xf32>
    %733 = vector.extract_strided_slice %732 {offsets = [0, 0], sizes = [8, 192], strides = [1, 1]} : vector<8x256xf32> to vector<8x192xf32>
    %734 = arith.negf %733 : vector<8x192xf32>
    %735 = math.exp %734 : vector<8x192xf32>
    %cst_236 = arith.constant 1.000000e+00 : f32
    %736 = vector.broadcast %cst_236 : f32 to vector<8x192xf32>
    %737 = arith.addf %736, %735 : vector<8x192xf32>
    %738 = arith.divf %736, %737 : vector<8x192xf32>
    %739 = vector.extract_strided_slice %732 {offsets = [0, 192], sizes = [8, 64], strides = [1, 1]} : vector<8x256xf32> to vector<8x64xf32>
    %740 = math.tanh %739 : vector<8x64xf32>
    %741 = vector.extract_strided_slice %738 {offsets = [0, 0], sizes = [8, 64], strides = [1, 1]} : vector<8x192xf32> to vector<8x64xf32>
    %742 = vector.extract_strided_slice %738 {offsets = [0, 64], sizes = [8, 64], strides = [1, 1]} : vector<8x192xf32> to vector<8x64xf32>
    %743 = vector.extract_strided_slice %738 {offsets = [0, 128], sizes = [8, 64], strides = [1, 1]} : vector<8x192xf32> to vector<8x64xf32>
    %744 = arith.mulf %742, %710 : vector<8x64xf32>
    %745 = arith.mulf %741, %740 : vector<8x64xf32>
    %746 = arith.addf %744, %745 : vector<8x64xf32>
    %747 = math.tanh %746 : vector<8x64xf32>
    %748 = arith.mulf %743, %747 : vector<8x64xf32>
    %749 = arith.index_cast %c6_i32_229 : i32 to index
    %c0_237 = arith.constant 0 : index
    %c0_238 = arith.constant 0 : index
    %750 = vector.load %arg11[%749, %c0_237, %c0_238] : memref<8x8x64xf32, #tpu.memory_space<vmem>>, vector<1x8x64xf32>
    %751 = vector.shape_cast %750 : vector<1x8x64xf32> to vector<8x64xf32>
    %752 = arith.subf %748, %707 : vector<8x64xf32>
    %753 = arith.mulf %751, %752 : vector<8x64xf32>
    %754 = arith.addf %707, %753 : vector<8x64xf32>
    %755 = arith.subf %746, %710 : vector<8x64xf32>
    %756 = arith.mulf %751, %755 : vector<8x64xf32>
    %757 = arith.addf %710, %756 : vector<8x64xf32>
    %758 = arith.mulf %751, %748 : vector<8x64xf32>
    %759 = vector.extract_strided_slice %758 {offsets = [0, 0], sizes = [8, 32], strides = [1, 1]} : vector<8x64xf32> to vector<8x32xf32>
    %760 = arith.index_cast %c6_i32_229 : i32 to index
    %c0_239 = arith.constant 0 : index
    %c0_240 = arith.constant 0 : index
    %761 = vector.load %arg10[%760, %c0_239, %c0_240] : memref<8x8x64xf32, #tpu.memory_space<vmem>>, vector<1x8x32xf32>
    %762 = vector.shape_cast %761 : vector<1x8x32xf32> to vector<8x32xf32>
    %763 = vector.shape_cast %759 : vector<8x32xf32> to vector<1x8x32xf32>
    tpu.vector_store %arg10[%760, %c0_239, %c0_240], %763 {strides = array<i32>} : memref<8x8x64xf32, #tpu.memory_space<vmem>>, vector<1x8x32xf32>,
    %764 = vector.extract_strided_slice %758 {offsets = [0, 32], sizes = [8, 32], strides = [1, 1]} : vector<8x64xf32> to vector<8x32xf32>
    %765 = arith.index_cast %722 : i32 to index
    %c0_241 = arith.constant 0 : index
    %c32_242 = arith.constant 32 : index
    %766 = vector.load %arg10[%765, %c0_241, %c32_242] : memref<8x8x64xf32, #tpu.memory_space<vmem>>, vector<1x8x32xf32>
    %767 = vector.shape_cast %766 : vector<1x8x32xf32> to vector<8x32xf32>
    %768 = vector.shape_cast %764 : vector<8x32xf32> to vector<1x8x32xf32>
    tpu.vector_store %arg10[%765, %c0_241, %c32_242], %768 {strides = array<i32>} : memref<8x8x64xf32, #tpu.memory_space<vmem>>, vector<1x8x32xf32>,
    %c7_i32_243 = arith.constant 7 : i32
    %c7_i32_244 = arith.constant 7 : i32
    %769 = arith.subi %c7_i32_244, %c7_i32_243 : i32
    %770 = arith.index_cast %c7_i32_243 : i32 to index
    %c0_245 = arith.constant 0 : index
    %c0_246 = arith.constant 0 : index
    %771 = vector.load %arg9[%770, %c0_245, %c0_246] : memref<8x8x256xf32, #tpu.memory_space<vmem>>, vector<1x8x256xf32>
    %772 = vector.shape_cast %771 : vector<1x8x256xf32> to vector<8x256xf32>
    %773 = arith.index_cast %769 : i32 to index
    %c0_247 = arith.constant 0 : index
    %c0_248 = arith.constant 0 : index
    %774 = vector.load %arg9[%773, %c0_247, %c0_248] : memref<8x8x256xf32, #tpu.memory_space<vmem>>, vector<1x8x256xf32>
    %775 = vector.shape_cast %774 : vector<1x8x256xf32> to vector<8x256xf32>
    %776 = arith.select %34, %772, %775 : vector<8x256xi1>, vector<8x256xf32>
    %777 = arith.truncf %754 : vector<8x64xf32> to vector<8x64xbf16>
    %cst_249 = arith.constant dense<0.000000e+00> : vector<8x256xf32>
    %778 = tpu.matmul %777, %438, %cst_249 {dimension_numbers = #tpu.dot_dimension_numbers<[1], [0], [0], [1], [0, 0, 1, 1], [], []>} : vector<8x64xbf16>, vector<64x256xbf16>, vector<8x256xf32> -> vector<8x256xf32>
    %779 = arith.addf %776, %778 : vector<8x256xf32>
    %780 = vector.extract_strided_slice %779 {offsets = [0, 0], sizes = [8, 192], strides = [1, 1]} : vector<8x256xf32> to vector<8x192xf32>
    %781 = arith.negf %780 : vector<8x192xf32>
    %782 = math.exp %781 : vector<8x192xf32>
    %cst_250 = arith.constant 1.000000e+00 : f32
    %783 = vector.broadcast %cst_250 : f32 to vector<8x192xf32>
    %784 = arith.addf %783, %782 : vector<8x192xf32>
    %785 = arith.divf %783, %784 : vector<8x192xf32>
    %786 = vector.extract_strided_slice %779 {offsets = [0, 192], sizes = [8, 64], strides = [1, 1]} : vector<8x256xf32> to vector<8x64xf32>
    %787 = math.tanh %786 : vector<8x64xf32>
    %788 = vector.extract_strided_slice %785 {offsets = [0, 0], sizes = [8, 64], strides = [1, 1]} : vector<8x192xf32> to vector<8x64xf32>
    %789 = vector.extract_strided_slice %785 {offsets = [0, 64], sizes = [8, 64], strides = [1, 1]} : vector<8x192xf32> to vector<8x64xf32>
    %790 = vector.extract_strided_slice %785 {offsets = [0, 128], sizes = [8, 64], strides = [1, 1]} : vector<8x192xf32> to vector<8x64xf32>
    %791 = arith.mulf %789, %757 : vector<8x64xf32>
    %792 = arith.mulf %788, %787 : vector<8x64xf32>
    %793 = arith.addf %791, %792 : vector<8x64xf32>
    %794 = math.tanh %793 : vector<8x64xf32>
    %795 = arith.mulf %790, %794 : vector<8x64xf32>
    %796 = arith.index_cast %c7_i32_243 : i32 to index
    %c0_251 = arith.constant 0 : index
    %c0_252 = arith.constant 0 : index
    %797 = vector.load %arg11[%796, %c0_251, %c0_252] : memref<8x8x64xf32, #tpu.memory_space<vmem>>, vector<1x8x64xf32>
    %798 = vector.shape_cast %797 : vector<1x8x64xf32> to vector<8x64xf32>
    %799 = arith.subf %795, %754 : vector<8x64xf32>
    %800 = arith.mulf %798, %799 : vector<8x64xf32>
    %801 = arith.addf %754, %800 : vector<8x64xf32>
    %802 = arith.subf %793, %757 : vector<8x64xf32>
    %803 = arith.mulf %798, %802 : vector<8x64xf32>
    %804 = arith.addf %757, %803 : vector<8x64xf32>
    %805 = arith.mulf %798, %795 : vector<8x64xf32>
    %806 = vector.extract_strided_slice %805 {offsets = [0, 0], sizes = [8, 32], strides = [1, 1]} : vector<8x64xf32> to vector<8x32xf32>
    %807 = arith.index_cast %c7_i32_243 : i32 to index
    %c0_253 = arith.constant 0 : index
    %c0_254 = arith.constant 0 : index
    %808 = vector.load %arg10[%807, %c0_253, %c0_254] : memref<8x8x64xf32, #tpu.memory_space<vmem>>, vector<1x8x32xf32>
    %809 = vector.shape_cast %808 : vector<1x8x32xf32> to vector<8x32xf32>
    %810 = vector.shape_cast %806 : vector<8x32xf32> to vector<1x8x32xf32>
    tpu.vector_store %arg10[%807, %c0_253, %c0_254], %810 {strides = array<i32>} : memref<8x8x64xf32, #tpu.memory_space<vmem>>, vector<1x8x32xf32>,
    %811 = vector.extract_strided_slice %805 {offsets = [0, 32], sizes = [8, 32], strides = [1, 1]} : vector<8x64xf32> to vector<8x32xf32>
    %812 = arith.index_cast %769 : i32 to index
    %c0_255 = arith.constant 0 : index
    %c32_256 = arith.constant 32 : index
    %813 = vector.load %arg10[%812, %c0_255, %c32_256] : memref<8x8x64xf32, #tpu.memory_space<vmem>>, vector<1x8x32xf32>
    %814 = vector.shape_cast %813 : vector<1x8x32xf32> to vector<8x32xf32>
    %815 = vector.shape_cast %811 : vector<8x32xf32> to vector<1x8x32xf32>
    tpu.vector_store %arg10[%812, %c0_255, %c32_256], %815 {strides = array<i32>} : memref<8x8x64xf32, #tpu.memory_space<vmem>>, vector<1x8x32xf32>,
    %c8_i32_257 = arith.constant 8 : i32
    %c7 = arith.constant 7 : index
    %c0_258 = arith.constant 0 : index
    %c0_259 = arith.constant 0 : index
    %816 = vector.load %arg10[%c7, %c0_258, %c0_259] : memref<8x8x64xf32, #tpu.memory_space<vmem>>, vector<1x8x64xf32>
    %817 = vector.shape_cast %816 : vector<1x8x64xf32> to vector<8x64xf32>
    %818 = arith.truncf %817 : vector<8x64xf32> to vector<8x64xbf16>
    %c0_260 = arith.constant 0 : index
    %c0_261 = arith.constant 0 : index
    %819 = vector.load %arg5[%c0_260, %c0_261] : memref<64x3xbf16, #tpu.memory_space<vmem>>, vector<64x3xbf16>
    %cst_262 = arith.constant dense<0.000000e+00> : vector<8x3xf32>
    %820 = tpu.matmul %818, %819, %cst_262 {dimension_numbers = #tpu.dot_dimension_numbers<[1], [0], [0], [1], [0, 0, 1, 1], [], []>} : vector<8x64xbf16>, vector<64x3xbf16>, vector<8x3xf32> -> vector<8x3xf32>
    %c0_263 = arith.constant 0 : index
    %c0_264 = arith.constant 0 : index
    %821 = vector.load %arg6[%c0_263, %c0_264] : memref<1x3xf32, #tpu.memory_space<vmem>>, vector<1x3xf32>
    %822 = vector.broadcast %821 : vector<1x3xf32> to vector<8x3xf32>
    %823 = arith.addf %820, %822 : vector<8x3xf32>
    %824 = arith.negf %823 : vector<8x3xf32>
    %825 = math.exp %824 : vector<8x3xf32>
    %cst_265 = arith.constant 1.000000e+00 : f32
    %826 = vector.broadcast %cst_265 : f32 to vector<8x3xf32>
    %827 = arith.addf %826, %825 : vector<8x3xf32>
    %828 = arith.divf %826, %827 : vector<8x3xf32>
    %c0_266 = arith.constant 0 : index
    %c0_267 = arith.constant 0 : index
    %829 = vector.load %arg8[%c0_266, %c0_267] : memref<8x3xf32, #tpu.memory_space<vmem>>, vector<8x3xf32>
    tpu.vector_store %arg8[%c0_266, %c0_267], %828 {strides = array<i32>} : memref<8x3xf32, #tpu.memory_space<vmem>>, vector<8x3xf32>,
    return
  }
}

</mosaic_0001>

<llo_original>
// kernel: tpu_custom_call.1
$region0: #{tpu_custom_call.1}
  #allocation0 [shape = 'u32[]', space=smem, size = 0x4, offset = 0x4, fixed_abs, tag = 'smem constant byte address 0x4 - core index']
  #allocation1 [shape = 'u32[72,128]{1,0:T(1,128)}', space=vmem, size = 0x9000, scoped, tag = 'internal scratch']
  #allocation2 [shape = 'f32[8,8,256]{2,1,0:T(8,128)}', space=vmem, size = 0x10000, scoped, tag = 'scratch operand']
  #allocation3 [shape = 'f32[8,8,64]{2,1,0:T(8,128)}', space=vmem, size = 0x8000, scoped, tag = 'scratch operand']
  #allocation4 [shape = 'f32[8,8,64]{2,1,0:T(8,128)}', space=vmem, size = 0x8000, scoped, tag = 'scratch operand']
  %s0 = inlined_call_operand.hbm [shape: f32[8,8,8], index: 0, kind: input, shape index: {}]
  %s1 = inlined_call_operand.vmem [shape: bf16[8,256], index: 1, kind: input, shape index: {}]
  %s2 = inlined_call_operand.hbm [shape: bf16[1,64,256], index: 2, kind: input, shape index: {}]
  %s3 = inlined_call_operand.hbm [shape: bf16[2,64,256], index: 3, kind: input, shape index: {}]
  %s4 = inlined_call_operand.vmem [shape: f32[2,1,256], index: 4, kind: input, shape index: {}]
  %s5 = inlined_call_operand.vmem [shape: bf16[64,3], index: 5, kind: input, shape index: {}]
  %s6 = inlined_call_operand.vmem [shape: f32[1,3], index: 6, kind: input, shape index: {}]
  %s7 = inlined_call_operand.vmem [shape: s32[8,1], index: 7, kind: input, shape index: {}]
  %s8 = inlined_call_operand.vmem [shape: f32[8,3], index: 8, kind: output, shape index: {}]
  %s9 = sld [smem:[#allocation0]]
  $region54: #{tpu_custom_call.1} parent=0
    _
  %s11 = ssub.s32 1, %s9
  %s12 = scalar_select 0, %s11, %s9
  $region1: #{tpu_custom_call.1} parent=0
    #allocation5 [shape = 'u8[32768]{0}', space=vmem, size = 0x8000, scoped, tag = 'input window, operand 0, single buffered']
    #allocation6 [shape = 's32[1]{0}', space=sflag, size = 0x4, scoped, tag = 'scoped memory for tpu_custom_call.1']
    #allocation7 [shape = 'u8[32768]{0}', space=vmem, size = 0x8000, scoped, tag = 'input window, operand 2, single buffered']
    #allocation8 [shape = 's32[1]{0}', space=sflag, size = 0x4, scoped, tag = 'scoped memory for tpu_custom_call.1']
    #allocation9 [shape = 'u8[65536]{0}', space=vmem, size = 0x10000, scoped, tag = 'input window, operand 3, single buffered']
    %13 = vsyncpa [#allocation6], 0
    %14 = vsyncpa [#allocation8], 0
    // Predicated region
    $region2: #{tpu_custom_call.1} parent=1 // pred_check
      _
    $region3: #{tpu_custom_call.1} parent=1 // pred_check_branch
      %16 = sbr.rel (0) target = $region5
    $region4: #{tpu_custom_call.1} parent=1 // pred_region
      %18 = vsyncadd [#allocation6], 0
      %s19 = sshll.u32 %s0, 4
      %s20 = int_to_ptr.hbm [resolvable:$true] %s19
      %s21 = sshll.u32 [#allocation5], 4
      %s22 = int_to_ptr.vmem [resolvable:$true] %s21
      %27 = dma.hbm_to_vmem [thread:$0]  %s20, 1024, %s22, [#allocation6], 128, 128, 8
    $region5: #{tpu_custom_call.1} parent=1 // pred_fallthru
      _
    // Predicated region
    $region6: #{tpu_custom_call.1} parent=1 // pred_check
      _
    $region7: #{tpu_custom_call.1} parent=1 // pred_check_branch
      %29 = sbr.rel (0) target = $region9
    $region8: #{tpu_custom_call.1} parent=1 // pred_region
      _
    $region9: #{tpu_custom_call.1} parent=1 // pred_fallthru
      _
    // Predicated region
    $region10: #{tpu_custom_call.1} parent=1 // pred_check
      _
    $region11: #{tpu_custom_call.1} parent=1 // pred_check_branch
      %31 = sbr.rel (0) target = $region13
    $region12: #{tpu_custom_call.1} parent=1 // pred_region
      %33 = vsyncadd [#allocation8], 0
      %s34 = sshll.u32 %s2, 4
      %s35 = int_to_ptr.hbm [resolvable:$true] %s34
      %s36 = sshll.u32 [#allocation7], 4
      %s37 = int_to_ptr.vmem [resolvable:$true] %s36
      %42 = dma.hbm_to_vmem [thread:$0]  %s35, 1024, %s37, [#allocation8], 128, 128, 8
    $region13: #{tpu_custom_call.1} parent=1 // pred_fallthru
      _
    // Predicated region
    $region14: #{tpu_custom_call.1} parent=1 // pred_check
      _
    $region15: #{tpu_custom_call.1} parent=1 // pred_check_branch
      %44 = sbr.rel (0) target = $region17
    $region16: #{tpu_custom_call.1} parent=1 // pred_region
      %46 = vsyncadd [#allocation8], 0
      %s47 = sshll.u32 %s3, 4
      %s48 = int_to_ptr.hbm [resolvable:$true] %s47
      %s49 = sshll.u32 [#allocation9], 4
      %s50 = int_to_ptr.vmem [resolvable:$true] %s49
      %55 = dma.hbm_to_vmem [thread:$0]  %s48, 2048, %s50, [#allocation8], 128, 128, 8
    $region17: #{tpu_custom_call.1} parent=1 // pred_fallthru
      _
    // Predicated region
    $region18: #{tpu_custom_call.1} parent=1 // pred_check
      _
    $region19: #{tpu_custom_call.1} parent=1 // pred_check_branch
      %57 = sbr.rel (0) target = $region21
    $region20: #{tpu_custom_call.1} parent=1 // pred_region
      _
    $region21: #{tpu_custom_call.1} parent=1 // pred_fallthru
      _
    // Predicated region
    $region22: #{tpu_custom_call.1} parent=1 // pred_check
      _
    $region23: #{tpu_custom_call.1} parent=1 // pred_check_branch
      %59 = sbr.rel (0) target = $region25
    $region24: #{tpu_custom_call.1} parent=1 // pred_region
      _
    $region25: #{tpu_custom_call.1} parent=1 // pred_fallthru
      _
    // Predicated region
    $region26: #{tpu_custom_call.1} parent=1 // pred_check
      _
    $region27: #{tpu_custom_call.1} parent=1 // pred_check_branch
      %61 = sbr.rel (0) target = $region29
    $region28: #{tpu_custom_call.1} parent=1 // pred_region
      _
    $region29: #{tpu_custom_call.1} parent=1 // pred_fallthru
      _
    // Predicated region
    $region30: #{tpu_custom_call.1} parent=1 // pred_check
      _
    $region31: #{tpu_custom_call.1} parent=1 // pred_check_branch
      %63 = sbr.rel (0) target = $region33
    $region32: #{tpu_custom_call.1} parent=1 // pred_region
      _
    $region33: #{tpu_custom_call.1} parent=1 // pred_fallthru
      _
    // Predicated region
    $region34: #{tpu_custom_call.1} parent=1 // pred_check
      _
    $region35: #{tpu_custom_call.1} parent=1 // pred_check_branch
      %65 = sbr.rel (0) target = $region37
    $region36: #{tpu_custom_call.1} parent=1 // pred_region
      %67 = dma.done [#allocation6], 1024
    $region37: #{tpu_custom_call.1} parent=1 // pred_fallthru
      _
    // Predicated region
    $region38: #{tpu_custom_call.1} parent=1 // pred_check
      _
    $region39: #{tpu_custom_call.1} parent=1 // pred_check_branch
      %69 = sbr.rel (0) target = $region41
    $region40: #{tpu_custom_call.1} parent=1 // pred_region
      %71 = dma.done [#allocation8], 1024
    $region41: #{tpu_custom_call.1} parent=1 // pred_fallthru
      _
    // Predicated region
    $region42: #{tpu_custom_call.1} parent=1 // pred_check
      _
    $region43: #{tpu_custom_call.1} parent=1 // pred_check_branch
      %73 = sbr.rel (0) target = $region45
    $region44: #{tpu_custom_call.1} parent=1 // pred_region
      %75 = dma.done [#allocation8], 2048
    $region45: #{tpu_custom_call.1} parent=1 // pred_fallthru
      _
    %v77 = vld [vmem:[%s7] sm:$0xff]
    %v78 = vlaneseq
    %v79 = vshrl.u32 %v78, 7
    %v80 = vlaneseq
    %v81 = vand.u32 %v80, 127
    %vm82 = vcmp.lt.s32.totalorder %v81, 32
    %v83 = vsub.s32 7, %v79
    %v84 = vsel %vm82, %v79, %v83
    %v85 = vrot.slane %v84, 1
    %v86 = vrot.slane %v84, 2
    %v87 = vrot.slane %v84, 3
    %v88 = vrot.slane %v84, 4
    %v89 = vrot.slane %v84, 5
    %v90 = vrot.slane %v84, 6
    %v91 = vrot.slane %v84, 7
    %92 = vset.pattern.permute.xlu0 0
    %93 = vperm.xlu0 %92, %v77
    %v94 = vpop.permute.xlu0 %93
    %v95 = vperm.slane %v84, 0
    %v96 = vperm.slane %v85, 0
    %v97 = vperm.slane %v86, 0
    %v98 = vperm.slane %v87, 0
    %v99 = vperm.slane %v88, 0
    %v100 = vperm.slane %v89, 0
    %v101 = vperm.slane %v90, 0
    %v102 = vperm.slane %v91, 0
    %vm103 = vcmp.gt.s32.totalorder %v94, %v95
    %vm104 = vcmp.gt.s32.totalorder %v94, %v96
    %vm105 = vcmp.gt.s32.totalorder %v94, %v97
    %vm106 = vcmp.gt.s32.totalorder %v94, %v98
    %vm107 = vcmp.gt.s32.totalorder %v94, %v99
    %vm108 = vcmp.gt.s32.totalorder %v94, %v100
    %vm109 = vcmp.gt.s32.totalorder %v94, %v101
    %vm110 = vcmp.gt.s32.totalorder %v94, %v102
    %v111 = vsel %vm103, 1, 0
    %v112 = vsel %vm104, 1, 0
    %v113 = vsel %vm105, 1, 0
    %v114 = vsel %vm106, 1, 0
    %v115 = vsel %vm107, 1, 0
    %v116 = vsel %vm108, 1, 0
    %v117 = vsel %vm109, 1, 0
    %v118 = vsel %vm110, 1, 0
    %v119 = vcvt.s32.f32 %v111
    %v120 = vcvt.s32.f32 %v112
    %v121 = vcvt.s32.f32 %v113
    %v122 = vcvt.s32.f32 %v114
    %v123 = vcvt.s32.f32 %v115
    %v124 = vcvt.s32.f32 %v116
    %v125 = vcvt.s32.f32 %v117
    %v126 = vcvt.s32.f32 %v118
    %vm127 = vcmask 523264
    %128 = vst.msk [vmem:[#allocation4] sm:$0xff] %vm127, %v119
    %129 = vst.msk [vmem:[#allocation4 + $0x8] sm:$0xff] %vm127, %v120
    %130 = vst.msk [vmem:[#allocation4 + $0x10] sm:$0xff] %vm127, %v121
    %131 = vst.msk [vmem:[#allocation4 + $0x18] sm:$0xff] %vm127, %v122
    %132 = vst.msk [vmem:[#allocation4 + $0x20] sm:$0xff] %vm127, %v123
    %133 = vst.msk [vmem:[#allocation4 + $0x28] sm:$0xff] %vm127, %v124
    %134 = vst.msk [vmem:[#allocation4 + $0x30] sm:$0xff] %vm127, %v125
    %135 = vst.msk [vmem:[#allocation4 + $0x38] sm:$0xff] %vm127, %v126
    %v136 = vadd.s32 %v81, 128
    %vm137 = vcmp.lt.s32.totalorder %v81, 0
    %v138 = vsub.s32 0, %v81
    %v139 = vsel %vm137, %v138, %v81
    %v140 = vshrl.u32 %v139, 6
    %v141 = vand.u32 %v139, 63
    %v142 = vsub.s32 0, %v141
    %v143 = vsel %vm137, %v142, %v141
    %vm144 = vcmp.lt.s32.totalorder %v136, 0
    %v145 = vsub.s32 0, %v136
    %v146 = vsel %vm144, %v145, %v136
    %v147 = vshrl.u32 %v146, 6
    %v148 = vand.u32 %v146, 63
    %v149 = vsub.s32 0, %v148
    %v150 = vsel %vm144, %v149, %v148
    %vm151 = vcmp.ne.s32.totalorder %v143, 0
    %vm152 = vcmp.ne.s32.totalorder %v150, 0
    %vm153 = vcmp.lt.s32.totalorder %v143, 0
    %vm154 = vcmp.lt.s32.totalorder %v150, 0
    %vm155 = vmand %vm153, %vm151
    %vm156 = vmand %vm154, %vm152
    %v157 = vadd.s32 %v143, 64
    %v158 = vadd.s32 %v150, 64
    %v159 = vsel %vm155, %v157, %v143
    %v160 = vsel %vm156, %v158, %v150
    %vm161 = vcmp.lt.s32.totalorder %v159, 32
    %vm162 = vcmp.lt.s32.totalorder %v160, 32
    %v163 = vld [vmem:[#allocation5] sm:$0xff]
    %v164 = vld [vmem:[#allocation5 + $0x8] sm:$0xff]
    %v165 = vld [vmem:[#allocation5 + $0x10] sm:$0xff]
    %v166 = vld [vmem:[#allocation5 + $0x18] sm:$0xff]
    %v167 = vld [vmem:[#allocation5 + $0x20] sm:$0xff]
    %v168 = vld [vmem:[#allocation5 + $0x28] sm:$0xff]
    %v169 = vld [vmem:[#allocation5 + $0x30] sm:$0xff]
    %v170 = vld [vmem:[#allocation5 + $0x38] sm:$0xff]
    %v171 = vld [vmem:[%s1] sm:$0xff]
    %v172 = vpack.c.bf16 %v164, %v163
    %v173 = vpack.c.bf16 %v166, %v165
    %v174 = vpack.c.bf16 %v168, %v167
    %v175 = vpack.c.bf16 %v170, %v169
    %v176 = vld [vmem:[%s4] sm:$0x3]
    %v178 = vperm.slane %v176, 0
    %v179 = vperm.slane %v176, 1
    %v183 = vunpack.c.l.b16 %v171
    %v184 = vunpack.c.h.b16 %v171
    %v185 = vpack.c.b16 %v183, %v183
    %v186 = vpack.c.b16 %v184, %v184
    %vm187 = vcmask 64512
    %v189 = vsel %vm187, %v172, 0
    %v192 = vsel %vm187, %v173, 0
    %v195 = vsel %vm187, %v174, 0
    %v198 = vsel %vm187, %v175, 0
    %vm200 = vcmask 1043456
    %v202 = vsel %vm200, %v185, 0
    %v205 = vsel %vm200, %v186, 0
    %207 = vmatpush.bf16.msra.mxu0 0
    %208 = vmatpush.bf16.msra.mxu0 0
    %209 = vmatpush.bf16.msra.mxu0 0
    %210 = vmatpush.bf16.msra.mxu0 0
    %211 = vmatpush.bf16.msra.mxu0 0
    %212 = vmatpush.bf16.msra.mxu0 0
    %213 = vmatpush.bf16.msra.mxu0 0
    %214 = vmatpush.bf16.msra.mxu0 %v202
    %215 = vmatmul.bf16.gmra.mxu0 %v189
    %v216 = vpop.f32.mrf.mxu0
    %v217 = vadd.f32 %v178, %v216
    %v218 = vpop.f32.mrf.mxu0
    %v219 = vadd.f32 %v178, %v218
    %220 = vmatmul.bf16.gmra.mxu0 %v192
    %v221 = vpop.f32.mrf.mxu0
    %v222 = vadd.f32 %v178, %v221
    %v223 = vpop.f32.mrf.mxu0
    %v224 = vadd.f32 %v178, %v223
    %225 = vmatmul.bf16.gmra.mxu0 %v195
    %v226 = vpop.f32.mrf.mxu0
    %v227 = vadd.f32 %v178, %v226
    %v228 = vpop.f32.mrf.mxu0
    %v229 = vadd.f32 %v178, %v228
    %230 = vmatmul.bf16.gmra.mxu0 %v198
    %v231 = vpop.f32.mrf.mxu0
    %v232 = vadd.f32 %v178, %v231
    %v233 = vpop.f32.mrf.mxu0
    %v234 = vadd.f32 %v178, %v233
    %235 = vdwg.mxu0
    %236 = vmatpush.bf16.msra.mxu0 0
    %237 = vmatpush.bf16.msra.mxu0 0
    %238 = vmatpush.bf16.msra.mxu0 0
    %239 = vmatpush.bf16.msra.mxu0 0
    %240 = vmatpush.bf16.msra.mxu0 0
    %241 = vmatpush.bf16.msra.mxu0 0
    %242 = vmatpush.bf16.msra.mxu0 0
    %243 = vmatpush.bf16.msra.mxu0 %v205
    %244 = vmatmul.bf16.gmra.mxu0 %v189
    %v245 = vpop.f32.mrf.mxu0
    %v246 = vadd.f32 %v179, %v245
    %v247 = vpop.f32.mrf.mxu0
    %v248 = vadd.f32 %v179, %v247
    %249 = vmatmul.bf16.gmra.mxu0 %v192
    %v250 = vpop.f32.mrf.mxu0
    %v251 = vadd.f32 %v179, %v250
    %v252 = vpop.f32.mrf.mxu0
    %v253 = vadd.f32 %v179, %v252
    %254 = vmatmul.bf16.gmra.mxu0 %v195
    %v255 = vpop.f32.mrf.mxu0
    %v256 = vadd.f32 %v179, %v255
    %v257 = vpop.f32.mrf.mxu0
    %v258 = vadd.f32 %v179, %v257
    %259 = vmatmul.bf16.gmra.mxu0 %v198
    %v260 = vpop.f32.mrf.mxu0
    %v261 = vadd.f32 %v179, %v260
    %v262 = vpop.f32.mrf.mxu0
    %v263 = vadd.f32 %v179, %v262
    %264 = vdwg.mxu0
    %265 = vst [vmem:[#allocation2] sm:$0xff] %v217
    %266 = vst [vmem:[#allocation2 + $0x8] sm:$0xff] %v246
    %267 = vst [vmem:[#allocation2 + $0x10] sm:$0xff] %v219
    %268 = vst [vmem:[#allocation2 + $0x18] sm:$0xff] %v248
    %269 = vst [vmem:[#allocation2 + $0x20] sm:$0xff] %v222
    %270 = vst [vmem:[#allocation2 + $0x28] sm:$0xff] %v251
    %271 = vst [vmem:[#allocation2 + $0x30] sm:$0xff] %v224
    %272 = vst [vmem:[#allocation2 + $0x38] sm:$0xff] %v253
    %273 = vst [vmem:[#allocation2 + $0x40] sm:$0xff] %v227
    %274 = vst [vmem:[#allocation2 + $0x48] sm:$0xff] %v256
    %275 = vst [vmem:[#allocation2 + $0x50] sm:$0xff] %v229
    %276 = vst [vmem:[#allocation2 + $0x58] sm:$0xff] %v258
    %277 = vst [vmem:[#allocation2 + $0x60] sm:$0xff] %v232
    %278 = vst [vmem:[#allocation2 + $0x68] sm:$0xff] %v261
    %279 = vst [vmem:[#allocation2 + $0x70] sm:$0xff] %v234
    %280 = vst [vmem:[#allocation2 + $0x78] sm:$0xff] %v263
    %v281 = vld [vmem:[#allocation9] sm:$0xff]
    %v282 = vld [vmem:[#allocation9 + $0x8] sm:$0xff]
    %v283 = vld [vmem:[#allocation9 + $0x10] sm:$0xff]
    %v284 = vld [vmem:[#allocation9 + $0x18] sm:$0xff]
    %v285 = vld [vmem:[#allocation9 + $0x20] sm:$0xff]
    %v286 = vld [vmem:[#allocation9 + $0x28] sm:$0xff]
    %v287 = vld [vmem:[#allocation9 + $0x30] sm:$0xff]
    %v288 = vld [vmem:[#allocation9 + $0x38] sm:$0xff]
    %v289 = vld [vmem:[#allocation2] sm:$0xff]
    %v290 = vld [vmem:[#allocation2 + $0x8] sm:$0xff]
    %s291 = scalar_lea.vmem [#allocation2], 112
    %v292 = vld [vmem:[%s291] sm:$0xff]
    %v293 = vld [vmem:[%s291 + $0x8] sm:$0xff]
    %v294 = vsel %vm161, %v289, %v292
    %v295 = vsel %vm162, %v290, %v293
    %v304 = vunpack.c.l.b16 %v281
    %v305 = vunpack.c.h.b16 %v281
    %v306 = vunpack.c.l.b16 %v282
    %v307 = vunpack.c.h.b16 %v282
    %v308 = vunpack.c.l.b16 %v283
    %v309 = vunpack.c.h.b16 %v283
    %v310 = vunpack.c.l.b16 %v284
    %v311 = vunpack.c.h.b16 %v284
    %v312 = vunpack.c.l.b16 %v285
    %v313 = vunpack.c.h.b16 %v285
    %v314 = vunpack.c.l.b16 %v286
    %v315 = vunpack.c.h.b16 %v286
    %v316 = vunpack.c.l.b16 %v287
    %v317 = vunpack.c.h.b16 %v287
    %v318 = vunpack.c.l.b16 %v288
    %v319 = vunpack.c.h.b16 %v288
    %v320 = vpack.c.b16 %v306, %v304
    %v321 = vpack.c.b16 %v307, %v305
    %v322 = vpack.c.b16 %v310, %v308
    %v323 = vpack.c.b16 %v311, %v309
    %v324 = vpack.c.b16 %v314, %v312
    %v325 = vpack.c.b16 %v315, %v313
    %v326 = vpack.c.b16 %v318, %v316
    %v327 = vpack.c.b16 %v319, %v317
    %v337 = vsel %vm127, 0, 0
    %339 = vmatpush.bf16.msra.mxu0 0
    %340 = vmatpush.bf16.msra.mxu0 0
    %341 = vmatpush.bf16.msra.mxu0 0
    %342 = vmatpush.bf16.msra.mxu0 0
    %343 = vmatpush.bf16.msra.mxu0 %v326
    %344 = vmatpush.bf16.msra.mxu0 %v324
    %345 = vmatpush.bf16.msra.mxu0 %v322
    %346 = vmatpush.bf16.msra.mxu0 %v320
    %347 = vmatmul.bf16.gmra.mxu0 %v337
    %v348 = vpop.f32.mrf.mxu0
    %v349 = vadd.f32 0.0, %v348
    %v350 = vpop.f32.mrf.mxu0
    %351 = vdwg.mxu0
    %352 = vmatpush.bf16.msra.mxu0 0
    %353 = vmatpush.bf16.msra.mxu0 0
    %354 = vmatpush.bf16.msra.mxu0 0
    %355 = vmatpush.bf16.msra.mxu0 0
    %356 = vmatpush.bf16.msra.mxu0 %v327
    %357 = vmatpush.bf16.msra.mxu0 %v325
    %358 = vmatpush.bf16.msra.mxu0 %v323
    %359 = vmatpush.bf16.msra.mxu0 %v321
    %360 = vmatmul.bf16.gmra.mxu0 %v337
    %v361 = vpop.f32.mrf.mxu0
    %v362 = vadd.f32 0.0, %v361
    %v363 = vpop.f32.mrf.mxu0
    %364 = vdwg.mxu0
    %v365 = vadd.f32 %v294, %v349
    %v366 = vadd.f32 %v295, %v362
    %v367 = vxor.u32 %v365, 2147483648
    %v368 = vxor.u32 %v366, 2147483648
    %v369 = vmul.f32 %v367, 1.442695
    %v370 = vpow.pop %v369
    %v371 = vmul.f32 %v368, 1.442695
    %v372 = vpow.pop %v371
    %v373 = vadd.f32 %v370, 1.0
    %v374 = vadd.f32 %v372, 1.0
    %v375 = vrcp.pop %v373
    %v376 = vmul.f32 %v373, %v375
    %v377 = vsub.f32 1.0, %v376
    %v378 = vmul.f32 %v375, %v377
    %v379 = vadd.f32 %v375, %v378
    %vm380 = vweird.f32 %v373
    %vm381 = vweird.f32 %v375
    %vm382 = vmor %vm380, %vm381
    %v383 = vsel %vm382, %v375, %v379
    %v384 = vand.u32 2147483647, %v373
    %vm385 = vcmp.eq.f32.partialorder %v384, 8.507059e+37
    %v386 = vand.u32 %v373, 2147483648
    %v387 = vor.u32 1.1754944e-38, %v386
    %v388 = vsel %vm385, %v387, %v383
    %v389 = vmul.f32 1.0, %v388
    %v390 = vrcp.pop %v374
    %v391 = vmul.f32 %v374, %v390
    %v392 = vsub.f32 1.0, %v391
    %v393 = vmul.f32 %v390, %v392
    %v394 = vadd.f32 %v390, %v393
    %vm395 = vweird.f32 %v374
    %vm396 = vweird.f32 %v390
    %vm397 = vmor %vm395, %vm396
    %v398 = vsel %vm397, %v390, %v394
    %v399 = vand.u32 2147483647, %v374
    %vm400 = vcmp.eq.f32.partialorder %v399, 8.507059e+37
    %v401 = vand.u32 %v374, 2147483648
    %v402 = vor.u32 1.1754944e-38, %v401
    %v403 = vsel %vm400, %v402, %v398
    %v404 = vmul.f32 1.0, %v403
    %v405 = vtanh.pop %v366
    %v406 = vmul.f32 %v389, 0.0
    %408 = vrot.lane.b32.xlu0 %v405, 64
    %v409 = vpop.permute.xlu0 %408
    %v411 = vmul.f32 %v389, %v409
    %413 = vrot.lane.b32.xlu0 %v411, 64
    %v414 = vpop.permute.xlu0 %413
    %v416 = vadd.f32 %v406, %v414
    %v417 = vtanh.pop %v416
    %419 = vrot.lane.b32.xlu0 %v417, 64
    %v420 = vpop.permute.xlu0 %419
    %v422 = vmul.f32 %v404, %v420
    %v423 = vld [vmem:[#allocation4] sm:$0xff]
    %v424 = vmul.f32 %v423, %v422
    %v425 = vadd.f32 %v424, 0.0
    %427 = vrot.lane.b32.xlu0 %v416, 64
    %v428 = vpop.permute.xlu0 %427
    %v430 = vmul.f32 %v423, %v428
    %v431 = vadd.f32 %v430, 0.0
    %vm432 = vcmask 261120
    %433 = vst.msk [vmem:[#allocation3] sm:$0xff] %vm432, %v424
    %s434 = scalar_lea.vmem [#allocation3], 56
    %vm435 = vcmask 523520
    %436 = vst.msk [vmem:[%s434] sm:$0xff] %vm435, %v424
    %s437 = scalar_lea.vmem [#allocation2], 16
    %v438 = vld [vmem:[%s437] sm:$0xff]
    %v439 = vld [vmem:[%s437 + $0x8] sm:$0xff]
    %s440 = scalar_lea.vmem [#allocation2], 96
    %v441 = vld [vmem:[%s440] sm:$0xff]
    %v442 = vld [vmem:[%s440 + $0x8] sm:$0xff]
    %v443 = vsel %vm161, %v438, %v441
    %v444 = vsel %vm162, %v439, %v442
    %v445 = vpack.c.bf16 %v425, %v425
    %v447 = vsel %vm127, %v445, 0
    %449 = vmatpush.bf16.msra.mxu0 0
    %450 = vmatpush.bf16.msra.mxu0 0
    %451 = vmatpush.bf16.msra.mxu0 0
    %452 = vmatpush.bf16.msra.mxu0 0
    %453 = vmatpush.bf16.msra.mxu0 %v326
    %454 = vmatpush.bf16.msra.mxu0 %v324
    %455 = vmatpush.bf16.msra.mxu0 %v322
    %456 = vmatpush.bf16.msra.mxu0 %v320
    %457 = vmatmul.bf16.gmra.mxu0 %v447
    %v458 = vpop.f32.mrf.mxu0
    %v459 = vadd.f32 0.0, %v458
    %v460 = vpop.f32.mrf.mxu0
    %461 = vdwg.mxu0
    %462 = vmatpush.bf16.msra.mxu0 0
    %463 = vmatpush.bf16.msra.mxu0 0
    %464 = vmatpush.bf16.msra.mxu0 0
    %465 = vmatpush.bf16.msra.mxu0 0
    %466 = vmatpush.bf16.msra.mxu0 %v327
    %467 = vmatpush.bf16.msra.mxu0 %v325
    %468 = vmatpush.bf16.msra.mxu0 %v323
    %469 = vmatpush.bf16.msra.mxu0 %v321
    %470 = vmatmul.bf16.gmra.mxu0 %v447
    %v471 = vpop.f32.mrf.mxu0
    %v472 = vadd.f32 0.0, %v471
    %v473 = vpop.f32.mrf.mxu0
    %474 = vdwg.mxu0
    %v475 = vadd.f32 %v443, %v459
    %v476 = vadd.f32 %v444, %v472
    %v477 = vxor.u32 %v475, 2147483648
    %v478 = vxor.u32 %v476, 2147483648
    %v479 = vmul.f32 %v477, 1.442695
    %v480 = vpow.pop %v479
    %v481 = vmul.f32 %v478, 1.442695
    %v482 = vpow.pop %v481
    %v483 = vadd.f32 %v480, 1.0
    %v484 = vadd.f32 %v482, 1.0
    %v485 = vrcp.pop %v483
    %v486 = vmul.f32 %v483, %v485
    %v487 = vsub.f32 1.0, %v486
    %v488 = vmul.f32 %v485, %v487
    %v489 = vadd.f32 %v485, %v488
    %vm490 = vweird.f32 %v483
    %vm491 = vweird.f32 %v485
    %vm492 = vmor %vm490, %vm491
    %v493 = vsel %vm492, %v485, %v489
    %v494 = vand.u32 2147483647, %v483
    %vm495 = vcmp.eq.f32.partialorder %v494, 8.507059e+37
    %v496 = vand.u32 %v483, 2147483648
    %v497 = vor.u32 1.1754944e-38, %v496
    %v498 = vsel %vm495, %v497, %v493
    %v499 = vmul.f32 1.0, %v498
    %v500 = vrcp.pop %v484
    %v501 = vmul.f32 %v484, %v500
    %v502 = vsub.f32 1.0, %v501
    %v503 = vmul.f32 %v500, %v502
    %v504 = vadd.f32 %v500, %v503
    %vm505 = vweird.f32 %v484
    %vm506 = vweird.f32 %v500
    %vm507 = vmor %vm505, %vm506
    %v508 = vsel %vm507, %v500, %v504
    %v509 = vand.u32 2147483647, %v484
    %vm510 = vcmp.eq.f32.partialorder %v509, 8.507059e+37
    %v511 = vand.u32 %v484, 2147483648
    %v512 = vor.u32 1.1754944e-38, %v511
    %v513 = vsel %vm510, %v512, %v508
    %v514 = vmul.f32 1.0, %v513
    %v515 = vtanh.pop %v476
    %517 = vrot.lane.b32.xlu0 %v431, 64
    %v518 = vpop.permute.xlu0 %517
    %v520 = vmul.f32 %v499, %v518
    %522 = vrot.lane.b32.xlu0 %v515, 64
    %v523 = vpop.permute.xlu0 %522
    %v525 = vmul.f32 %v499, %v523
    %527 = vrot.lane.b32.xlu0 %v525, 64
    %v528 = vpop.permute.xlu0 %527
    %v530 = vadd.f32 %v520, %v528
    %v531 = vtanh.pop %v530
    %533 = vrot.lane.b32.xlu0 %v531, 64
    %v534 = vpop.permute.xlu0 %533
    %v536 = vmul.f32 %v514, %v534
    %s537 = scalar_lea.vmem [#allocation4], 8
    %v538 = vld [vmem:[%s537] sm:$0xff]
    %v539 = vsub.f32 %v536, %v425
    %v540 = vmul.f32 %v538, %v539
    %v541 = vadd.f32 %v425, %v540
    %v542 = vsub.f32 %v530, %v518
    %544 = vrot.lane.b32.xlu0 %v542, 64
    %v545 = vpop.permute.xlu0 %544
    %v547 = vmul.f32 %v538, %v545
    %v548 = vadd.f32 %v431, %v547
    %v549 = vmul.f32 %v538, %v536
    %s550 = scalar_lea.vmem [#allocation3], 8
    %551 = vst.msk [vmem:[%s550] sm:$0xff] %vm432, %v549
    %s552 = scalar_lea.vmem [#allocation3], 48
    %553 = vst.msk [vmem:[%s552] sm:$0xff] %vm435, %v549
    %s554 = scalar_lea.vmem [#allocation2], 32
    %v555 = vld [vmem:[%s554] sm:$0xff]
    %v556 = vld [vmem:[%s554 + $0x8] sm:$0xff]
    %s557 = scalar_lea.vmem [#allocation2], 80
    %v558 = vld [vmem:[%s557] sm:$0xff]
    %v559 = vld [vmem:[%s557 + $0x8] sm:$0xff]
    %v560 = vsel %vm161, %v555, %v558
    %v561 = vsel %vm162, %v556, %v559
    %v562 = vpack.c.bf16 %v541, %v541
    %v564 = vsel %vm127, %v562, 0
    %566 = vmatpush.bf16.msra.mxu0 0
    %567 = vmatpush.bf16.msra.mxu0 0
    %568 = vmatpush.bf16.msra.mxu0 0
    %569 = vmatpush.bf16.msra.mxu0 0
    %570 = vmatpush.bf16.msra.mxu0 %v326
    %571 = vmatpush.bf16.msra.mxu0 %v324
    %572 = vmatpush.bf16.msra.mxu0 %v322
    %573 = vmatpush.bf16.msra.mxu0 %v320
    %574 = vmatmul.bf16.gmra.mxu0 %v564
    %v575 = vpop.f32.mrf.mxu0
    %v576 = vadd.f32 0.0, %v575
    %v577 = vpop.f32.mrf.mxu0
    %578 = vdwg.mxu0
    %579 = vmatpush.bf16.msra.mxu0 0
    %580 = vmatpush.bf16.msra.mxu0 0
    %581 = vmatpush.bf16.msra.mxu0 0
    %582 = vmatpush.bf16.msra.mxu0 0
    %583 = vmatpush.bf16.msra.mxu0 %v327
    %584 = vmatpush.bf16.msra.mxu0 %v325
    %585 = vmatpush.bf16.msra.mxu0 %v323
    %586 = vmatpush.bf16.msra.mxu0 %v321
    %587 = vmatmul.bf16.gmra.mxu0 %v564
    %v588 = vpop.f32.mrf.mxu0
    %v589 = vadd.f32 0.0, %v588
    %v590 = vpop.f32.mrf.mxu0
    %591 = vdwg.mxu0
    %v592 = vadd.f32 %v560, %v576
    %v593 = vadd.f32 %v561, %v589
    %v594 = vxor.u32 %v592, 2147483648
    %v595 = vxor.u32 %v593, 2147483648
    %v596 = vmul.f32 %v594, 1.442695
    %v597 = vpow.pop %v596
    %v598 = vmul.f32 %v595, 1.442695
    %v599 = vpow.pop %v598
    %v600 = vadd.f32 %v597, 1.0
    %v601 = vadd.f32 %v599, 1.0
    %v602 = vrcp.pop %v600
    %v603 = vmul.f32 %v600, %v602
    %v604 = vsub.f32 1.0, %v603
    %v605 = vmul.f32 %v602, %v604
    %v606 = vadd.f32 %v602, %v605
    %vm607 = vweird.f32 %v600
    %vm608 = vweird.f32 %v602
    %vm609 = vmor %vm607, %vm608
    %v610 = vsel %vm609, %v602, %v606
    %v611 = vand.u32 2147483647, %v600
    %vm612 = vcmp.eq.f32.partialorder %v611, 8.507059e+37
    %v613 = vand.u32 %v600, 2147483648
    %v614 = vor.u32 1.1754944e-38, %v613
    %v615 = vsel %vm612, %v614, %v610
    %v616 = vmul.f32 1.0, %v615
    %v617 = vrcp.pop %v601
    %v618 = vmul.f32 %v601, %v617
    %v619 = vsub.f32 1.0, %v618
    %v620 = vmul.f32 %v617, %v619
    %v621 = vadd.f32 %v617, %v620
    %vm622 = vweird.f32 %v601
    %vm623 = vweird.f32 %v617
    %vm624 = vmor %vm622, %vm623
    %v625 = vsel %vm624, %v617, %v621
    %v626 = vand.u32 2147483647, %v601
    %vm627 = vcmp.eq.f32.partialorder %v626, 8.507059e+37
    %v628 = vand.u32 %v601, 2147483648
    %v629 = vor.u32 1.1754944e-38, %v628
    %v630 = vsel %vm627, %v629, %v625
    %v631 = vmul.f32 1.0, %v630
    %v632 = vtanh.pop %v593
    %634 = vrot.lane.b32.xlu0 %v548, 64
    %v635 = vpop.permute.xlu0 %634
    %v637 = vmul.f32 %v616, %v635
    %639 = vrot.lane.b32.xlu0 %v632, 64
    %v640 = vpop.permute.xlu0 %639
    %v642 = vmul.f32 %v616, %v640
    %644 = vrot.lane.b32.xlu0 %v642, 64
    %v645 = vpop.permute.xlu0 %644
    %v647 = vadd.f32 %v637, %v645
    %v648 = vtanh.pop %v647
    %650 = vrot.lane.b32.xlu0 %v648, 64
    %v651 = vpop.permute.xlu0 %650
    %v653 = vmul.f32 %v631, %v651
    %s654 = scalar_lea.vmem [#allocation4], 16
    %v655 = vld [vmem:[%s654] sm:$0xff]
    %v656 = vsub.f32 %v653, %v541
    %v657 = vmul.f32 %v655, %v656
    %v658 = vadd.f32 %v541, %v657
    %v659 = vsub.f32 %v647, %v635
    %661 = vrot.lane.b32.xlu0 %v659, 64
    %v662 = vpop.permute.xlu0 %661
    %v664 = vmul.f32 %v655, %v662
    %v665 = vadd.f32 %v548, %v664
    %v666 = vmul.f32 %v655, %v653
    %s667 = scalar_lea.vmem [#allocation3], 16
    %668 = vst.msk [vmem:[%s667] sm:$0xff] %vm432, %v666
    %s669 = scalar_lea.vmem [#allocation3], 40
    %670 = vst.msk [vmem:[%s669] sm:$0xff] %vm435, %v666
    %s671 = scalar_lea.vmem [#allocation2], 48
    %v672 = vld [vmem:[%s671] sm:$0xff]
    %v673 = vld [vmem:[%s671 + $0x8] sm:$0xff]
    %s674 = scalar_lea.vmem [#allocation2], 64
    %v675 = vld [vmem:[%s674] sm:$0xff]
    %v676 = vld [vmem:[%s674 + $0x8] sm:$0xff]
    %v677 = vsel %vm161, %v672, %v675
    %v678 = vsel %vm162, %v673, %v676
    %v679 = vpack.c.bf16 %v658, %v658
    %v681 = vsel %vm127, %v679, 0
    %683 = vmatpush.bf16.msra.mxu0 0
    %684 = vmatpush.bf16.msra.mxu0 0
    %685 = vmatpush.bf16.msra.mxu0 0
    %686 = vmatpush.bf16.msra.mxu0 0
    %687 = vmatpush.bf16.msra.mxu0 %v326
    %688 = vmatpush.bf16.msra.mxu0 %v324
    %689 = vmatpush.bf16.msra.mxu0 %v322
    %690 = vmatpush.bf16.msra.mxu0 %v320
    %691 = vmatmul.bf16.gmra.mxu0 %v681
    %v692 = vpop.f32.mrf.mxu0
    %v693 = vadd.f32 0.0, %v692
    %v694 = vpop.f32.mrf.mxu0
    %695 = vdwg.mxu0
    %696 = vmatpush.bf16.msra.mxu0 0
    %697 = vmatpush.bf16.msra.mxu0 0
    %698 = vmatpush.bf16.msra.mxu0 0
    %699 = vmatpush.bf16.msra.mxu0 0
    %700 = vmatpush.bf16.msra.mxu0 %v327
    %701 = vmatpush.bf16.msra.mxu0 %v325
    %702 = vmatpush.bf16.msra.mxu0 %v323
    %703 = vmatpush.bf16.msra.mxu0 %v321
    %704 = vmatmul.bf16.gmra.mxu0 %v681
    %v705 = vpop.f32.mrf.mxu0
    %v706 = vadd.f32 0.0, %v705
    %v707 = vpop.f32.mrf.mxu0
    %708 = vdwg.mxu0
    %v709 = vadd.f32 %v677, %v693
    %v710 = vadd.f32 %v678, %v706
    %v711 = vxor.u32 %v709, 2147483648
    %v712 = vxor.u32 %v710, 2147483648
    %v713 = vmul.f32 %v711, 1.442695
    %v714 = vpow.pop %v713
    %v715 = vmul.f32 %v712, 1.442695
    %v716 = vpow.pop %v715
    %v717 = vadd.f32 %v714, 1.0
    %v718 = vadd.f32 %v716, 1.0
    %v719 = vrcp.pop %v717
    %v720 = vmul.f32 %v717, %v719
    %v721 = vsub.f32 1.0, %v720
    %v722 = vmul.f32 %v719, %v721
    %v723 = vadd.f32 %v719, %v722
    %vm724 = vweird.f32 %v717
    %vm725 = vweird.f32 %v719
    %vm726 = vmor %vm724, %vm725
    %v727 = vsel %vm726, %v719, %v723
    %v728 = vand.u32 2147483647, %v717
    %vm729 = vcmp.eq.f32.partialorder %v728, 8.507059e+37
    %v730 = vand.u32 %v717, 2147483648
    %v731 = vor.u32 1.1754944e-38, %v730
    %v732 = vsel %vm729, %v731, %v727
    %v733 = vmul.f32 1.0, %v732
    %v734 = vrcp.pop %v718
    %v735 = vmul.f32 %v718, %v734
    %v736 = vsub.f32 1.0, %v735
    %v737 = vmul.f32 %v734, %v736
    %v738 = vadd.f32 %v734, %v737
    %vm739 = vweird.f32 %v718
    %vm740 = vweird.f32 %v734
    %vm741 = vmor %vm739, %vm740
    %v742 = vsel %vm741, %v734, %v738
    %v743 = vand.u32 2147483647, %v718
    %vm744 = vcmp.eq.f32.partialorder %v743, 8.507059e+37
    %v745 = vand.u32 %v718, 2147483648
    %v746 = vor.u32 1.1754944e-38, %v745
    %v747 = vsel %vm744, %v746, %v742
    %v748 = vmul.f32 1.0, %v747
    %v749 = vtanh.pop %v710
    %751 = vrot.lane.b32.xlu0 %v665, 64
    %v752 = vpop.permute.xlu0 %751
    %v754 = vmul.f32 %v733, %v752
    %756 = vrot.lane.b32.xlu0 %v749, 64
    %v757 = vpop.permute.xlu0 %756
    %v759 = vmul.f32 %v733, %v757
    %761 = vrot.lane.b32.xlu0 %v759, 64
    %v762 = vpop.permute.xlu0 %761
    %v764 = vadd.f32 %v754, %v762
    %v765 = vtanh.pop %v764
    %767 = vrot.lane.b32.xlu0 %v765, 64
    %v768 = vpop.permute.xlu0 %767
    %v770 = vmul.f32 %v748, %v768
    %s771 = scalar_lea.vmem [#allocation4], 24
    %v772 = vld [vmem:[%s771] sm:$0xff]
    %v773 = vsub.f32 %v770, %v658
    %v774 = vmul.f32 %v772, %v773
    %v775 = vadd.f32 %v658, %v774
    %v776 = vsub.f32 %v764, %v752
    %778 = vrot.lane.b32.xlu0 %v776, 64
    %v779 = vpop.permute.xlu0 %778
    %v781 = vmul.f32 %v772, %v779
    %v782 = vadd.f32 %v665, %v781
    %v783 = vmul.f32 %v772, %v770
    %s784 = scalar_lea.vmem [#allocation3], 24
    %785 = vst.msk [vmem:[%s784] sm:$0xff] %vm432, %v783
    %s786 = scalar_lea.vmem [#allocation3], 32
    %787 = vst.msk [vmem:[%s786] sm:$0xff] %vm435, %v783
    %v788 = vld [vmem:[%s674] sm:$0xff]
    %v789 = vld [vmem:[%s674 + $0x8] sm:$0xff]
    %v790 = vld [vmem:[%s671] sm:$0xff]
    %v791 = vld [vmem:[%s671 + $0x8] sm:$0xff]
    %v792 = vsel %vm161, %v788, %v790
    %v793 = vsel %vm162, %v789, %v791
    %v794 = vpack.c.bf16 %v775, %v775
    %v796 = vsel %vm127, %v794, 0
    %798 = vmatpush.bf16.msra.mxu0 0
    %799 = vmatpush.bf16.msra.mxu0 0
    %800 = vmatpush.bf16.msra.mxu0 0
    %801 = vmatpush.bf16.msra.mxu0 0
    %802 = vmatpush.bf16.msra.mxu0 %v326
    %803 = vmatpush.bf16.msra.mxu0 %v324
    %804 = vmatpush.bf16.msra.mxu0 %v322
    %805 = vmatpush.bf16.msra.mxu0 %v320
    %806 = vmatmul.bf16.gmra.mxu0 %v796
    %v807 = vpop.f32.mrf.mxu0
    %v808 = vadd.f32 0.0, %v807
    %v809 = vpop.f32.mrf.mxu0
    %810 = vdwg.mxu0
    %811 = vmatpush.bf16.msra.mxu0 0
    %812 = vmatpush.bf16.msra.mxu0 0
    %813 = vmatpush.bf16.msra.mxu0 0
    %814 = vmatpush.bf16.msra.mxu0 0
    %815 = vmatpush.bf16.msra.mxu0 %v327
    %816 = vmatpush.bf16.msra.mxu0 %v325
    %817 = vmatpush.bf16.msra.mxu0 %v323
    %818 = vmatpush.bf16.msra.mxu0 %v321
    %819 = vmatmul.bf16.gmra.mxu0 %v796
    %v820 = vpop.f32.mrf.mxu0
    %v821 = vadd.f32 0.0, %v820
    %v822 = vpop.f32.mrf.mxu0
    %823 = vdwg.mxu0
    %v824 = vadd.f32 %v792, %v808
    %v825 = vadd.f32 %v793, %v821
    %v826 = vxor.u32 %v824, 2147483648
    %v827 = vxor.u32 %v825, 2147483648
    %v828 = vmul.f32 %v826, 1.442695
    %v829 = vpow.pop %v828
    %v830 = vmul.f32 %v827, 1.442695
    %v831 = vpow.pop %v830
    %v832 = vadd.f32 %v829, 1.0
    %v833 = vadd.f32 %v831, 1.0
    %v834 = vrcp.pop %v832
    %v835 = vmul.f32 %v832, %v834
    %v836 = vsub.f32 1.0, %v835
    %v837 = vmul.f32 %v834, %v836
    %v838 = vadd.f32 %v834, %v837
    %vm839 = vweird.f32 %v832
    %vm840 = vweird.f32 %v834
    %vm841 = vmor %vm839, %vm840
    %v842 = vsel %vm841, %v834, %v838
    %v843 = vand.u32 2147483647, %v832
    %vm844 = vcmp.eq.f32.partialorder %v843, 8.507059e+37
    %v845 = vand.u32 %v832, 2147483648
    %v846 = vor.u32 1.1754944e-38, %v845
    %v847 = vsel %vm844, %v846, %v842
    %v848 = vmul.f32 1.0, %v847
    %v849 = vrcp.pop %v833
    %v850 = vmul.f32 %v833, %v849
    %v851 = vsub.f32 1.0, %v850
    %v852 = vmul.f32 %v849, %v851
    %v853 = vadd.f32 %v849, %v852
    %vm854 = vweird.f32 %v833
    %vm855 = vweird.f32 %v849
    %vm856 = vmor %vm854, %vm855
    %v857 = vsel %vm856, %v849, %v853
    %v858 = vand.u32 2147483647, %v833
    %vm859 = vcmp.eq.f32.partialorder %v858, 8.507059e+37
    %v860 = vand.u32 %v833, 2147483648
    %v861 = vor.u32 1.1754944e-38, %v860
    %v862 = vsel %vm859, %v861, %v857
    %v863 = vmul.f32 1.0, %v862
    %v864 = vtanh.pop %v825
    %866 = vrot.lane.b32.xlu0 %v782, 64
    %v867 = vpop.permute.xlu0 %866
    %v869 = vmul.f32 %v848, %v867
    %871 = vrot.lane.b32.xlu0 %v864, 64
    %v872 = vpop.permute.xlu0 %871
    %v874 = vmul.f32 %v848, %v872
    %876 = vrot.lane.b32.xlu0 %v874, 64
    %v877 = vpop.permute.xlu0 %876
    %v879 = vadd.f32 %v869, %v877
    %v880 = vtanh.pop %v879
    %882 = vrot.lane.b32.xlu0 %v880, 64
    %v883 = vpop.permute.xlu0 %882
    %v885 = vmul.f32 %v863, %v883
    %s886 = scalar_lea.vmem [#allocation4], 32
    %v887 = vld [vmem:[%s886] sm:$0xff]
    %v888 = vsub.f32 %v885, %v775
    %v889 = vmul.f32 %v887, %v888
    %v890 = vadd.f32 %v775, %v889
    %v891 = vsub.f32 %v879, %v867
    %893 = vrot.lane.b32.xlu0 %v891, 64
    %v894 = vpop.permute.xlu0 %893
    %v896 = vmul.f32 %v887, %v894
    %v897 = vadd.f32 %v782, %v896
    %v898 = vmul.f32 %v887, %v885
    %899 = vst.msk [vmem:[%s786] sm:$0xff] %vm432, %v898
    %900 = vst.msk [vmem:[%s784] sm:$0xff] %vm435, %v898
    %v901 = vld [vmem:[%s557] sm:$0xff]
    %v902 = vld [vmem:[%s557 + $0x8] sm:$0xff]
    %v903 = vld [vmem:[%s554] sm:$0xff]
    %v904 = vld [vmem:[%s554 + $0x8] sm:$0xff]
    %v905 = vsel %vm161, %v901, %v903
    %v906 = vsel %vm162, %v902, %v904
    %v907 = vpack.c.bf16 %v890, %v890
    %v909 = vsel %vm127, %v907, 0
    %911 = vmatpush.bf16.msra.mxu0 0
    %912 = vmatpush.bf16.msra.mxu0 0
    %913 = vmatpush.bf16.msra.mxu0 0
    %914 = vmatpush.bf16.msra.mxu0 0
    %915 = vmatpush.bf16.msra.mxu0 %v326
    %916 = vmatpush.bf16.msra.mxu0 %v324
    %917 = vmatpush.bf16.msra.mxu0 %v322
    %918 = vmatpush.bf16.msra.mxu0 %v320
    %919 = vmatmul.bf16.gmra.mxu0 %v909
    %v920 = vpop.f32.mrf.mxu0
    %v921 = vadd.f32 0.0, %v920
    %v922 = vpop.f32.mrf.mxu0
    %923 = vdwg.mxu0
    %924 = vmatpush.bf16.msra.mxu0 0
    %925 = vmatpush.bf16.msra.mxu0 0
    %926 = vmatpush.bf16.msra.mxu0 0
    %927 = vmatpush.bf16.msra.mxu0 0
    %928 = vmatpush.bf16.msra.mxu0 %v327
    %929 = vmatpush.bf16.msra.mxu0 %v325
    %930 = vmatpush.bf16.msra.mxu0 %v323
    %931 = vmatpush.bf16.msra.mxu0 %v321
    %932 = vmatmul.bf16.gmra.mxu0 %v909
    %v933 = vpop.f32.mrf.mxu0
    %v934 = vadd.f32 0.0, %v933
    %v935 = vpop.f32.mrf.mxu0
    %936 = vdwg.mxu0
    %v937 = vadd.f32 %v905, %v921
    %v938 = vadd.f32 %v906, %v934
    %v939 = vxor.u32 %v937, 2147483648
    %v940 = vxor.u32 %v938, 2147483648
    %v941 = vmul.f32 %v939, 1.442695
    %v942 = vpow.pop %v941
    %v943 = vmul.f32 %v940, 1.442695
    %v944 = vpow.pop %v943
    %v945 = vadd.f32 %v942, 1.0
    %v946 = vadd.f32 %v944, 1.0
    %v947 = vrcp.pop %v945
    %v948 = vmul.f32 %v945, %v947
    %v949 = vsub.f32 1.0, %v948
    %v950 = vmul.f32 %v947, %v949
    %v951 = vadd.f32 %v947, %v950
    %vm952 = vweird.f32 %v945
    %vm953 = vweird.f32 %v947
    %vm954 = vmor %vm952, %vm953
    %v955 = vsel %vm954, %v947, %v951
    %v956 = vand.u32 2147483647, %v945
    %vm957 = vcmp.eq.f32.partialorder %v956, 8.507059e+37
    %v958 = vand.u32 %v945, 2147483648
    %v959 = vor.u32 1.1754944e-38, %v958
    %v960 = vsel %vm957, %v959, %v955
    %v961 = vmul.f32 1.0, %v960
    %v962 = vrcp.pop %v946
    %v963 = vmul.f32 %v946, %v962
    %v964 = vsub.f32 1.0, %v963
    %v965 = vmul.f32 %v962, %v964
    %v966 = vadd.f32 %v962, %v965
    %vm967 = vweird.f32 %v946
    %vm968 = vweird.f32 %v962
    %vm969 = vmor %vm967, %vm968
    %v970 = vsel %vm969, %v962, %v966
    %v971 = vand.u32 2147483647, %v946
    %vm972 = vcmp.eq.f32.partialorder %v971, 8.507059e+37
    %v973 = vand.u32 %v946, 2147483648
    %v974 = vor.u32 1.1754944e-38, %v973
    %v975 = vsel %vm972, %v974, %v970
    %v976 = vmul.f32 1.0, %v975
    %v977 = vtanh.pop %v938
    %979 = vrot.lane.b32.xlu0 %v897, 64
    %v980 = vpop.permute.xlu0 %979
    %v982 = vmul.f32 %v961, %v980
    %984 = vrot.lane.b32.xlu0 %v977, 64
    %v985 = vpop.permute.xlu0 %984
    %v987 = vmul.f32 %v961, %v985
    %989 = vrot.lane.b32.xlu0 %v987, 64
    %v990 = vpop.permute.xlu0 %989
    %v992 = vadd.f32 %v982, %v990
    %v993 = vtanh.pop %v992
    %995 = vrot.lane.b32.xlu0 %v993, 64
    %v996 = vpop.permute.xlu0 %995
    %v998 = vmul.f32 %v976, %v996
    %s999 = scalar_lea.vmem [#allocation4], 40
    %v1000 = vld [vmem:[%s999] sm:$0xff]
    %v1001 = vsub.f32 %v998, %v890
    %v1002 = vmul.f32 %v1000, %v1001
    %v1003 = vadd.f32 %v890, %v1002
    %v1004 = vsub.f32 %v992, %v980
    %1006 = vrot.lane.b32.xlu0 %v1004, 64
    %v1007 = vpop.permute.xlu0 %1006
    %v1009 = vmul.f32 %v1000, %v1007
    %v1010 = vadd.f32 %v897, %v1009
    %v1011 = vmul.f32 %v1000, %v998
    %1012 = vst.msk [vmem:[%s669] sm:$0xff] %vm432, %v1011
    %1013 = vst.msk [vmem:[%s667] sm:$0xff] %vm435, %v1011
    %v1014 = vld [vmem:[%s440] sm:$0xff]
    %v1015 = vld [vmem:[%s440 + $0x8] sm:$0xff]
    %v1016 = vld [vmem:[%s437] sm:$0xff]
    %v1017 = vld [vmem:[%s437 + $0x8] sm:$0xff]
    %v1018 = vsel %vm161, %v1014, %v1016
    %v1019 = vsel %vm162, %v1015, %v1017
    %v1020 = vpack.c.bf16 %v1003, %v1003
    %v1022 = vsel %vm127, %v1020, 0
    %1024 = vmatpush.bf16.msra.mxu0 0
    %1025 = vmatpush.bf16.msra.mxu0 0
    %1026 = vmatpush.bf16.msra.mxu0 0
    %1027 = vmatpush.bf16.msra.mxu0 0
    %1028 = vmatpush.bf16.msra.mxu0 %v326
    %1029 = vmatpush.bf16.msra.mxu0 %v324
    %1030 = vmatpush.bf16.msra.mxu0 %v322
    %1031 = vmatpush.bf16.msra.mxu0 %v320
    %1032 = vmatmul.bf16.gmra.mxu0 %v1022
    %v1033 = vpop.f32.mrf.mxu0
    %v1034 = vadd.f32 0.0, %v1033
    %v1035 = vpop.f32.mrf.mxu0
    %1036 = vdwg.mxu0
    %1037 = vmatpush.bf16.msra.mxu0 0
    %1038 = vmatpush.bf16.msra.mxu0 0
    %1039 = vmatpush.bf16.msra.mxu0 0
    %1040 = vmatpush.bf16.msra.mxu0 0
    %1041 = vmatpush.bf16.msra.mxu0 %v327
    %1042 = vmatpush.bf16.msra.mxu0 %v325
    %1043 = vmatpush.bf16.msra.mxu0 %v323
    %1044 = vmatpush.bf16.msra.mxu0 %v321
    %1045 = vmatmul.bf16.gmra.mxu0 %v1022
    %v1046 = vpop.f32.mrf.mxu0
    %v1047 = vadd.f32 0.0, %v1046
    %v1048 = vpop.f32.mrf.mxu0
    %1049 = vdwg.mxu0
    %v1050 = vadd.f32 %v1018, %v1034
    %v1051 = vadd.f32 %v1019, %v1047
    %v1052 = vxor.u32 %v1050, 2147483648
    %v1053 = vxor.u32 %v1051, 2147483648
    %v1054 = vmul.f32 %v1052, 1.442695
    %v1055 = vpow.pop %v1054
    %v1056 = vmul.f32 %v1053, 1.442695
    %v1057 = vpow.pop %v1056
    %v1058 = vadd.f32 %v1055, 1.0
    %v1059 = vadd.f32 %v1057, 1.0
    %v1060 = vrcp.pop %v1058
    %v1061 = vmul.f32 %v1058, %v1060
    %v1062 = vsub.f32 1.0, %v1061
    %v1063 = vmul.f32 %v1060, %v1062
    %v1064 = vadd.f32 %v1060, %v1063
    %vm1065 = vweird.f32 %v1058
    %vm1066 = vweird.f32 %v1060
    %vm1067 = vmor %vm1065, %vm1066
    %v1068 = vsel %vm1067, %v1060, %v1064
    %v1069 = vand.u32 2147483647, %v1058
    %vm1070 = vcmp.eq.f32.partialorder %v1069, 8.507059e+37
    %v1071 = vand.u32 %v1058, 2147483648
    %v1072 = vor.u32 1.1754944e-38, %v1071
    %v1073 = vsel %vm1070, %v1072, %v1068
    %v1074 = vmul.f32 1.0, %v1073
    %v1075 = vrcp.pop %v1059
    %v1076 = vmul.f32 %v1059, %v1075
    %v1077 = vsub.f32 1.0, %v1076
    %v1078 = vmul.f32 %v1075, %v1077
    %v1079 = vadd.f32 %v1075, %v1078
    %vm1080 = vweird.f32 %v1059
    %vm1081 = vweird.f32 %v1075
    %vm1082 = vmor %vm1080, %vm1081
    %v1083 = vsel %vm1082, %v1075, %v1079
    %v1084 = vand.u32 2147483647, %v1059
    %vm1085 = vcmp.eq.f32.partialorder %v1084, 8.507059e+37
    %v1086 = vand.u32 %v1059, 2147483648
    %v1087 = vor.u32 1.1754944e-38, %v1086
    %v1088 = vsel %vm1085, %v1087, %v1083
    %v1089 = vmul.f32 1.0, %v1088
    %v1090 = vtanh.pop %v1051
    %1092 = vrot.lane.b32.xlu0 %v1010, 64
    %v1093 = vpop.permute.xlu0 %1092
    %v1095 = vmul.f32 %v1074, %v1093
    %1097 = vrot.lane.b32.xlu0 %v1090, 64
    %v1098 = vpop.permute.xlu0 %1097
    %v1100 = vmul.f32 %v1074, %v1098
    %1102 = vrot.lane.b32.xlu0 %v1100, 64
    %v1103 = vpop.permute.xlu0 %1102
    %v1105 = vadd.f32 %v1095, %v1103
    %v1106 = vtanh.pop %v1105
    %1108 = vrot.lane.b32.xlu0 %v1106, 64
    %v1109 = vpop.permute.xlu0 %1108
    %v1111 = vmul.f32 %v1089, %v1109
    %s1112 = scalar_lea.vmem [#allocation4], 48
    %v1113 = vld [vmem:[%s1112] sm:$0xff]
    %v1114 = vsub.f32 %v1111, %v1003
    %v1115 = vmul.f32 %v1113, %v1114
    %v1116 = vadd.f32 %v1003, %v1115
    %v1117 = vsub.f32 %v1105, %v1093
    %1119 = vrot.lane.b32.xlu0 %v1117, 64
    %v1120 = vpop.permute.xlu0 %1119
    %v1122 = vmul.f32 %v1113, %v1120
    %v1123 = vadd.f32 %v1010, %v1122
    %v1124 = vmul.f32 %v1113, %v1111
    %1125 = vst.msk [vmem:[%s552] sm:$0xff] %vm432, %v1124
    %1126 = vst.msk [vmem:[%s550] sm:$0xff] %vm435, %v1124
    %v1127 = vld [vmem:[%s291] sm:$0xff]
    %v1128 = vld [vmem:[%s291 + $0x8] sm:$0xff]
    %v1129 = vld [vmem:[#allocation2] sm:$0xff]
    %v1130 = vld [vmem:[#allocation2 + $0x8] sm:$0xff]
    %v1131 = vsel %vm161, %v1127, %v1129
    %v1132 = vsel %vm162, %v1128, %v1130
    %v1133 = vpack.c.bf16 %v1116, %v1116
    %v1135 = vsel %vm127, %v1133, 0
    %1137 = vmatpush.bf16.msra.mxu0 0
    %1138 = vmatpush.bf16.msra.mxu0 0
    %1139 = vmatpush.bf16.msra.mxu0 0
    %1140 = vmatpush.bf16.msra.mxu0 0
    %1141 = vmatpush.bf16.msra.mxu0 %v326
    %1142 = vmatpush.bf16.msra.mxu0 %v324
    %1143 = vmatpush.bf16.msra.mxu0 %v322
    %1144 = vmatpush.bf16.msra.mxu0 %v320
    %1145 = vmatmul.bf16.gmra.mxu0 %v1135
    %v1146 = vpop.f32.mrf.mxu0
    %v1147 = vadd.f32 0.0, %v1146
    %v1148 = vpop.f32.mrf.mxu0
    %1149 = vdwg.mxu0
    %1150 = vmatpush.bf16.msra.mxu0 0
    %1151 = vmatpush.bf16.msra.mxu0 0
    %1152 = vmatpush.bf16.msra.mxu0 0
    %1153 = vmatpush.bf16.msra.mxu0 0
    %1154 = vmatpush.bf16.msra.mxu0 %v327
    %1155 = vmatpush.bf16.msra.mxu0 %v325
    %1156 = vmatpush.bf16.msra.mxu0 %v323
    %1157 = vmatpush.bf16.msra.mxu0 %v321
    %1158 = vmatmul.bf16.gmra.mxu0 %v1135
    %v1159 = vpop.f32.mrf.mxu0
    %v1160 = vadd.f32 0.0, %v1159
    %v1161 = vpop.f32.mrf.mxu0
    %1162 = vdwg.mxu0
    %v1163 = vadd.f32 %v1131, %v1147
    %v1164 = vadd.f32 %v1132, %v1160
    %v1165 = vxor.u32 %v1163, 2147483648
    %v1166 = vxor.u32 %v1164, 2147483648
    %v1167 = vmul.f32 %v1165, 1.442695
    %v1168 = vpow.pop %v1167
    %v1169 = vmul.f32 %v1166, 1.442695
    %v1170 = vpow.pop %v1169
    %v1171 = vadd.f32 %v1168, 1.0
    %v1172 = vadd.f32 %v1170, 1.0
    %v1173 = vrcp.pop %v1171
    %v1174 = vmul.f32 %v1171, %v1173
    %v1175 = vsub.f32 1.0, %v1174
    %v1176 = vmul.f32 %v1173, %v1175
    %v1177 = vadd.f32 %v1173, %v1176
    %vm1178 = vweird.f32 %v1171
    %vm1179 = vweird.f32 %v1173
    %vm1180 = vmor %vm1178, %vm1179
    %v1181 = vsel %vm1180, %v1173, %v1177
    %v1182 = vand.u32 2147483647, %v1171
    %vm1183 = vcmp.eq.f32.partialorder %v1182, 8.507059e+37
    %v1184 = vand.u32 %v1171, 2147483648
    %v1185 = vor.u32 1.1754944e-38, %v1184
    %v1186 = vsel %vm1183, %v1185, %v1181
    %v1187 = vmul.f32 1.0, %v1186
    %v1188 = vrcp.pop %v1172
    %v1189 = vmul.f32 %v1172, %v1188
    %v1190 = vsub.f32 1.0, %v1189
    %v1191 = vmul.f32 %v1188, %v1190
    %v1192 = vadd.f32 %v1188, %v1191
    %vm1193 = vweird.f32 %v1172
    %vm1194 = vweird.f32 %v1188
    %vm1195 = vmor %vm1193, %vm1194
    %v1196 = vsel %vm1195, %v1188, %v1192
    %v1197 = vand.u32 2147483647, %v1172
    %vm1198 = vcmp.eq.f32.partialorder %v1197, 8.507059e+37
    %v1199 = vand.u32 %v1172, 2147483648
    %v1200 = vor.u32 1.1754944e-38, %v1199
    %v1201 = vsel %vm1198, %v1200, %v1196
    %v1202 = vmul.f32 1.0, %v1201
    %v1203 = vtanh.pop %v1164
    %1205 = vrot.lane.b32.xlu0 %v1123, 64
    %v1206 = vpop.permute.xlu0 %1205
    %v1208 = vmul.f32 %v1187, %v1206
    %1210 = vrot.lane.b32.xlu0 %v1203, 64
    %v1211 = vpop.permute.xlu0 %1210
    %v1213 = vmul.f32 %v1187, %v1211
    %1215 = vrot.lane.b32.xlu0 %v1213, 64
    %v1216 = vpop.permute.xlu0 %1215
    %v1218 = vadd.f32 %v1208, %v1216
    %v1219 = vtanh.pop %v1218
    %1221 = vrot.lane.b32.xlu0 %v1219, 64
    %v1222 = vpop.permute.xlu0 %1221
    %v1224 = vmul.f32 %v1202, %v1222
    %s1225 = scalar_lea.vmem [#allocation4], 56
    %v1226 = vld [vmem:[%s1225] sm:$0xff]
    %v1227 = vmul.f32 %v1226, %v1224
    %1228 = vst.msk [vmem:[%s434] sm:$0xff] %vm432, %v1227
    %1229 = vst.msk [vmem:[#allocation3] sm:$0xff] %vm435, %v1227
    %v1230 = vld [vmem:[#allocation3] sm:$0xff]
    %v1231 = vld [vmem:[#allocation3 + $0x8] sm:$0xff]
    %v1232 = vld [vmem:[#allocation3 + $0x10] sm:$0xff]
    %v1233 = vld [vmem:[#allocation3 + $0x18] sm:$0xff]
    %v1234 = vld [vmem:[#allocation3 + $0x20] sm:$0xff]
    %v1235 = vld [vmem:[#allocation3 + $0x28] sm:$0xff]
    %v1236 = vld [vmem:[#allocation3 + $0x30] sm:$0xff]
    %v1237 = vld [vmem:[#allocation3 + $0x38] sm:$0xff]
    %v1238 = vld [vmem:[#allocation7] sm:$0xff]
    %v1239 = vld [vmem:[#allocation7 + $0x8] sm:$0xff]
    %v1240 = vld [vmem:[#allocation7 + $0x10] sm:$0xff]
    %v1241 = vld [vmem:[#allocation7 + $0x18] sm:$0xff]
    %v1242 = vld [vmem:[#allocation7 + $0x20] sm:$0xff]
    %v1243 = vld [vmem:[#allocation7 + $0x28] sm:$0xff]
    %v1244 = vld [vmem:[#allocation7 + $0x30] sm:$0xff]
    %v1245 = vld [vmem:[#allocation7 + $0x38] sm:$0xff]
    %v1246 = vpack.c.bf16 %v1231, %v1230
    %v1247 = vpack.c.bf16 %v1233, %v1232
    %v1248 = vpack.c.bf16 %v1235, %v1234
    %v1249 = vpack.c.bf16 %v1237, %v1236
    %s1250 = scalar_lea.vmem %s4, 2
    %v1251 = vld [vmem:[%s1250] sm:$0x3]
    %v1253 = vperm.slane %v1251, 0
    %v1254 = vperm.slane %v1251, 1
    %v1265 = vunpack.c.l.b16 %v1238
    %v1266 = vunpack.c.h.b16 %v1238
    %v1267 = vunpack.c.l.b16 %v1239
    %v1268 = vunpack.c.h.b16 %v1239
    %v1269 = vunpack.c.l.b16 %v1240
    %v1270 = vunpack.c.h.b16 %v1240
    %v1271 = vunpack.c.l.b16 %v1241
    %v1272 = vunpack.c.h.b16 %v1241
    %v1273 = vunpack.c.l.b16 %v1242
    %v1274 = vunpack.c.h.b16 %v1242
    %v1275 = vunpack.c.l.b16 %v1243
    %v1276 = vunpack.c.h.b16 %v1243
    %v1277 = vunpack.c.l.b16 %v1244
    %v1278 = vunpack.c.h.b16 %v1244
    %v1279 = vunpack.c.l.b16 %v1245
    %v1280 = vunpack.c.h.b16 %v1245
    %v1281 = vpack.c.b16 %v1267, %v1265
    %v1282 = vpack.c.b16 %v1268, %v1266
    %v1283 = vpack.c.b16 %v1271, %v1269
    %v1284 = vpack.c.b16 %v1272, %v1270
    %v1285 = vpack.c.b16 %v1275, %v1273
    %v1286 = vpack.c.b16 %v1276, %v1274
    %v1287 = vpack.c.b16 %v1279, %v1277
    %v1288 = vpack.c.b16 %v1280, %v1278
    %v1298 = vsel %vm127, %v1246, 0
    %v1301 = vsel %vm127, %v1247, 0
    %v1304 = vsel %vm127, %v1248, 0
    %v1307 = vsel %vm127, %v1249, 0
    %1309 = vmatpush.bf16.msra.mxu0 0
    %1310 = vmatpush.bf16.msra.mxu0 0
    %1311 = vmatpush.bf16.msra.mxu0 0
    %1312 = vmatpush.bf16.msra.mxu0 0
    %1313 = vmatpush.bf16.msra.mxu0 %v1287
    %1314 = vmatpush.bf16.msra.mxu0 %v1285
    %1315 = vmatpush.bf16.msra.mxu0 %v1283
    %1316 = vmatpush.bf16.msra.mxu0 %v1281
    %1317 = vmatmul.bf16.gmra.mxu0 %v1298
    %v1318 = vpop.f32.mrf.mxu0
    %v1319 = vadd.f32 %v1253, %v1318
    %v1320 = vpop.f32.mrf.mxu0
    %v1321 = vadd.f32 %v1253, %v1320
    %1322 = vmatmul.bf16.gmra.mxu0 %v1301
    %v1323 = vpop.f32.mrf.mxu0
    %v1324 = vadd.f32 %v1253, %v1323
    %v1325 = vpop.f32.mrf.mxu0
    %v1326 = vadd.f32 %v1253, %v1325
    %1327 = vmatmul.bf16.gmra.mxu0 %v1304
    %v1328 = vpop.f32.mrf.mxu0
    %v1329 = vadd.f32 %v1253, %v1328
    %v1330 = vpop.f32.mrf.mxu0
    %v1331 = vadd.f32 %v1253, %v1330
    %1332 = vmatmul.bf16.gmra.mxu0 %v1307
    %v1333 = vpop.f32.mrf.mxu0
    %v1334 = vadd.f32 %v1253, %v1333
    %v1335 = vpop.f32.mrf.mxu0
    %v1336 = vadd.f32 %v1253, %v1335
    %1337 = vdwg.mxu0
    %1338 = vmatpush.bf16.msra.mxu0 0
    %1339 = vmatpush.bf16.msra.mxu0 0
    %1340 = vmatpush.bf16.msra.mxu0 0
    %1341 = vmatpush.bf16.msra.mxu0 0
    %1342 = vmatpush.bf16.msra.mxu0 %v1288
    %1343 = vmatpush.bf16.msra.mxu0 %v1286
    %1344 = vmatpush.bf16.msra.mxu0 %v1284
    %1345 = vmatpush.bf16.msra.mxu0 %v1282
    %1346 = vmatmul.bf16.gmra.mxu0 %v1298
    %v1347 = vpop.f32.mrf.mxu0
    %v1348 = vadd.f32 %v1254, %v1347
    %v1349 = vpop.f32.mrf.mxu0
    %v1350 = vadd.f32 %v1254, %v1349
    %1351 = vmatmul.bf16.gmra.mxu0 %v1301
    %v1352 = vpop.f32.mrf.mxu0
    %v1353 = vadd.f32 %v1254, %v1352
    %v1354 = vpop.f32.mrf.mxu0
    %v1355 = vadd.f32 %v1254, %v1354
    %1356 = vmatmul.bf16.gmra.mxu0 %v1304
    %v1357 = vpop.f32.mrf.mxu0
    %v1358 = vadd.f32 %v1254, %v1357
    %v1359 = vpop.f32.mrf.mxu0
    %v1360 = vadd.f32 %v1254, %v1359
    %1361 = vmatmul.bf16.gmra.mxu0 %v1307
    %v1362 = vpop.f32.mrf.mxu0
    %v1363 = vadd.f32 %v1254, %v1362
    %v1364 = vpop.f32.mrf.mxu0
    %v1365 = vadd.f32 %v1254, %v1364
    %1366 = vdwg.mxu0
    %1367 = vst [vmem:[#allocation2] sm:$0xff] %v1319
    %1368 = vst [vmem:[#allocation2 + $0x8] sm:$0xff] %v1348
    %1369 = vst [vmem:[#allocation2 + $0x10] sm:$0xff] %v1321
    %1370 = vst [vmem:[#allocation2 + $0x18] sm:$0xff] %v1350
    %1371 = vst [vmem:[#allocation2 + $0x20] sm:$0xff] %v1324
    %1372 = vst [vmem:[#allocation2 + $0x28] sm:$0xff] %v1353
    %1373 = vst [vmem:[#allocation2 + $0x30] sm:$0xff] %v1326
    %1374 = vst [vmem:[#allocation2 + $0x38] sm:$0xff] %v1355
    %1375 = vst [vmem:[#allocation2 + $0x40] sm:$0xff] %v1329
    %1376 = vst [vmem:[#allocation2 + $0x48] sm:$0xff] %v1358
    %1377 = vst [vmem:[#allocation2 + $0x50] sm:$0xff] %v1331
    %1378 = vst [vmem:[#allocation2 + $0x58] sm:$0xff] %v1360
    %1379 = vst [vmem:[#allocation2 + $0x60] sm:$0xff] %v1334
    %1380 = vst [vmem:[#allocation2 + $0x68] sm:$0xff] %v1363
    %1381 = vst [vmem:[#allocation2 + $0x70] sm:$0xff] %v1336
    %1382 = vst [vmem:[#allocation2 + $0x78] sm:$0xff] %v1365
    %s1383 = scalar_lea.vmem [#allocation9], 64
    %v1384 = vld [vmem:[%s1383] sm:$0xff]
    %v1385 = vld [vmem:[%s1383 + $0x8] sm:$0xff]
    %v1386 = vld [vmem:[%s1383 + $0x10] sm:$0xff]
    %v1387 = vld [vmem:[%s1383 + $0x18] sm:$0xff]
    %v1388 = vld [vmem:[%s1383 + $0x20] sm:$0xff]
    %v1389 = vld [vmem:[%s1383 + $0x28] sm:$0xff]
    %v1390 = vld [vmem:[%s1383 + $0x30] sm:$0xff]
    %v1391 = vld [vmem:[%s1383 + $0x38] sm:$0xff]
    %v1392 = vld [vmem:[#allocation2] sm:$0xff]
    %v1393 = vld [vmem:[#allocation2 + $0x8] sm:$0xff]
    %v1394 = vld [vmem:[%s291] sm:$0xff]
    %v1395 = vld [vmem:[%s291 + $0x8] sm:$0xff]
    %v1396 = vsel %vm161, %v1392, %v1394
    %v1397 = vsel %vm162, %v1393, %v1395
    %v1406 = vunpack.c.l.b16 %v1384
    %v1407 = vunpack.c.h.b16 %v1384
    %v1408 = vunpack.c.l.b16 %v1385
    %v1409 = vunpack.c.h.b16 %v1385
    %v1410 = vunpack.c.l.b16 %v1386
    %v1411 = vunpack.c.h.b16 %v1386
    %v1412 = vunpack.c.l.b16 %v1387
    %v1413 = vunpack.c.h.b16 %v1387
    %v1414 = vunpack.c.l.b16 %v1388
    %v1415 = vunpack.c.h.b16 %v1388
    %v1416 = vunpack.c.l.b16 %v1389
    %v1417 = vunpack.c.h.b16 %v1389
    %v1418 = vunpack.c.l.b16 %v1390
    %v1419 = vunpack.c.h.b16 %v1390
    %v1420 = vunpack.c.l.b16 %v1391
    %v1421 = vunpack.c.h.b16 %v1391
    %v1422 = vpack.c.b16 %v1408, %v1406
    %v1423 = vpack.c.b16 %v1409, %v1407
    %v1424 = vpack.c.b16 %v1412, %v1410
    %v1425 = vpack.c.b16 %v1413, %v1411
    %v1426 = vpack.c.b16 %v1416, %v1414
    %v1427 = vpack.c.b16 %v1417, %v1415
    %v1428 = vpack.c.b16 %v1420, %v1418
    %v1429 = vpack.c.b16 %v1421, %v1419
    %1438 = vmatpush.bf16.msra.mxu0 0
    %1439 = vmatpush.bf16.msra.mxu0 0
    %1440 = vmatpush.bf16.msra.mxu0 0
    %1441 = vmatpush.bf16.msra.mxu0 0
    %1442 = vmatpush.bf16.msra.mxu0 %v1428
    %1443 = vmatpush.bf16.msra.mxu0 %v1426
    %1444 = vmatpush.bf16.msra.mxu0 %v1424
    %1445 = vmatpush.bf16.msra.mxu0 %v1422
    %1446 = vmatmul.bf16.gmra.mxu0 %v337
    %v1447 = vpop.f32.mrf.mxu0
    %v1448 = vadd.f32 0.0, %v1447
    %v1449 = vpop.f32.mrf.mxu0
    %1450 = vdwg.mxu0
    %1451 = vmatpush.bf16.msra.mxu0 0
    %1452 = vmatpush.bf16.msra.mxu0 0
    %1453 = vmatpush.bf16.msra.mxu0 0
    %1454 = vmatpush.bf16.msra.mxu0 0
    %1455 = vmatpush.bf16.msra.mxu0 %v1429
    %1456 = vmatpush.bf16.msra.mxu0 %v1427
    %1457 = vmatpush.bf16.msra.mxu0 %v1425
    %1458 = vmatpush.bf16.msra.mxu0 %v1423
    %1459 = vmatmul.bf16.gmra.mxu0 %v337
    %v1460 = vpop.f32.mrf.mxu0
    %v1461 = vadd.f32 0.0, %v1460
    %v1462 = vpop.f32.mrf.mxu0
    %1463 = vdwg.mxu0
    %v1464 = vadd.f32 %v1396, %v1448
    %v1465 = vadd.f32 %v1397, %v1461
    %v1466 = vxor.u32 %v1464, 2147483648
    %v1467 = vxor.u32 %v1465, 2147483648
    %v1468 = vmul.f32 %v1466, 1.442695
    %v1469 = vpow.pop %v1468
    %v1470 = vmul.f32 %v1467, 1.442695
    %v1471 = vpow.pop %v1470
    %v1472 = vadd.f32 %v1469, 1.0
    %v1473 = vadd.f32 %v1471, 1.0
    %v1474 = vrcp.pop %v1472
    %v1475 = vmul.f32 %v1472, %v1474
    %v1476 = vsub.f32 1.0, %v1475
    %v1477 = vmul.f32 %v1474, %v1476
    %v1478 = vadd.f32 %v1474, %v1477
    %vm1479 = vweird.f32 %v1472
    %vm1480 = vweird.f32 %v1474
    %vm1481 = vmor %vm1479, %vm1480
    %v1482 = vsel %vm1481, %v1474, %v1478
    %v1483 = vand.u32 2147483647, %v1472
    %vm1484 = vcmp.eq.f32.partialorder %v1483, 8.507059e+37
    %v1485 = vand.u32 %v1472, 2147483648
    %v1486 = vor.u32 1.1754944e-38, %v1485
    %v1487 = vsel %vm1484, %v1486, %v1482
    %v1488 = vmul.f32 1.0, %v1487
    %v1489 = vrcp.pop %v1473
    %v1490 = vmul.f32 %v1473, %v1489
    %v1491 = vsub.f32 1.0, %v1490
    %v1492 = vmul.f32 %v1489, %v1491
    %v1493 = vadd.f32 %v1489, %v1492
    %vm1494 = vweird.f32 %v1473
    %vm1495 = vweird.f32 %v1489
    %vm1496 = vmor %vm1494, %vm1495
    %v1497 = vsel %vm1496, %v1489, %v1493
    %v1498 = vand.u32 2147483647, %v1473
    %vm1499 = vcmp.eq.f32.partialorder %v1498, 8.507059e+37
    %v1500 = vand.u32 %v1473, 2147483648
    %v1501 = vor.u32 1.1754944e-38, %v1500
    %v1502 = vsel %vm1499, %v1501, %v1497
    %v1503 = vmul.f32 1.0, %v1502
    %v1504 = vtanh.pop %v1465
    %v1505 = vmul.f32 %v1488, 0.0
    %1507 = vrot.lane.b32.xlu0 %v1504, 64
    %v1508 = vpop.permute.xlu0 %1507
    %v1510 = vmul.f32 %v1488, %v1508
    %1512 = vrot.lane.b32.xlu0 %v1510, 64
    %v1513 = vpop.permute.xlu0 %1512
    %v1515 = vadd.f32 %v1505, %v1513
    %v1516 = vtanh.pop %v1515
    %1518 = vrot.lane.b32.xlu0 %v1516, 64
    %v1519 = vpop.permute.xlu0 %1518
    %v1521 = vmul.f32 %v1503, %v1519
    %v1522 = vld [vmem:[#allocation4] sm:$0xff]
    %v1523 = vmul.f32 %v1522, %v1521
    %v1524 = vadd.f32 %v1523, 0.0
    %1526 = vrot.lane.b32.xlu0 %v1515, 64
    %v1527 = vpop.permute.xlu0 %1526
    %v1529 = vmul.f32 %v1522, %v1527
    %v1530 = vadd.f32 %v1529, 0.0
    %1531 = vst.msk [vmem:[#allocation3] sm:$0xff] %vm432, %v1523
    %1532 = vst.msk [vmem:[%s434] sm:$0xff] %vm435, %v1523
    %v1533 = vld [vmem:[%s437] sm:$0xff]
    %v1534 = vld [vmem:[%s437 + $0x8] sm:$0xff]
    %v1535 = vld [vmem:[%s440] sm:$0xff]
    %v1536 = vld [vmem:[%s440 + $0x8] sm:$0xff]
    %v1537 = vsel %vm161, %v1533, %v1535
    %v1538 = vsel %vm162, %v1534, %v1536
    %v1539 = vpack.c.bf16 %v1524, %v1524
    %v1541 = vsel %vm127, %v1539, 0
    %1543 = vmatpush.bf16.msra.mxu0 0
    %1544 = vmatpush.bf16.msra.mxu0 0
    %1545 = vmatpush.bf16.msra.mxu0 0
    %1546 = vmatpush.bf16.msra.mxu0 0
    %1547 = vmatpush.bf16.msra.mxu0 %v1428
    %1548 = vmatpush.bf16.msra.mxu0 %v1426
    %1549 = vmatpush.bf16.msra.mxu0 %v1424
    %1550 = vmatpush.bf16.msra.mxu0 %v1422
    %1551 = vmatmul.bf16.gmra.mxu0 %v1541
    %v1552 = vpop.f32.mrf.mxu0
    %v1553 = vadd.f32 0.0, %v1552
    %v1554 = vpop.f32.mrf.mxu0
    %1555 = vdwg.mxu0
    %1556 = vmatpush.bf16.msra.mxu0 0
    %1557 = vmatpush.bf16.msra.mxu0 0
    %1558 = vmatpush.bf16.msra.mxu0 0
    %1559 = vmatpush.bf16.msra.mxu0 0
    %1560 = vmatpush.bf16.msra.mxu0 %v1429
    %1561 = vmatpush.bf16.msra.mxu0 %v1427
    %1562 = vmatpush.bf16.msra.mxu0 %v1425
    %1563 = vmatpush.bf16.msra.mxu0 %v1423
    %1564 = vmatmul.bf16.gmra.mxu0 %v1541
    %v1565 = vpop.f32.mrf.mxu0
    %v1566 = vadd.f32 0.0, %v1565
    %v1567 = vpop.f32.mrf.mxu0
    %1568 = vdwg.mxu0
    %v1569 = vadd.f32 %v1537, %v1553
    %v1570 = vadd.f32 %v1538, %v1566
    %v1571 = vxor.u32 %v1569, 2147483648
    %v1572 = vxor.u32 %v1570, 2147483648
    %v1573 = vmul.f32 %v1571, 1.442695
    %v1574 = vpow.pop %v1573
    %v1575 = vmul.f32 %v1572, 1.442695
    %v1576 = vpow.pop %v1575
    %v1577 = vadd.f32 %v1574, 1.0
    %v1578 = vadd.f32 %v1576, 1.0
    %v1579 = vrcp.pop %v1577
    %v1580 = vmul.f32 %v1577, %v1579
    %v1581 = vsub.f32 1.0, %v1580
    %v1582 = vmul.f32 %v1579, %v1581
    %v1583 = vadd.f32 %v1579, %v1582
    %vm1584 = vweird.f32 %v1577
    %vm1585 = vweird.f32 %v1579
    %vm1586 = vmor %vm1584, %vm1585
    %v1587 = vsel %vm1586, %v1579, %v1583
    %v1588 = vand.u32 2147483647, %v1577
    %vm1589 = vcmp.eq.f32.partialorder %v1588, 8.507059e+37
    %v1590 = vand.u32 %v1577, 2147483648
    %v1591 = vor.u32 1.1754944e-38, %v1590
    %v1592 = vsel %vm1589, %v1591, %v1587
    %v1593 = vmul.f32 1.0, %v1592
    %v1594 = vrcp.pop %v1578
    %v1595 = vmul.f32 %v1578, %v1594
    %v1596 = vsub.f32 1.0, %v1595
    %v1597 = vmul.f32 %v1594, %v1596
    %v1598 = vadd.f32 %v1594, %v1597
    %vm1599 = vweird.f32 %v1578
    %vm1600 = vweird.f32 %v1594
    %vm1601 = vmor %vm1599, %vm1600
    %v1602 = vsel %vm1601, %v1594, %v1598
    %v1603 = vand.u32 2147483647, %v1578
    %vm1604 = vcmp.eq.f32.partialorder %v1603, 8.507059e+37
    %v1605 = vand.u32 %v1578, 2147483648
    %v1606 = vor.u32 1.1754944e-38, %v1605
    %v1607 = vsel %vm1604, %v1606, %v1602
    %v1608 = vmul.f32 1.0, %v1607
    %v1609 = vtanh.pop %v1570
    %1611 = vrot.lane.b32.xlu0 %v1530, 64
    %v1612 = vpop.permute.xlu0 %1611
    %v1614 = vmul.f32 %v1593, %v1612
    %1616 = vrot.lane.b32.xlu0 %v1609, 64
    %v1617 = vpop.permute.xlu0 %1616
    %v1619 = vmul.f32 %v1593, %v1617
    %1621 = vrot.lane.b32.xlu0 %v1619, 64
    %v1622 = vpop.permute.xlu0 %1621
    %v1624 = vadd.f32 %v1614, %v1622
    %v1625 = vtanh.pop %v1624
    %1627 = vrot.lane.b32.xlu0 %v1625, 64
    %v1628 = vpop.permute.xlu0 %1627
    %v1630 = vmul.f32 %v1608, %v1628
    %v1631 = vld [vmem:[%s537] sm:$0xff]
    %v1632 = vsub.f32 %v1630, %v1524
    %v1633 = vmul.f32 %v1631, %v1632
    %v1634 = vadd.f32 %v1524, %v1633
    %v1635 = vsub.f32 %v1624, %v1612
    %1637 = vrot.lane.b32.xlu0 %v1635, 64
    %v1638 = vpop.permute.xlu0 %1637
    %v1640 = vmul.f32 %v1631, %v1638
    %v1641 = vadd.f32 %v1530, %v1640
    %v1642 = vmul.f32 %v1631, %v1630
    %1643 = vst.msk [vmem:[%s550] sm:$0xff] %vm432, %v1642
    %1644 = vst.msk [vmem:[%s552] sm:$0xff] %vm435, %v1642
    %v1645 = vld [vmem:[%s554] sm:$0xff]
    %v1646 = vld [vmem:[%s554 + $0x8] sm:$0xff]
    %v1647 = vld [vmem:[%s557] sm:$0xff]
    %v1648 = vld [vmem:[%s557 + $0x8] sm:$0xff]
    %v1649 = vsel %vm161, %v1645, %v1647
    %v1650 = vsel %vm162, %v1646, %v1648
    %v1651 = vpack.c.bf16 %v1634, %v1634
    %v1653 = vsel %vm127, %v1651, 0
    %1655 = vmatpush.bf16.msra.mxu0 0
    %1656 = vmatpush.bf16.msra.mxu0 0
    %1657 = vmatpush.bf16.msra.mxu0 0
    %1658 = vmatpush.bf16.msra.mxu0 0
    %1659 = vmatpush.bf16.msra.mxu0 %v1428
    %1660 = vmatpush.bf16.msra.mxu0 %v1426
    %1661 = vmatpush.bf16.msra.mxu0 %v1424
    %1662 = vmatpush.bf16.msra.mxu0 %v1422
    %1663 = vmatmul.bf16.gmra.mxu0 %v1653
    %v1664 = vpop.f32.mrf.mxu0
    %v1665 = vadd.f32 0.0, %v1664
    %v1666 = vpop.f32.mrf.mxu0
    %1667 = vdwg.mxu0
    %1668 = vmatpush.bf16.msra.mxu0 0
    %1669 = vmatpush.bf16.msra.mxu0 0
    %1670 = vmatpush.bf16.msra.mxu0 0
    %1671 = vmatpush.bf16.msra.mxu0 0
    %1672 = vmatpush.bf16.msra.mxu0 %v1429
    %1673 = vmatpush.bf16.msra.mxu0 %v1427
    %1674 = vmatpush.bf16.msra.mxu0 %v1425
    %1675 = vmatpush.bf16.msra.mxu0 %v1423
    %1676 = vmatmul.bf16.gmra.mxu0 %v1653
    %v1677 = vpop.f32.mrf.mxu0
    %v1678 = vadd.f32 0.0, %v1677
    %v1679 = vpop.f32.mrf.mxu0
    %1680 = vdwg.mxu0
    %v1681 = vadd.f32 %v1649, %v1665
    %v1682 = vadd.f32 %v1650, %v1678
    %v1683 = vxor.u32 %v1681, 2147483648
    %v1684 = vxor.u32 %v1682, 2147483648
    %v1685 = vmul.f32 %v1683, 1.442695
    %v1686 = vpow.pop %v1685
    %v1687 = vmul.f32 %v1684, 1.442695
    %v1688 = vpow.pop %v1687
    %v1689 = vadd.f32 %v1686, 1.0
    %v1690 = vadd.f32 %v1688, 1.0
    %v1691 = vrcp.pop %v1689
    %v1692 = vmul.f32 %v1689, %v1691
    %v1693 = vsub.f32 1.0, %v1692
    %v1694 = vmul.f32 %v1691, %v1693
    %v1695 = vadd.f32 %v1691, %v1694
    %vm1696 = vweird.f32 %v1689
    %vm1697 = vweird.f32 %v1691
    %vm1698 = vmor %vm1696, %vm1697
    %v1699 = vsel %vm1698, %v1691, %v1695
    %v1700 = vand.u32 2147483647, %v1689
    %vm1701 = vcmp.eq.f32.partialorder %v1700, 8.507059e+37
    %v1702 = vand.u32 %v1689, 2147483648
    %v1703 = vor.u32 1.1754944e-38, %v1702
    %v1704 = vsel %vm1701, %v1703, %v1699
    %v1705 = vmul.f32 1.0, %v1704
    %v1706 = vrcp.pop %v1690
    %v1707 = vmul.f32 %v1690, %v1706
    %v1708 = vsub.f32 1.0, %v1707
    %v1709 = vmul.f32 %v1706, %v1708
    %v1710 = vadd.f32 %v1706, %v1709
    %vm1711 = vweird.f32 %v1690
    %vm1712 = vweird.f32 %v1706
    %vm1713 = vmor %vm1711, %vm1712
    %v1714 = vsel %vm1713, %v1706, %v1710
    %v1715 = vand.u32 2147483647, %v1690
    %vm1716 = vcmp.eq.f32.partialorder %v1715, 8.507059e+37
    %v1717 = vand.u32 %v1690, 2147483648
    %v1718 = vor.u32 1.1754944e-38, %v1717
    %v1719 = vsel %vm1716, %v1718, %v1714
    %v1720 = vmul.f32 1.0, %v1719
    %v1721 = vtanh.pop %v1682
    %1723 = vrot.lane.b32.xlu0 %v1641, 64
    %v1724 = vpop.permute.xlu0 %1723
    %v1726 = vmul.f32 %v1705, %v1724
    %1728 = vrot.lane.b32.xlu0 %v1721, 64
    %v1729 = vpop.permute.xlu0 %1728
    %v1731 = vmul.f32 %v1705, %v1729
    %1733 = vrot.lane.b32.xlu0 %v1731, 64
    %v1734 = vpop.permute.xlu0 %1733
    %v1736 = vadd.f32 %v1726, %v1734
    %v1737 = vtanh.pop %v1736
    %1739 = vrot.lane.b32.xlu0 %v1737, 64
    %v1740 = vpop.permute.xlu0 %1739
    %v1742 = vmul.f32 %v1720, %v1740
    %v1743 = vld [vmem:[%s654] sm:$0xff]
    %v1744 = vsub.f32 %v1742, %v1634
    %v1745 = vmul.f32 %v1743, %v1744
    %v1746 = vadd.f32 %v1634, %v1745
    %v1747 = vsub.f32 %v1736, %v1724
    %1749 = vrot.lane.b32.xlu0 %v1747, 64
    %v1750 = vpop.permute.xlu0 %1749
    %v1752 = vmul.f32 %v1743, %v1750
    %v1753 = vadd.f32 %v1641, %v1752
    %v1754 = vmul.f32 %v1743, %v1742
    %1755 = vst.msk [vmem:[%s667] sm:$0xff] %vm432, %v1754
    %1756 = vst.msk [vmem:[%s669] sm:$0xff] %vm435, %v1754
    %v1757 = vld [vmem:[%s671] sm:$0xff]
    %v1758 = vld [vmem:[%s671 + $0x8] sm:$0xff]
    %v1759 = vld [vmem:[%s674] sm:$0xff]
    %v1760 = vld [vmem:[%s674 + $0x8] sm:$0xff]
    %v1761 = vsel %vm161, %v1757, %v1759
    %v1762 = vsel %vm162, %v1758, %v1760
    %v1763 = vpack.c.bf16 %v1746, %v1746
    %v1765 = vsel %vm127, %v1763, 0
    %1767 = vmatpush.bf16.msra.mxu0 0
    %1768 = vmatpush.bf16.msra.mxu0 0
    %1769 = vmatpush.bf16.msra.mxu0 0
    %1770 = vmatpush.bf16.msra.mxu0 0
    %1771 = vmatpush.bf16.msra.mxu0 %v1428
    %1772 = vmatpush.bf16.msra.mxu0 %v1426
    %1773 = vmatpush.bf16.msra.mxu0 %v1424
    %1774 = vmatpush.bf16.msra.mxu0 %v1422
    %1775 = vmatmul.bf16.gmra.mxu0 %v1765
    %v1776 = vpop.f32.mrf.mxu0
    %v1777 = vadd.f32 0.0, %v1776
    %v1778 = vpop.f32.mrf.mxu0
    %1779 = vdwg.mxu0
    %1780 = vmatpush.bf16.msra.mxu0 0
    %1781 = vmatpush.bf16.msra.mxu0 0
    %1782 = vmatpush.bf16.msra.mxu0 0
    %1783 = vmatpush.bf16.msra.mxu0 0
    %1784 = vmatpush.bf16.msra.mxu0 %v1429
    %1785 = vmatpush.bf16.msra.mxu0 %v1427
    %1786 = vmatpush.bf16.msra.mxu0 %v1425
    %1787 = vmatpush.bf16.msra.mxu0 %v1423
    %1788 = vmatmul.bf16.gmra.mxu0 %v1765
    %v1789 = vpop.f32.mrf.mxu0
    %v1790 = vadd.f32 0.0, %v1789
    %v1791 = vpop.f32.mrf.mxu0
    %1792 = vdwg.mxu0
    %v1793 = vadd.f32 %v1761, %v1777
    %v1794 = vadd.f32 %v1762, %v1790
    %v1795 = vxor.u32 %v1793, 2147483648
    %v1796 = vxor.u32 %v1794, 2147483648
    %v1797 = vmul.f32 %v1795, 1.442695
    %v1798 = vpow.pop %v1797
    %v1799 = vmul.f32 %v1796, 1.442695
    %v1800 = vpow.pop %v1799
    %v1801 = vadd.f32 %v1798, 1.0
    %v1802 = vadd.f32 %v1800, 1.0
    %v1803 = vrcp.pop %v1801
    %v1804 = vmul.f32 %v1801, %v1803
    %v1805 = vsub.f32 1.0, %v1804
    %v1806 = vmul.f32 %v1803, %v1805
    %v1807 = vadd.f32 %v1803, %v1806
    %vm1808 = vweird.f32 %v1801
    %vm1809 = vweird.f32 %v1803
    %vm1810 = vmor %vm1808, %vm1809
    %v1811 = vsel %vm1810, %v1803, %v1807
    %v1812 = vand.u32 2147483647, %v1801
    %vm1813 = vcmp.eq.f32.partialorder %v1812, 8.507059e+37
    %v1814 = vand.u32 %v1801, 2147483648
    %v1815 = vor.u32 1.1754944e-38, %v1814
    %v1816 = vsel %vm1813, %v1815, %v1811
    %v1817 = vmul.f32 1.0, %v1816
    %v1818 = vrcp.pop %v1802
    %v1819 = vmul.f32 %v1802, %v1818
    %v1820 = vsub.f32 1.0, %v1819
    %v1821 = vmul.f32 %v1818, %v1820
    %v1822 = vadd.f32 %v1818, %v1821
    %vm1823 = vweird.f32 %v1802
    %vm1824 = vweird.f32 %v1818
    %vm1825 = vmor %vm1823, %vm1824
    %v1826 = vsel %vm1825, %v1818, %v1822
    %v1827 = vand.u32 2147483647, %v1802
    %vm1828 = vcmp.eq.f32.partialorder %v1827, 8.507059e+37
    %v1829 = vand.u32 %v1802, 2147483648
    %v1830 = vor.u32 1.1754944e-38, %v1829
    %v1831 = vsel %vm1828, %v1830, %v1826
    %v1832 = vmul.f32 1.0, %v1831
    %v1833 = vtanh.pop %v1794
    %1835 = vrot.lane.b32.xlu0 %v1753, 64
    %v1836 = vpop.permute.xlu0 %1835
    %v1838 = vmul.f32 %v1817, %v1836
    %1840 = vrot.lane.b32.xlu0 %v1833, 64
    %v1841 = vpop.permute.xlu0 %1840
    %v1843 = vmul.f32 %v1817, %v1841
    %1845 = vrot.lane.b32.xlu0 %v1843, 64
    %v1846 = vpop.permute.xlu0 %1845
    %v1848 = vadd.f32 %v1838, %v1846
    %v1849 = vtanh.pop %v1848
    %1851 = vrot.lane.b32.xlu0 %v1849, 64
    %v1852 = vpop.permute.xlu0 %1851
    %v1854 = vmul.f32 %v1832, %v1852
    %v1855 = vld [vmem:[%s771] sm:$0xff]
    %v1856 = vsub.f32 %v1854, %v1746
    %v1857 = vmul.f32 %v1855, %v1856
    %v1858 = vadd.f32 %v1746, %v1857
    %v1859 = vsub.f32 %v1848, %v1836
    %1861 = vrot.lane.b32.xlu0 %v1859, 64
    %v1862 = vpop.permute.xlu0 %1861
    %v1864 = vmul.f32 %v1855, %v1862
    %v1865 = vadd.f32 %v1753, %v1864
    %v1866 = vmul.f32 %v1855, %v1854
    %1867 = vst.msk [vmem:[%s784] sm:$0xff] %vm432, %v1866
    %1868 = vst.msk [vmem:[%s786] sm:$0xff] %vm435, %v1866
    %v1869 = vld [vmem:[%s674] sm:$0xff]
    %v1870 = vld [vmem:[%s674 + $0x8] sm:$0xff]
    %v1871 = vld [vmem:[%s671] sm:$0xff]
    %v1872 = vld [vmem:[%s671 + $0x8] sm:$0xff]
    %v1873 = vsel %vm161, %v1869, %v1871
    %v1874 = vsel %vm162, %v1870, %v1872
    %v1875 = vpack.c.bf16 %v1858, %v1858
    %v1877 = vsel %vm127, %v1875, 0
    %1879 = vmatpush.bf16.msra.mxu0 0
    %1880 = vmatpush.bf16.msra.mxu0 0
    %1881 = vmatpush.bf16.msra.mxu0 0
    %1882 = vmatpush.bf16.msra.mxu0 0
    %1883 = vmatpush.bf16.msra.mxu0 %v1428
    %1884 = vmatpush.bf16.msra.mxu0 %v1426
    %1885 = vmatpush.bf16.msra.mxu0 %v1424
    %1886 = vmatpush.bf16.msra.mxu0 %v1422
    %1887 = vmatmul.bf16.gmra.mxu0 %v1877
    %v1888 = vpop.f32.mrf.mxu0
    %v1889 = vadd.f32 0.0, %v1888
    %v1890 = vpop.f32.mrf.mxu0
    %1891 = vdwg.mxu0
    %1892 = vmatpush.bf16.msra.mxu0 0
    %1893 = vmatpush.bf16.msra.mxu0 0
    %1894 = vmatpush.bf16.msra.mxu0 0
    %1895 = vmatpush.bf16.msra.mxu0 0
    %1896 = vmatpush.bf16.msra.mxu0 %v1429
    %1897 = vmatpush.bf16.msra.mxu0 %v1427
    %1898 = vmatpush.bf16.msra.mxu0 %v1425
    %1899 = vmatpush.bf16.msra.mxu0 %v1423
    %1900 = vmatmul.bf16.gmra.mxu0 %v1877
    %v1901 = vpop.f32.mrf.mxu0
    %v1902 = vadd.f32 0.0, %v1901
    %v1903 = vpop.f32.mrf.mxu0
    %1904 = vdwg.mxu0
    %v1905 = vadd.f32 %v1873, %v1889
    %v1906 = vadd.f32 %v1874, %v1902
    %v1907 = vxor.u32 %v1905, 2147483648
    %v1908 = vxor.u32 %v1906, 2147483648
    %v1909 = vmul.f32 %v1907, 1.442695
    %v1910 = vpow.pop %v1909
    %v1911 = vmul.f32 %v1908, 1.442695
    %v1912 = vpow.pop %v1911
    %v1913 = vadd.f32 %v1910, 1.0
    %v1914 = vadd.f32 %v1912, 1.0
    %v1915 = vrcp.pop %v1913
    %v1916 = vmul.f32 %v1913, %v1915
    %v1917 = vsub.f32 1.0, %v1916
    %v1918 = vmul.f32 %v1915, %v1917
    %v1919 = vadd.f32 %v1915, %v1918
    %vm1920 = vweird.f32 %v1913
    %vm1921 = vweird.f32 %v1915
    %vm1922 = vmor %vm1920, %vm1921
    %v1923 = vsel %vm1922, %v1915, %v1919
    %v1924 = vand.u32 2147483647, %v1913
    %vm1925 = vcmp.eq.f32.partialorder %v1924, 8.507059e+37
    %v1926 = vand.u32 %v1913, 2147483648
    %v1927 = vor.u32 1.1754944e-38, %v1926
    %v1928 = vsel %vm1925, %v1927, %v1923
    %v1929 = vmul.f32 1.0, %v1928
    %v1930 = vrcp.pop %v1914
    %v1931 = vmul.f32 %v1914, %v1930
    %v1932 = vsub.f32 1.0, %v1931
    %v1933 = vmul.f32 %v1930, %v1932
    %v1934 = vadd.f32 %v1930, %v1933
    %vm1935 = vweird.f32 %v1914
    %vm1936 = vweird.f32 %v1930
    %vm1937 = vmor %vm1935, %vm1936
    %v1938 = vsel %vm1937, %v1930, %v1934
    %v1939 = vand.u32 2147483647, %v1914
    %vm1940 = vcmp.eq.f32.partialorder %v1939, 8.507059e+37
    %v1941 = vand.u32 %v1914, 2147483648
    %v1942 = vor.u32 1.1754944e-38, %v1941
    %v1943 = vsel %vm1940, %v1942, %v1938
    %v1944 = vmul.f32 1.0, %v1943
    %v1945 = vtanh.pop %v1906
    %1947 = vrot.lane.b32.xlu0 %v1865, 64
    %v1948 = vpop.permute.xlu0 %1947
    %v1950 = vmul.f32 %v1929, %v1948
    %1952 = vrot.lane.b32.xlu0 %v1945, 64
    %v1953 = vpop.permute.xlu0 %1952
    %v1955 = vmul.f32 %v1929, %v1953
    %1957 = vrot.lane.b32.xlu0 %v1955, 64
    %v1958 = vpop.permute.xlu0 %1957
    %v1960 = vadd.f32 %v1950, %v1958
    %v1961 = vtanh.pop %v1960
    %1963 = vrot.lane.b32.xlu0 %v1961, 64
    %v1964 = vpop.permute.xlu0 %1963
    %v1966 = vmul.f32 %v1944, %v1964
    %v1967 = vld [vmem:[%s886] sm:$0xff]
    %v1968 = vsub.f32 %v1966, %v1858
    %v1969 = vmul.f32 %v1967, %v1968
    %v1970 = vadd.f32 %v1858, %v1969
    %v1971 = vsub.f32 %v1960, %v1948
    %1973 = vrot.lane.b32.xlu0 %v1971, 64
    %v1974 = vpop.permute.xlu0 %1973
    %v1976 = vmul.f32 %v1967, %v1974
    %v1977 = vadd.f32 %v1865, %v1976
    %v1978 = vmul.f32 %v1967, %v1966
    %1979 = vst.msk [vmem:[%s786] sm:$0xff] %vm432, %v1978
    %1980 = vst.msk [vmem:[%s784] sm:$0xff] %vm435, %v1978
    %v1981 = vld [vmem:[%s557] sm:$0xff]
    %v1982 = vld [vmem:[%s557 + $0x8] sm:$0xff]
    %v1983 = vld [vmem:[%s554] sm:$0xff]
    %v1984 = vld [vmem:[%s554 + $0x8] sm:$0xff]
    %v1985 = vsel %vm161, %v1981, %v1983
    %v1986 = vsel %vm162, %v1982, %v1984
    %v1987 = vpack.c.bf16 %v1970, %v1970
    %v1989 = vsel %vm127, %v1987, 0
    %1991 = vmatpush.bf16.msra.mxu0 0
    %1992 = vmatpush.bf16.msra.mxu0 0
    %1993 = vmatpush.bf16.msra.mxu0 0
    %1994 = vmatpush.bf16.msra.mxu0 0
    %1995 = vmatpush.bf16.msra.mxu0 %v1428
    %1996 = vmatpush.bf16.msra.mxu0 %v1426
    %1997 = vmatpush.bf16.msra.mxu0 %v1424
    %1998 = vmatpush.bf16.msra.mxu0 %v1422
    %1999 = vmatmul.bf16.gmra.mxu0 %v1989
    %v2000 = vpop.f32.mrf.mxu0
    %v2001 = vadd.f32 0.0, %v2000
    %v2002 = vpop.f32.mrf.mxu0
    %2003 = vdwg.mxu0
    %2004 = vmatpush.bf16.msra.mxu0 0
    %2005 = vmatpush.bf16.msra.mxu0 0
    %2006 = vmatpush.bf16.msra.mxu0 0
    %2007 = vmatpush.bf16.msra.mxu0 0
    %2008 = vmatpush.bf16.msra.mxu0 %v1429
    %2009 = vmatpush.bf16.msra.mxu0 %v1427
    %2010 = vmatpush.bf16.msra.mxu0 %v1425
    %2011 = vmatpush.bf16.msra.mxu0 %v1423
    %2012 = vmatmul.bf16.gmra.mxu0 %v1989
    %v2013 = vpop.f32.mrf.mxu0
    %v2014 = vadd.f32 0.0, %v2013
    %v2015 = vpop.f32.mrf.mxu0
    %2016 = vdwg.mxu0
    %v2017 = vadd.f32 %v1985, %v2001
    %v2018 = vadd.f32 %v1986, %v2014
    %v2019 = vxor.u32 %v2017, 2147483648
    %v2020 = vxor.u32 %v2018, 2147483648
    %v2021 = vmul.f32 %v2019, 1.442695
    %v2022 = vpow.pop %v2021
    %v2023 = vmul.f32 %v2020, 1.442695
    %v2024 = vpow.pop %v2023
    %v2025 = vadd.f32 %v2022, 1.0
    %v2026 = vadd.f32 %v2024, 1.0
    %v2027 = vrcp.pop %v2025
    %v2028 = vmul.f32 %v2025, %v2027
    %v2029 = vsub.f32 1.0, %v2028
    %v2030 = vmul.f32 %v2027, %v2029
    %v2031 = vadd.f32 %v2027, %v2030
    %vm2032 = vweird.f32 %v2025
    %vm2033 = vweird.f32 %v2027
    %vm2034 = vmor %vm2032, %vm2033
    %v2035 = vsel %vm2034, %v2027, %v2031
    %v2036 = vand.u32 2147483647, %v2025
    %vm2037 = vcmp.eq.f32.partialorder %v2036, 8.507059e+37
    %v2038 = vand.u32 %v2025, 2147483648
    %v2039 = vor.u32 1.1754944e-38, %v2038
    %v2040 = vsel %vm2037, %v2039, %v2035
    %v2041 = vmul.f32 1.0, %v2040
    %v2042 = vrcp.pop %v2026
    %v2043 = vmul.f32 %v2026, %v2042
    %v2044 = vsub.f32 1.0, %v2043
    %v2045 = vmul.f32 %v2042, %v2044
    %v2046 = vadd.f32 %v2042, %v2045
    %vm2047 = vweird.f32 %v2026
    %vm2048 = vweird.f32 %v2042
    %vm2049 = vmor %vm2047, %vm2048
    %v2050 = vsel %vm2049, %v2042, %v2046
    %v2051 = vand.u32 2147483647, %v2026
    %vm2052 = vcmp.eq.f32.partialorder %v2051, 8.507059e+37
    %v2053 = vand.u32 %v2026, 2147483648
    %v2054 = vor.u32 1.1754944e-38, %v2053
    %v2055 = vsel %vm2052, %v2054, %v2050
    %v2056 = vmul.f32 1.0, %v2055
    %v2057 = vtanh.pop %v2018
    %2059 = vrot.lane.b32.xlu0 %v1977, 64
    %v2060 = vpop.permute.xlu0 %2059
    %v2062 = vmul.f32 %v2041, %v2060
    %2064 = vrot.lane.b32.xlu0 %v2057, 64
    %v2065 = vpop.permute.xlu0 %2064
    %v2067 = vmul.f32 %v2041, %v2065
    %2069 = vrot.lane.b32.xlu0 %v2067, 64
    %v2070 = vpop.permute.xlu0 %2069
    %v2072 = vadd.f32 %v2062, %v2070
    %v2073 = vtanh.pop %v2072
    %2075 = vrot.lane.b32.xlu0 %v2073, 64
    %v2076 = vpop.permute.xlu0 %2075
    %v2078 = vmul.f32 %v2056, %v2076
    %v2079 = vld [vmem:[%s999] sm:$0xff]
    %v2080 = vsub.f32 %v2078, %v1970
    %v2081 = vmul.f32 %v2079, %v2080
    %v2082 = vadd.f32 %v1970, %v2081
    %v2083 = vsub.f32 %v2072, %v2060
    %2085 = vrot.lane.b32.xlu0 %v2083, 64
    %v2086 = vpop.permute.xlu0 %2085
    %v2088 = vmul.f32 %v2079, %v2086
    %v2089 = vadd.f32 %v1977, %v2088
    %v2090 = vmul.f32 %v2079, %v2078
    %2091 = vst.msk [vmem:[%s669] sm:$0xff] %vm432, %v2090
    %2092 = vst.msk [vmem:[%s667] sm:$0xff] %vm435, %v2090
    %v2093 = vld [vmem:[%s440] sm:$0xff]
    %v2094 = vld [vmem:[%s440 + $0x8] sm:$0xff]
    %v2095 = vld [vmem:[%s437] sm:$0xff]
    %v2096 = vld [vmem:[%s437 + $0x8] sm:$0xff]
    %v2097 = vsel %vm161, %v2093, %v2095
    %v2098 = vsel %vm162, %v2094, %v2096
    %v2099 = vpack.c.bf16 %v2082, %v2082
    %v2101 = vsel %vm127, %v2099, 0
    %2103 = vmatpush.bf16.msra.mxu0 0
    %2104 = vmatpush.bf16.msra.mxu0 0
    %2105 = vmatpush.bf16.msra.mxu0 0
    %2106 = vmatpush.bf16.msra.mxu0 0
    %2107 = vmatpush.bf16.msra.mxu0 %v1428
    %2108 = vmatpush.bf16.msra.mxu0 %v1426
    %2109 = vmatpush.bf16.msra.mxu0 %v1424
    %2110 = vmatpush.bf16.msra.mxu0 %v1422
    %2111 = vmatmul.bf16.gmra.mxu0 %v2101
    %v2112 = vpop.f32.mrf.mxu0
    %v2113 = vadd.f32 0.0, %v2112
    %v2114 = vpop.f32.mrf.mxu0
    %2115 = vdwg.mxu0
    %2116 = vmatpush.bf16.msra.mxu0 0
    %2117 = vmatpush.bf16.msra.mxu0 0
    %2118 = vmatpush.bf16.msra.mxu0 0
    %2119 = vmatpush.bf16.msra.mxu0 0
    %2120 = vmatpush.bf16.msra.mxu0 %v1429
    %2121 = vmatpush.bf16.msra.mxu0 %v1427
    %2122 = vmatpush.bf16.msra.mxu0 %v1425
    %2123 = vmatpush.bf16.msra.mxu0 %v1423
    %2124 = vmatmul.bf16.gmra.mxu0 %v2101
    %v2125 = vpop.f32.mrf.mxu0
    %v2126 = vadd.f32 0.0, %v2125
    %v2127 = vpop.f32.mrf.mxu0
    %2128 = vdwg.mxu0
    %v2129 = vadd.f32 %v2097, %v2113
    %v2130 = vadd.f32 %v2098, %v2126
    %v2131 = vxor.u32 %v2129, 2147483648
    %v2132 = vxor.u32 %v2130, 2147483648
    %v2133 = vmul.f32 %v2131, 1.442695
    %v2134 = vpow.pop %v2133
    %v2135 = vmul.f32 %v2132, 1.442695
    %v2136 = vpow.pop %v2135
    %v2137 = vadd.f32 %v2134, 1.0
    %v2138 = vadd.f32 %v2136, 1.0
    %v2139 = vrcp.pop %v2137
    %v2140 = vmul.f32 %v2137, %v2139
    %v2141 = vsub.f32 1.0, %v2140
    %v2142 = vmul.f32 %v2139, %v2141
    %v2143 = vadd.f32 %v2139, %v2142
    %vm2144 = vweird.f32 %v2137
    %vm2145 = vweird.f32 %v2139
    %vm2146 = vmor %vm2144, %vm2145
    %v2147 = vsel %vm2146, %v2139, %v2143
    %v2148 = vand.u32 2147483647, %v2137
    %vm2149 = vcmp.eq.f32.partialorder %v2148, 8.507059e+37
    %v2150 = vand.u32 %v2137, 2147483648
    %v2151 = vor.u32 1.1754944e-38, %v2150
    %v2152 = vsel %vm2149, %v2151, %v2147
    %v2153 = vmul.f32 1.0, %v2152
    %v2154 = vrcp.pop %v2138
    %v2155 = vmul.f32 %v2138, %v2154
    %v2156 = vsub.f32 1.0, %v2155
    %v2157 = vmul.f32 %v2154, %v2156
    %v2158 = vadd.f32 %v2154, %v2157
    %vm2159 = vweird.f32 %v2138
    %vm2160 = vweird.f32 %v2154
    %vm2161 = vmor %vm2159, %vm2160
    %v2162 = vsel %vm2161, %v2154, %v2158
    %v2163 = vand.u32 2147483647, %v2138
    %vm2164 = vcmp.eq.f32.partialorder %v2163, 8.507059e+37
    %v2165 = vand.u32 %v2138, 2147483648
    %v2166 = vor.u32 1.1754944e-38, %v2165
    %v2167 = vsel %vm2164, %v2166, %v2162
    %v2168 = vmul.f32 1.0, %v2167
    %v2169 = vtanh.pop %v2130
    %2171 = vrot.lane.b32.xlu0 %v2089, 64
    %v2172 = vpop.permute.xlu0 %2171
    %v2174 = vmul.f32 %v2153, %v2172
    %2176 = vrot.lane.b32.xlu0 %v2169, 64
    %v2177 = vpop.permute.xlu0 %2176
    %v2179 = vmul.f32 %v2153, %v2177
    %2181 = vrot.lane.b32.xlu0 %v2179, 64
    %v2182 = vpop.permute.xlu0 %2181
    %v2184 = vadd.f32 %v2174, %v2182
    %v2185 = vtanh.pop %v2184
    %2187 = vrot.lane.b32.xlu0 %v2185, 64
    %v2188 = vpop.permute.xlu0 %2187
    %v2190 = vmul.f32 %v2168, %v2188
    %v2191 = vld [vmem:[%s1112] sm:$0xff]
    %v2192 = vsub.f32 %v2190, %v2082
    %v2193 = vmul.f32 %v2191, %v2192
    %v2194 = vadd.f32 %v2082, %v2193
    %v2195 = vsub.f32 %v2184, %v2172
    %2197 = vrot.lane.b32.xlu0 %v2195, 64
    %v2198 = vpop.permute.xlu0 %2197
    %v2200 = vmul.f32 %v2191, %v2198
    %v2201 = vadd.f32 %v2089, %v2200
    %v2202 = vmul.f32 %v2191, %v2190
    %2203 = vst.msk [vmem:[%s552] sm:$0xff] %vm432, %v2202
    %2204 = vst.msk [vmem:[%s550] sm:$0xff] %vm435, %v2202
    %v2205 = vld [vmem:[%s291] sm:$0xff]
    %v2206 = vld [vmem:[%s291 + $0x8] sm:$0xff]
    %v2207 = vld [vmem:[#allocation2] sm:$0xff]
    %v2208 = vld [vmem:[#allocation2 + $0x8] sm:$0xff]
    %v2209 = vsel %vm161, %v2205, %v2207
    %v2210 = vsel %vm162, %v2206, %v2208
    %v2211 = vpack.c.bf16 %v2194, %v2194
    %v2213 = vsel %vm127, %v2211, 0
    %2215 = vmatpush.bf16.msra.mxu0 0
    %2216 = vmatpush.bf16.msra.mxu0 0
    %2217 = vmatpush.bf16.msra.mxu0 0
    %2218 = vmatpush.bf16.msra.mxu0 0
    %2219 = vmatpush.bf16.msra.mxu0 %v1428
    %2220 = vmatpush.bf16.msra.mxu0 %v1426
    %2221 = vmatpush.bf16.msra.mxu0 %v1424
    %2222 = vmatpush.bf16.msra.mxu0 %v1422
    %2223 = vmatmul.bf16.gmra.mxu0 %v2213
    %v2224 = vpop.f32.mrf.mxu0
    %v2225 = vadd.f32 0.0, %v2224
    %v2226 = vpop.f32.mrf.mxu0
    %2227 = vdwg.mxu0
    %2228 = vmatpush.bf16.msra.mxu0 0
    %2229 = vmatpush.bf16.msra.mxu0 0
    %2230 = vmatpush.bf16.msra.mxu0 0
    %2231 = vmatpush.bf16.msra.mxu0 0
    %2232 = vmatpush.bf16.msra.mxu0 %v1429
    %2233 = vmatpush.bf16.msra.mxu0 %v1427
    %2234 = vmatpush.bf16.msra.mxu0 %v1425
    %2235 = vmatpush.bf16.msra.mxu0 %v1423
    %2236 = vmatmul.bf16.gmra.mxu0 %v2213
    %v2237 = vpop.f32.mrf.mxu0
    %v2238 = vadd.f32 0.0, %v2237
    %v2239 = vpop.f32.mrf.mxu0
    %2240 = vdwg.mxu0
    %v2241 = vadd.f32 %v2209, %v2225
    %v2242 = vadd.f32 %v2210, %v2238
    %v2243 = vxor.u32 %v2241, 2147483648
    %v2244 = vxor.u32 %v2242, 2147483648
    %v2245 = vmul.f32 %v2243, 1.442695
    %v2246 = vpow.pop %v2245
    %v2247 = vmul.f32 %v2244, 1.442695
    %v2248 = vpow.pop %v2247
    %v2249 = vadd.f32 %v2246, 1.0
    %v2250 = vadd.f32 %v2248, 1.0
    %v2251 = vrcp.pop %v2249
    %v2252 = vmul.f32 %v2249, %v2251
    %v2253 = vsub.f32 1.0, %v2252
    %v2254 = vmul.f32 %v2251, %v2253
    %v2255 = vadd.f32 %v2251, %v2254
    %vm2256 = vweird.f32 %v2249
    %vm2257 = vweird.f32 %v2251
    %vm2258 = vmor %vm2256, %vm2257
    %v2259 = vsel %vm2258, %v2251, %v2255
    %v2260 = vand.u32 2147483647, %v2249
    %vm2261 = vcmp.eq.f32.partialorder %v2260, 8.507059e+37
    %v2262 = vand.u32 %v2249, 2147483648
    %v2263 = vor.u32 1.1754944e-38, %v2262
    %v2264 = vsel %vm2261, %v2263, %v2259
    %v2265 = vmul.f32 1.0, %v2264
    %v2266 = vrcp.pop %v2250
    %v2267 = vmul.f32 %v2250, %v2266
    %v2268 = vsub.f32 1.0, %v2267
    %v2269 = vmul.f32 %v2266, %v2268
    %v2270 = vadd.f32 %v2266, %v2269
    %vm2271 = vweird.f32 %v2250
    %vm2272 = vweird.f32 %v2266
    %vm2273 = vmor %vm2271, %vm2272
    %v2274 = vsel %vm2273, %v2266, %v2270
    %v2275 = vand.u32 2147483647, %v2250
    %vm2276 = vcmp.eq.f32.partialorder %v2275, 8.507059e+37
    %v2277 = vand.u32 %v2250, 2147483648
    %v2278 = vor.u32 1.1754944e-38, %v2277
    %v2279 = vsel %vm2276, %v2278, %v2274
    %v2280 = vmul.f32 1.0, %v2279
    %v2281 = vtanh.pop %v2242
    %2283 = vrot.lane.b32.xlu0 %v2201, 64
    %v2284 = vpop.permute.xlu0 %2283
    %v2286 = vmul.f32 %v2265, %v2284
    %2288 = vrot.lane.b32.xlu0 %v2281, 64
    %v2289 = vpop.permute.xlu0 %2288
    %v2291 = vmul.f32 %v2265, %v2289
    %2293 = vrot.lane.b32.xlu0 %v2291, 64
    %v2294 = vpop.permute.xlu0 %2293
    %v2296 = vadd.f32 %v2286, %v2294
    %v2297 = vtanh.pop %v2296
    %2299 = vrot.lane.b32.xlu0 %v2297, 64
    %v2300 = vpop.permute.xlu0 %2299
    %v2302 = vmul.f32 %v2280, %v2300
    %v2303 = vld [vmem:[%s1225] sm:$0xff]
    %v2304 = vmul.f32 %v2303, %v2302
    %2305 = vst.msk [vmem:[%s434] sm:$0xff] %vm432, %v2304
    %2306 = vst.msk [vmem:[#allocation3] sm:$0xff] %vm435, %v2304
    %v2307 = vld [vmem:[%s434] sm:$0xff]
    %v2308 = vpack.c.bf16 %v2307, %v2307
    %v2309 = vld [vmem:[%s5] sm:$0xf]
    %v2310 = vld [vmem:[%s5 + $0x4] sm:$0xf]
    %v2311 = vld [vmem:[%s5 + $0x8] sm:$0xf]
    %v2312 = vld [vmem:[%s5 + $0xc] sm:$0xf]
    %v2313 = vld [vmem:[%s5 + $0x10] sm:$0xf]
    %v2314 = vld [vmem:[%s5 + $0x14] sm:$0xf]
    %v2315 = vld [vmem:[%s5 + $0x18] sm:$0xf]
    %v2316 = vld [vmem:[%s5 + $0x1c] sm:$0xf]
    %v2317 = vld [vmem:[%s6] sm:$0x1]
    %v2319 = vperm.slane %v2317, 0
    %v2329 = vunpack.c.l.b16 %v2309
    %v2330 = vunpack.c.l.b16 %v2310
    %v2331 = vunpack.c.l.b16 %v2311
    %v2332 = vunpack.c.l.b16 %v2312
    %v2333 = vunpack.c.l.b16 %v2313
    %v2334 = vunpack.c.l.b16 %v2314
    %v2335 = vunpack.c.l.b16 %v2315
    %v2336 = vunpack.c.l.b16 %v2316
    %v2337 = vpack.c.b16 %v2330, %v2329
    %v2338 = vpack.c.b16 %v2332, %v2331
    %v2339 = vpack.c.b16 %v2334, %v2333
    %v2340 = vpack.c.b16 %v2336, %v2335
    %v2346 = vsel %vm127, %v2308, 0
    %2348 = vmatpush.bf16.msra.mxu0 0
    %2349 = vmatpush.bf16.msra.mxu0 0
    %2350 = vmatpush.bf16.msra.mxu0 0
    %2351 = vmatpush.bf16.msra.mxu0 0
    %2352 = vmatpush.bf16.msra.mxu0 %v2340
    %2353 = vmatpush.bf16.msra.mxu0 %v2339
    %2354 = vmatpush.bf16.msra.mxu0 %v2338
    %2355 = vmatpush.bf16.msra.mxu0 %v2337
    %2356 = vmatmul.bf16.gmra.mxu0 %v2346
    %v2357 = vpop.f32.mrf.mxu0
    %v2358 = vadd.f32 %v2319, %v2357
    %v2359 = vpop.f32.mrf.mxu0
    %2360 = vdwg.mxu0
    %v2361 = vxor.u32 %v2358, 2147483648
    %v2362 = vmul.f32 %v2361, 1.442695
    %v2363 = vpow.pop %v2362
    %v2364 = vadd.f32 %v2363, 1.0
    %v2365 = vrcp.pop %v2364
    %v2366 = vmul.f32 %v2364, %v2365
    %v2367 = vsub.f32 1.0, %v2366
    %v2368 = vmul.f32 %v2365, %v2367
    %v2369 = vadd.f32 %v2365, %v2368
    %vm2370 = vweird.f32 %v2364
    %vm2371 = vweird.f32 %v2365
    %vm2372 = vmor %vm2370, %vm2371
    %v2373 = vsel %vm2372, %v2365, %v2369
    %v2374 = vand.u32 2147483647, %v2364
    %vm2375 = vcmp.eq.f32.partialorder %v2374, 8.507059e+37
    %v2376 = vand.u32 %v2364, 2147483648
    %v2377 = vor.u32 1.1754944e-38, %v2376
    %v2378 = vsel %vm2375, %v2377, %v2373
    %v2379 = vmul.f32 1.0, %v2378
    %vm2380 = vcmask 23552
    %2381 = vst.msk [vmem:[%s8] sm:$0xff] %vm2380, %v2379
    // Predicated region
    $region46: #{tpu_custom_call.1} parent=1 // pred_check
      _
    $region47: #{tpu_custom_call.1} parent=1 // pred_check_branch
      %2383 = sbr.rel (0) target = $region49
    $region48: #{tpu_custom_call.1} parent=1 // pred_region
      _
    $region49: #{tpu_custom_call.1} parent=1 // pred_fallthru
      _
    // Predicated region
    $region50: #{tpu_custom_call.1} parent=1 // pred_check
      _
    $region51: #{tpu_custom_call.1} parent=1 // pred_check_branch
      %2385 = sbr.rel (0) target = $region53
    $region52: #{tpu_custom_call.1} parent=1 // pred_region
      _
    $region53: #{tpu_custom_call.1} parent=1 // pred_fallthru
      _
    %2386 = vsyncpa [#allocation6], 1
    %2387 = vsyncpa [#allocation8], 1

</llo_original>
